<compile_context>
chip_gen: v5e
topology: v5e:2x2
jax: 0.10.0
libtpu: 0.0.40
codegen_flags: <defaults>
</compile_context>

<pallas_src>
import jax
import jax.numpy as jnp
import numpy as np
from jax.experimental import pallas as pl
from jax.experimental.pallas import tpu as pltpu

BN_EPS = 1e-5


def _round8(v):
    return (v + 7) // 8 * 8


# --------------------------------------------------------------------------
# Fully fused kernel: block1 (4-tap s2d conv) -> block2 -> block3, each with
# bias + ReLU + 2x2 max-pool, all VMEM resident per sample.
# --------------------------------------------------------------------------
def _make_fused_kernel(Ho1, Wo1):
    # block1: conv output Ho1 x Wo1 (stride-2 7x7 rewritten as 4 vertical taps after
    # the wrapper's space-to-depth; flat layout width = Wo1, no horizontal halo).
    M1 = Ho1 * Wo1
    Hop1, Wop1 = Ho1 // 2, Wo1 // 2
    # block2: 3x3/pad1 conv on the pooled block1 output; haloed flat width Wo2+2.
    Ho2, Wo2 = Hop1, Wop1
    Hp2, Wp2 = Ho2 + 2, Wo2 + 2
    M2 = Ho2 * Wp2
    Hop2, Wop2 = Ho2 // 2, Wo2 // 2
    # block3
    Ho3, Wo3 = Hop2, Wop2
    Hp3, Wp3 = Ho3 + 2, Wo3 + 2
    M3 = Ho3 * Wp3
    Hop3, Wop3 = Ho3 // 2, Wo3 // 2

    shifts1 = [u * Wo1 for u in range(4)]                               # 4 taps, K=16*Cin
    shifts2 = [dy * Wp2 + dx for dy in range(3) for dx in range(3)]     # 9 taps
    shifts3 = [dy * Wp3 + dx for dy in range(3) for dx in range(3)]     # 9 taps

    sizes = dict(
        n_out=Hop3 * Wop3,
        # flat-shift reads run (harmlessly, garbage-columns only) up to Hp*Wp + 1,
        # so pad the haloed scratches by a few zero rows and keep them in-bounds.
        in2_rows=_round8(Hp2 * Wp2 + 8),
        in3_rows=_round8(Hp3 * Wp3 + 8),
        conv_rows=_round8(max(M1, M2, M3)),
        h_rows=_round8(max(M1, M2, M3) // 2),
        x1_rows=(Ho1 + 3) * Wo1,
    )

    def kernel(x1_ref, w1_ref, b1_ref, w2_ref, b2_ref, w3_ref, b3_ref,
               o_ref, in2_sc, in3_sc, conv_sc, h_sc):
        # Scratch persists across grid steps (and per core) -> zero the haloed
        # inter-block inputs (halo ring + overrun pad rows) every step; it is tiny.
        in2_sc[...] = jnp.zeros(in2_sc.shape, in2_sc.dtype)
        in3_sc[...] = jnp.zeros(in3_sc.shape, in3_sc.dtype)

        def conv_bias_relu_pool(in_ref, w_ref, b_ref, shifts, M, Wflat, Hop, Wop,
                                write_row):
            # Conv: ONE whole-image matmul per tap on the flattened (haloed) slab.
            acc = None
            for t, sh in enumerate(shifts):
                lhs = in_ref[pl.ds(sh, M), :]                    # (M, K) bf16, contiguous
                d = jnp.dot(lhs, w_ref[t], preferred_element_type=jnp.float32)
                acc = d if acc is None else acc + d
            # Bias + ReLU (commute with max-pool); keep f32 through the pooling.
            conv_sc[pl.ds(0, M), :] = jnp.maximum(acc + b_ref[...], 0.0)
            # Horizontal 2-max: adjacent columns are adjacent flat rows, so this is
            # two stride-2 sublane loads + one max (no MXU, no iota/select constants).
            half = M // 2
            h_sc[pl.ds(0, half), :] = jnp.maximum(
                conv_sc[pl.ds(0, half, stride=2), :],
                conv_sc[pl.ds(1, half, stride=2), :])
            # Vertical 2-max per pooled row (Hop is 8/4/2); results go straight into
            # the next block's zero-haloed flat input scratch (or the output).
            Wh = Wflat // 2
            for p in range(Hop):
                row = jnp.maximum(h_sc[pl.ds(2 * p * Wh, Wop), :],
                                  h_sc[pl.ds((2 * p + 1) * Wh, Wop), :])
                write_row(p, row)

        def write1(p, row):   # pooled block1 row -> interior of block2's haloed input
            in2_sc[pl.ds((p + 1) * Wp2 + 1, Wop1), :] = row.astype(in2_sc.dtype)

        def write2(p, row):   # pooled block2 row -> interior of block3's haloed input
            in3_sc[pl.ds((p + 1) * Wp3 + 1, Wop2), :] = row.astype(in3_sc.dtype)

        def write3(p, row):   # pooled block3 row -> final output (flat (Hop3*Wop3, C))
            o_ref[pl.ds(p * Wop3, Wop3), :] = row.astype(o_ref.dtype)

        conv_bias_relu_pool(x1_ref, w1_ref, b1_ref, shifts1, M1, Wo1, Hop1, Wop1, write1)
        conv_bias_relu_pool(in2_sc, w2_ref, b2_ref, shifts2, M2, Wp2, Hop2, Wop2, write2)
        conv_bias_relu_pool(in3_sc, w3_ref, b3_ref, shifts3, M3, Wp3, Hop3, Wop3, write3)

    return kernel, sizes


def _fused_forward(x1, w1, b1, w2, b2, w3, b3, *, Ho1, Wo1):
    """x1: (N, Hs*Wo1, 16*Cin) bf16 flat s2d input; w*: bf16 tap weights; b*: (1,C) f32."""
    N, R1, K1 = x1.shape
    C = w1.shape[-1]
    kernel, sz = _make_fused_kernel(Ho1, Wo1)
    assert R1 >= sz["x1_rows"]

    return pl.pallas_call(
        kernel,
        out_shape=jax.ShapeDtypeStruct((N, sz["n_out"], C), jnp.float32),
        grid=(N,),
        in_specs=[
            pl.BlockSpec((None, R1, K1), lambda n: (n, 0, 0)),
            pl.BlockSpec(tuple(w1.shape), lambda n: (0, 0, 0)),
            pl.BlockSpec((1, C), lambda n: (0, 0)),
            pl.BlockSpec(tuple(w2.shape), lambda n: (0, 0, 0)),
            pl.BlockSpec((1, C), lambda n: (0, 0)),
            pl.BlockSpec(tuple(w3.shape), lambda n: (0, 0, 0)),
            pl.BlockSpec((1, C), lambda n: (0, 0)),
        ],
        out_specs=pl.BlockSpec((None, sz["n_out"], C), lambda n: (n, 0, 0)),
        scratch_shapes=[
            pltpu.VMEM((sz["in2_rows"], C), jnp.bfloat16),   # block2 haloed flat input
            pltpu.VMEM((sz["in3_rows"], C), jnp.bfloat16),   # block3 haloed flat input
            pltpu.VMEM((sz["conv_rows"], C), jnp.float32),   # conv output (reused/block)
            pltpu.VMEM((sz["h_rows"], C), jnp.float32),      # horizontal pool (reused)
        ],
        compiler_params=pltpu.CompilerParams(dimension_semantics=("parallel",)),
    )(x1, w1, b1, w2, b2, w3, b3)


# --------------------------------------------------------------------------
# Forward pass
# --------------------------------------------------------------------------
def _fold_bn(w_oihw, b, gamma, beta, mean, var):
    """Fold inference-mode BN into the conv weights/bias."""
    scale = gamma / jnp.sqrt(var + BN_EPS)                    # (Cout,)
    w_khwc = jnp.transpose(w_oihw, (2, 3, 1, 0)) * scale      # (kh, kw, Cin, Cout)
    bias = (b - mean) * scale + beta
    return w_khwc, bias


@jax.jit
def generalized_convnet_forward(x_nchw, params):
    cdt = jnp.bfloat16
    N, Cin, H, W = x_nchw.shape
    # NCHW -> NHWC and cast to bf16 BEFORE any glue (halves glue HBM traffic).
    x = jnp.transpose(x_nchw, (0, 2, 3, 1)).astype(cdt)

    w1_khwc, b1 = _fold_bn(*params["block1"])                 # (7,7,Cin,C)
    w2_khwc, b2 = _fold_bn(*params["block2"])                 # (3,3,C,C)
    w3_khwc, b3 = _fold_bn(*params["block3"])
    C = w1_khwc.shape[3]

    # block1: stride-2 7x7 conv == stride-1 4-(vertical-)tap conv after space-to-depth,
    # with the 4 horizontal taps pre-expanded into the channel/lane dim (K = 16*Cin).
    wk = jnp.pad(w1_khwc, ((0, 1), (0, 1), (0, 0), (0, 0)))   # (8,8,Cin,C), zero tap
    wm1 = (wk.reshape(4, 2, 4, 2, Cin, C)
             .transpose(0, 2, 1, 3, 4, 5)                     # (u, v, ry, rx, ci, co)
             .reshape(4, 16 * Cin, C)).astype(cdt)            # (4, 16*Cin, C)
    xp = jnp.pad(x, ((0, 0), (3, 3), (3, 3), (0, 0)))         # (N, H+6, W+6, Cin) bf16
    Hs, Ws = (H + 6) // 2, (W + 6) // 2
    s2d = (xp.reshape(N, Hs, 2, Ws, 2, Cin)
             .transpose(0, 1, 3, 2, 4, 5)
             .reshape(N, Hs, Ws, 4 * Cin))                    # (N, Hs, Ws, 4*Cin)
    Ho1, Wo1 = H // 2, W // 2
    xw = jnp.concatenate([s2d[:, :, v:v + Wo1, :] for v in range(4)], axis=-1)
    x1 = xw.reshape(N, Hs * Wo1, 16 * Cin)                    # flat row-major, bf16

    wt2 = w2_khwc.reshape(9, C, C).astype(cdt)
    wt3 = w3_khwc.reshape(9, C, C).astype(cdt)
    b1 = b1.reshape(1, C).astype(jnp.float32)
    b2 = b2.reshape(1, C).astype(jnp.float32)
    b3 = b3.reshape(1, C).astype(jnp.float32)

    out_flat = _fused_forward(x1, wm1, b1, wt2, b2, wt3, b3, Ho1=Ho1, Wo1=Wo1)
    Hf, Wf = Ho1 // 8, Wo1 // 8                               # /2 per pool, three pools
    return jnp.transpose(out_flat.reshape(N, Hf, Wf, C), (0, 3, 1, 2))   # NCHW


# --------------------------------------------------------------------------
# Deterministic parameter init (shapes from the PyTorch __init__)
# --------------------------------------------------------------------------
def init_params(key, x_dim=3, hid_dim=32):
    def block(k, cin, cout, ksize):
        ks = jax.random.split(k, 4)
        w = 0.05 * jax.random.normal(ks[0], (cout, cin, ksize, ksize), jnp.float32)
        b = 0.05 * jax.random.normal(ks[1], (cout,), jnp.float32)
        gamma = 1.0 + 0.1 * jax.random.normal(ks[2], (cout,), jnp.float32)
        beta = 0.1 * jax.random.normal(ks[3], (cout,), jnp.float32)
        mean = jnp.zeros((cout,), jnp.float32)   # PyTorch BN running_mean init
        var = jnp.ones((cout,), jnp.float32)     # PyTorch BN running_var init
        return (w, b, gamma, beta, mean, var)

    k1, k2, k3 = jax.random.split(key, 3)
    return {
        "block1": block(k1, x_dim, hid_dim, 7),
        "block2": block(k2, hid_dim, hid_dim, 3),
        "block3": block(k3, hid_dim, hid_dim, 3),
    }


# --------------------------------------------------------------------------
# Pure-JAX reference (correctness sanity check)
# --------------------------------------------------------------------------
def reference_forward(x_nchw, params):
    def blk(x, p, stride, pad):
        w, b, gamma, beta, mean, var = p
        y = jax.lax.conv_general_dilated(
            x, w, (stride, stride), [(pad, pad), (pad, pad)],
            dimension_numbers=("NCHW", "OIHW", "NCHW"))
        y = y + b[None, :, None, None]
        scale = gamma / jnp.sqrt(var + BN_EPS)
        y = (y - mean[None, :, None, None]) * scale[None, :, None, None] \
            + beta[None, :, None, None]
        y = jnp.maximum(y, 0.0)
        N, C, H, W = y.shape
        return y.reshape(N, C, H // 2, 2, W // 2, 2).max(axis=(3, 5))

    x = blk(x_nchw, params["block1"], 2, 3)
    x = blk(x, params["block2"], 1, 1)
    x = blk(x, params["block3"], 1, 1)
    return x


if __name__ == "__main__":
    key = jax.random.PRNGKey(0)
    kx, kp = jax.random.split(key)
    x = jax.random.normal(kx, (2, 3, 32, 32), jnp.float32)   # NCHW, like PyTorch
    params = init_params(kp, x_dim=3, hid_dim=32)

    out = jax.block_until_ready(generalized_convnet_forward(x, params))
    assert out.shape == (2, 32, 2, 2), out.shape

    ref = jax.block_until_ready(reference_forward(x, params))
    # bf16 matmul inputs / bf16 inter-block activations (f32 accumulation) -> 2e-2
    np.testing.assert_allclose(np.asarray(out), np.asarray(ref), rtol=2e-2, atol=2e-2)

    print("KERNEL_OK")
</pallas_src>

<mosaic_0001>
module attributes {stable_mosaic.version = 11 : i64} {
  func.func @kernel(%arg0: i32, %arg1: memref<1x304x48xbf16, #tpu.memory_space<vmem>>, %arg2: memref<4x48x32xbf16, #tpu.memory_space<vmem>>, %arg3: memref<1x32xf32, #tpu.memory_space<vmem>>, %arg4: memref<9x32x32xbf16, #tpu.memory_space<vmem>>, %arg5: memref<1x32xf32, #tpu.memory_space<vmem>>, %arg6: memref<9x32x32xbf16, #tpu.memory_space<vmem>>, %arg7: memref<1x32xf32, #tpu.memory_space<vmem>>, %arg8: memref<1x4x32xf32, #tpu.memory_space<vmem>>, %arg9: memref<112x32xbf16, #tpu.memory_space<vmem>>, %arg10: memref<48x32xbf16, #tpu.memory_space<vmem>>, %arg11: memref<256x32xf32, #tpu.memory_space<vmem>>, %arg12: memref<128x32xf32, #tpu.memory_space<vmem>>) attributes {dimension_semantics = [#tpu.dimension_semantics<parallel>], iteration_bounds = array<i64: 2>, scalar_prefetch = 0 : i64, scratch_operands = 4 : i64, tpu.core_type = #tpu.core_type<tc>, window_params = [{transform_indices = @transform_0, window_bounds = array<i64: 1, 304, 48>}, {pipeline_mode = #tpu.pipeline_mode<synchronous>, transform_indices = @transform_1, window_bounds = array<i64: 4, 48, 32>}, {pipeline_mode = #tpu.pipeline_mode<synchronous>, transform_indices = @transform_2, window_bounds = array<i64: 1, 32>}, {pipeline_mode = #tpu.pipeline_mode<synchronous>, transform_indices = @transform_3, window_bounds = array<i64: 9, 32, 32>}, {pipeline_mode = #tpu.pipeline_mode<synchronous>, transform_indices = @transform_4, window_bounds = array<i64: 1, 32>}, {pipeline_mode = #tpu.pipeline_mode<synchronous>, transform_indices = @transform_5, window_bounds = array<i64: 9, 32, 32>}, {pipeline_mode = #tpu.pipeline_mode<synchronous>, transform_indices = @transform_6, window_bounds = array<i64: 1, 32>}, {transform_indices = @transform_7, window_bounds = array<i64: 1, 4, 32>}]} {
    %cst = arith.constant 0.000000e+00 : bf16
    %0 = vector.broadcast %cst : bf16 to vector<112x32xbf16>
    %c0 = arith.constant 0 : index
    %c0_0 = arith.constant 0 : index
    %1 = vector.load %arg9[%c0, %c0_0] : memref<112x32xbf16, #tpu.memory_space<vmem>>, vector<112x32xbf16>
    tpu.vector_store %arg9[%c0, %c0_0], %0 {strides = array<i32>} : memref<112x32xbf16, #tpu.memory_space<vmem>>, vector<112x32xbf16>,
    %cst_1 = arith.constant 0.000000e+00 : bf16
    %2 = vector.broadcast %cst_1 : bf16 to vector<48x32xbf16>
    %c0_2 = arith.constant 0 : index
    %c0_3 = arith.constant 0 : index
    %3 = vector.load %arg10[%c0_2, %c0_3] : memref<48x32xbf16, #tpu.memory_space<vmem>>, vector<48x32xbf16>
    tpu.vector_store %arg10[%c0_2, %c0_3], %2 {strides = array<i32>} : memref<48x32xbf16, #tpu.memory_space<vmem>>, vector<48x32xbf16>,
    %c0_4 = arith.constant 0 : index
    %c0_5 = arith.constant 0 : index
    %c0_6 = arith.constant 0 : index
    %4 = vector.load %arg1[%c0_4, %c0_5, %c0_6] : memref<1x304x48xbf16, #tpu.memory_space<vmem>>, vector<1x256x48xbf16>
    %5 = vector.shape_cast %4 : vector<1x256x48xbf16> to vector<256x48xbf16>
    %c0_7 = arith.constant 0 : index
    %c0_8 = arith.constant 0 : index
    %c0_9 = arith.constant 0 : index
    %6 = vector.load %arg2[%c0_7, %c0_8, %c0_9] : memref<4x48x32xbf16, #tpu.memory_space<vmem>>, vector<1x48x32xbf16>
    %7 = vector.shape_cast %6 : vector<1x48x32xbf16> to vector<48x32xbf16>
    %cst_10 = arith.constant dense<0.000000e+00> : vector<256x32xf32>
    %8 = tpu.matmul %5, %7, %cst_10 {dimension_numbers = #tpu.dot_dimension_numbers<[1], [0], [0], [1], [0, 0, 1, 1], [], []>} : vector<256x48xbf16>, vector<48x32xbf16>, vector<256x32xf32> -> vector<256x32xf32>
    %c0_11 = arith.constant 0 : index
    %c16 = arith.constant 16 : index
    %c0_12 = arith.constant 0 : index
    %9 = vector.load %arg1[%c0_11, %c16, %c0_12] : memref<1x304x48xbf16, #tpu.memory_space<vmem>>, vector<1x256x48xbf16>
    %10 = vector.shape_cast %9 : vector<1x256x48xbf16> to vector<256x48xbf16>
    %c1 = arith.constant 1 : index
    %c0_13 = arith.constant 0 : index
    %c0_14 = arith.constant 0 : index
    %11 = vector.load %arg2[%c1, %c0_13, %c0_14] : memref<4x48x32xbf16, #tpu.memory_space<vmem>>, vector<1x48x32xbf16>
    %12 = vector.shape_cast %11 : vector<1x48x32xbf16> to vector<48x32xbf16>
    %cst_15 = arith.constant dense<0.000000e+00> : vector<256x32xf32>
    %13 = tpu.matmul %10, %12, %cst_15 {dimension_numbers = #tpu.dot_dimension_numbers<[1], [0], [0], [1], [0, 0, 1, 1], [], []>} : vector<256x48xbf16>, vector<48x32xbf16>, vector<256x32xf32> -> vector<256x32xf32>
    %14 = arith.addf %8, %13 : vector<256x32xf32>
    %c0_16 = arith.constant 0 : index
    %c32 = arith.constant 32 : index
    %c0_17 = arith.constant 0 : index
    %15 = vector.load %arg1[%c0_16, %c32, %c0_17] : memref<1x304x48xbf16, #tpu.memory_space<vmem>>, vector<1x256x48xbf16>
    %16 = vector.shape_cast %15 : vector<1x256x48xbf16> to vector<256x48xbf16>
    %c2 = arith.constant 2 : index
    %c0_18 = arith.constant 0 : index
    %c0_19 = arith.constant 0 : index
    %17 = vector.load %arg2[%c2, %c0_18, %c0_19] : memref<4x48x32xbf16, #tpu.memory_space<vmem>>, vector<1x48x32xbf16>
    %18 = vector.shape_cast %17 : vector<1x48x32xbf16> to vector<48x32xbf16>
    %cst_20 = arith.constant dense<0.000000e+00> : vector<256x32xf32>
    %19 = tpu.matmul %16, %18, %cst_20 {dimension_numbers = #tpu.dot_dimension_numbers<[1], [0], [0], [1], [0, 0, 1, 1], [], []>} : vector<256x48xbf16>, vector<48x32xbf16>, vector<256x32xf32> -> vector<256x32xf32>
    %20 = arith.addf %14, %19 : vector<256x32xf32>
    %c0_21 = arith.constant 0 : index
    %c48 = arith.constant 48 : index
    %c0_22 = arith.constant 0 : index
    %21 = vector.load %arg1[%c0_21, %c48, %c0_22] : memref<1x304x48xbf16, #tpu.memory_space<vmem>>, vector<1x256x48xbf16>
    %22 = vector.shape_cast %21 : vector<1x256x48xbf16> to vector<256x48xbf16>
    %c3 = arith.constant 3 : index
    %c0_23 = arith.constant 0 : index
    %c0_24 = arith.constant 0 : index
    %23 = vector.load %arg2[%c3, %c0_23, %c0_24] : memref<4x48x32xbf16, #tpu.memory_space<vmem>>, vector<1x48x32xbf16>
    %24 = vector.shape_cast %23 : vector<1x48x32xbf16> to vector<48x32xbf16>
    %cst_25 = arith.constant dense<0.000000e+00> : vector<256x32xf32>
    %25 = tpu.matmul %22, %24, %cst_25 {dimension_numbers = #tpu.dot_dimension_numbers<[1], [0], [0], [1], [0, 0, 1, 1], [], []>} : vector<256x48xbf16>, vector<48x32xbf16>, vector<256x32xf32> -> vector<256x32xf32>
    %26 = arith.addf %20, %25 : vector<256x32xf32>
    %c0_26 = arith.constant 0 : index
    %c0_27 = arith.constant 0 : index
    %27 = vector.load %arg3[%c0_26, %c0_27] : memref<1x32xf32, #tpu.memory_space<vmem>>, vector<1x32xf32>
    %28 = vector.broadcast %27 : vector<1x32xf32> to vector<256x32xf32>
    %29 = arith.addf %26, %28 : vector<256x32xf32>
    %cst_28 = arith.constant 0.000000e+00 : f32
    %30 = vector.broadcast %cst_28 : f32 to vector<256x32xf32>
    %31 = arith.maximumf %29, %30 : vector<256x32xf32>
    %c0_29 = arith.constant 0 : index
    %c0_30 = arith.constant 0 : index
    %32 = vector.load %arg11[%c0_29, %c0_30] : memref<256x32xf32, #tpu.memory_space<vmem>>, vector<256x32xf32>
    tpu.vector_store %arg11[%c0_29, %c0_30], %31 {strides = array<i32>} : memref<256x32xf32, #tpu.memory_space<vmem>>, vector<256x32xf32>,
    %c0_31 = arith.constant 0 : index
    %c0_32 = arith.constant 0 : index
    %33 = tpu.strided_load %arg11[%c0_31, %c0_32] {strides = array<i32: 2, 1>} : memref<256x32xf32, #tpu.memory_space<vmem>>, vector<128x32xf32>
    %c1_33 = arith.constant 1 : index
    %c0_34 = arith.constant 0 : index
    %34 = tpu.strided_load %arg11[%c1_33, %c0_34] {strides = array<i32: 2, 1>} : memref<256x32xf32, #tpu.memory_space<vmem>>, vector<128x32xf32>
    %35 = arith.maximumf %33, %34 : vector<128x32xf32>
    %c0_35 = arith.constant 0 : index
    %c0_36 = arith.constant 0 : index
    %36 = vector.load %arg12[%c0_35, %c0_36] : memref<128x32xf32, #tpu.memory_space<vmem>>, vector<128x32xf32>
    tpu.vector_store %arg12[%c0_35, %c0_36], %35 {strides = array<i32>} : memref<128x32xf32, #tpu.memory_space<vmem>>, vector<128x32xf32>,
    %c0_37 = arith.constant 0 : index
    %c0_38 = arith.constant 0 : index
    %37 = vector.load %arg12[%c0_37, %c0_38] : memref<128x32xf32, #tpu.memory_space<vmem>>, vector<8x32xf32>
    %c8 = arith.constant 8 : index
    %c0_39 = arith.constant 0 : index
    %38 = vector.load %arg12[%c8, %c0_39] : memref<128x32xf32, #tpu.memory_space<vmem>>, vector<8x32xf32>
    %39 = arith.maximumf %37, %38 : vector<8x32xf32>
    %40 = arith.truncf %39 : vector<8x32xf32> to vector<8x32xbf16>
    %c11 = arith.constant 11 : index
    %c0_40 = arith.constant 0 : index
    %41 = vector.load %arg9[%c11, %c0_40] : memref<112x32xbf16, #tpu.memory_space<vmem>>, vector<8x32xbf16>
    tpu.vector_store %arg9[%c11, %c0_40], %40 {strides = array<i32>} : memref<112x32xbf16, #tpu.memory_space<vmem>>, vector<8x32xbf16>,
    %c16_41 = arith.constant 16 : index
    %c0_42 = arith.constant 0 : index
    %42 = vector.load %arg12[%c16_41, %c0_42] : memref<128x32xf32, #tpu.memory_space<vmem>>, vector<8x32xf32>
    %c24 = arith.constant 24 : index
    %c0_43 = arith.constant 0 : index
    %43 = vector.load %arg12[%c24, %c0_43] : memref<128x32xf32, #tpu.memory_space<vmem>>, vector<8x32xf32>
    %44 = arith.maximumf %42, %43 : vector<8x32xf32>
    %45 = arith.truncf %44 : vector<8x32xf32> to vector<8x32xbf16>
    %c21 = arith.constant 21 : index
    %c0_44 = arith.constant 0 : index
    %46 = vector.load %arg9[%c21, %c0_44] : memref<112x32xbf16, #tpu.memory_space<vmem>>, vector<8x32xbf16>
    tpu.vector_store %arg9[%c21, %c0_44], %45 {strides = array<i32>} : memref<112x32xbf16, #tpu.memory_space<vmem>>, vector<8x32xbf16>,
    %c32_45 = arith.constant 32 : index
    %c0_46 = arith.constant 0 : index
    %47 = vector.load %arg12[%c32_45, %c0_46] : memref<128x32xf32, #tpu.memory_space<vmem>>, vector<8x32xf32>
    %c40 = arith.constant 40 : index
    %c0_47 = arith.constant 0 : index
    %48 = vector.load %arg12[%c40, %c0_47] : memref<128x32xf32, #tpu.memory_space<vmem>>, vector<8x32xf32>
    %49 = arith.maximumf %47, %48 : vector<8x32xf32>
    %50 = arith.truncf %49 : vector<8x32xf32> to vector<8x32xbf16>
    %c31 = arith.constant 31 : index
    %c0_48 = arith.constant 0 : index
    %51 = vector.load %arg9[%c31, %c0_48] : memref<112x32xbf16, #tpu.memory_space<vmem>>, vector<8x32xbf16>
    tpu.vector_store %arg9[%c31, %c0_48], %50 {strides = array<i32>} : memref<112x32xbf16, #tpu.memory_space<vmem>>, vector<8x32xbf16>,
    %c48_49 = arith.constant 48 : index
    %c0_50 = arith.constant 0 : index
    %52 = vector.load %arg12[%c48_49, %c0_50] : memref<128x32xf32, #tpu.memory_space<vmem>>, vector<8x32xf32>
    %c56 = arith.constant 56 : index
    %c0_51 = arith.constant 0 : index
    %53 = vector.load %arg12[%c56, %c0_51] : memref<128x32xf32, #tpu.memory_space<vmem>>, vector<8x32xf32>
    %54 = arith.maximumf %52, %53 : vector<8x32xf32>
    %55 = arith.truncf %54 : vector<8x32xf32> to vector<8x32xbf16>
    %c41 = arith.constant 41 : index
    %c0_52 = arith.constant 0 : index
    %56 = vector.load %arg9[%c41, %c0_52] : memref<112x32xbf16, #tpu.memory_space<vmem>>, vector<8x32xbf16>
    tpu.vector_store %arg9[%c41, %c0_52], %55 {strides = array<i32>} : memref<112x32xbf16, #tpu.memory_space<vmem>>, vector<8x32xbf16>,
    %c64 = arith.constant 64 : index
    %c0_53 = arith.constant 0 : index
    %57 = vector.load %arg12[%c64, %c0_53] : memref<128x32xf32, #tpu.memory_space<vmem>>, vector<8x32xf32>
    %c72 = arith.constant 72 : index
    %c0_54 = arith.constant 0 : index
    %58 = vector.load %arg12[%c72, %c0_54] : memref<128x32xf32, #tpu.memory_space<vmem>>, vector<8x32xf32>
    %59 = arith.maximumf %57, %58 : vector<8x32xf32>
    %60 = arith.truncf %59 : vector<8x32xf32> to vector<8x32xbf16>
    %c51 = arith.constant 51 : index
    %c0_55 = arith.constant 0 : index
    %61 = vector.load %arg9[%c51, %c0_55] : memref<112x32xbf16, #tpu.memory_space<vmem>>, vector<8x32xbf16>
    tpu.vector_store %arg9[%c51, %c0_55], %60 {strides = array<i32>} : memref<112x32xbf16, #tpu.memory_space<vmem>>, vector<8x32xbf16>,
    %c80 = arith.constant 80 : index
    %c0_56 = arith.constant 0 : index
    %62 = vector.load %arg12[%c80, %c0_56] : memref<128x32xf32, #tpu.memory_space<vmem>>, vector<8x32xf32>
    %c88 = arith.constant 88 : index
    %c0_57 = arith.constant 0 : index
    %63 = vector.load %arg12[%c88, %c0_57] : memref<128x32xf32, #tpu.memory_space<vmem>>, vector<8x32xf32>
    %64 = arith.maximumf %62, %63 : vector<8x32xf32>
    %65 = arith.truncf %64 : vector<8x32xf32> to vector<8x32xbf16>
    %c61 = arith.constant 61 : index
    %c0_58 = arith.constant 0 : index
    %66 = vector.load %arg9[%c61, %c0_58] : memref<112x32xbf16, #tpu.memory_space<vmem>>, vector<8x32xbf16>
    tpu.vector_store %arg9[%c61, %c0_58], %65 {strides = array<i32>} : memref<112x32xbf16, #tpu.memory_space<vmem>>, vector<8x32xbf16>,
    %c96 = arith.constant 96 : index
    %c0_59 = arith.constant 0 : index
    %67 = vector.load %arg12[%c96, %c0_59] : memref<128x32xf32, #tpu.memory_space<vmem>>, vector<8x32xf32>
    %c104 = arith.constant 104 : index
    %c0_60 = arith.constant 0 : index
    %68 = vector.load %arg12[%c104, %c0_60] : memref<128x32xf32, #tpu.memory_space<vmem>>, vector<8x32xf32>
    %69 = arith.maximumf %67, %68 : vector<8x32xf32>
    %70 = arith.truncf %69 : vector<8x32xf32> to vector<8x32xbf16>
    %c71 = arith.constant 71 : index
    %c0_61 = arith.constant 0 : index
    %71 = vector.load %arg9[%c71, %c0_61] : memref<112x32xbf16, #tpu.memory_space<vmem>>, vector<8x32xbf16>
    tpu.vector_store %arg9[%c71, %c0_61], %70 {strides = array<i32>} : memref<112x32xbf16, #tpu.memory_space<vmem>>, vector<8x32xbf16>,
    %c112 = arith.constant 112 : index
    %c0_62 = arith.constant 0 : index
    %72 = vector.load %arg12[%c112, %c0_62] : memref<128x32xf32, #tpu.memory_space<vmem>>, vector<8x32xf32>
    %c120 = arith.constant 120 : index
    %c0_63 = arith.constant 0 : index
    %73 = vector.load %arg12[%c120, %c0_63] : memref<128x32xf32, #tpu.memory_space<vmem>>, vector<8x32xf32>
    %74 = arith.maximumf %72, %73 : vector<8x32xf32>
    %75 = arith.truncf %74 : vector<8x32xf32> to vector<8x32xbf16>
    %c81 = arith.constant 81 : index
    %c0_64 = arith.constant 0 : index
    %76 = vector.load %arg9[%c81, %c0_64] : memref<112x32xbf16, #tpu.memory_space<vmem>>, vector<8x32xbf16>
    tpu.vector_store %arg9[%c81, %c0_64], %75 {strides = array<i32>} : memref<112x32xbf16, #tpu.memory_space<vmem>>, vector<8x32xbf16>,
    %c0_65 = arith.constant 0 : index
    %c0_66 = arith.constant 0 : index
    %77 = vector.load %arg9[%c0_65, %c0_66] : memref<112x32xbf16, #tpu.memory_space<vmem>>, vector<80x32xbf16>
    %c0_67 = arith.constant 0 : index
    %c0_68 = arith.constant 0 : index
    %c0_69 = arith.constant 0 : index
    %78 = vector.load %arg4[%c0_67, %c0_68, %c0_69] : memref<9x32x32xbf16, #tpu.memory_space<vmem>>, vector<1x32x32xbf16>
    %79 = vector.shape_cast %78 : vector<1x32x32xbf16> to vector<32x32xbf16>
    %cst_70 = arith.constant dense<0.000000e+00> : vector<80x32xf32>
    %80 = tpu.matmul %77, %79, %cst_70 {dimension_numbers = #tpu.dot_dimension_numbers<[1], [0], [0], [1], [0, 0, 1, 1], [], []>} : vector<80x32xbf16>, vector<32x32xbf16>, vector<80x32xf32> -> vector<80x32xf32>
    %c1_71 = arith.constant 1 : index
    %c0_72 = arith.constant 0 : index
    %81 = vector.load %arg9[%c1_71, %c0_72] : memref<112x32xbf16, #tpu.memory_space<vmem>>, vector<80x32xbf16>
    %c1_73 = arith.constant 1 : index
    %c0_74 = arith.constant 0 : index
    %c0_75 = arith.constant 0 : index
    %82 = vector.load %arg4[%c1_73, %c0_74, %c0_75] : memref<9x32x32xbf16, #tpu.memory_space<vmem>>, vector<1x32x32xbf16>
    %83 = vector.shape_cast %82 : vector<1x32x32xbf16> to vector<32x32xbf16>
    %cst_76 = arith.constant dense<0.000000e+00> : vector<80x32xf32>
    %84 = tpu.matmul %81, %83, %cst_76 {dimension_numbers = #tpu.dot_dimension_numbers<[1], [0], [0], [1], [0, 0, 1, 1], [], []>} : vector<80x32xbf16>, vector<32x32xbf16>, vector<80x32xf32> -> vector<80x32xf32>
    %85 = arith.addf %80, %84 : vector<80x32xf32>
    %c2_77 = arith.constant 2 : index
    %c0_78 = arith.constant 0 : index
    %86 = vector.load %arg9[%c2_77, %c0_78] : memref<112x32xbf16, #tpu.memory_space<vmem>>, vector<80x32xbf16>
    %c2_79 = arith.constant 2 : index
    %c0_80 = arith.constant 0 : index
    %c0_81 = arith.constant 0 : index
    %87 = vector.load %arg4[%c2_79, %c0_80, %c0_81] : memref<9x32x32xbf16, #tpu.memory_space<vmem>>, vector<1x32x32xbf16>
    %88 = vector.shape_cast %87 : vector<1x32x32xbf16> to vector<32x32xbf16>
    %cst_82 = arith.constant dense<0.000000e+00> : vector<80x32xf32>
    %89 = tpu.matmul %86, %88, %cst_82 {dimension_numbers = #tpu.dot_dimension_numbers<[1], [0], [0], [1], [0, 0, 1, 1], [], []>} : vector<80x32xbf16>, vector<32x32xbf16>, vector<80x32xf32> -> vector<80x32xf32>
    %90 = arith.addf %85, %89 : vector<80x32xf32>
    %c10 = arith.constant 10 : index
    %c0_83 = arith.constant 0 : index
    %91 = vector.load %arg9[%c10, %c0_83] : memref<112x32xbf16, #tpu.memory_space<vmem>>, vector<80x32xbf16>
    %c3_84 = arith.constant 3 : index
    %c0_85 = arith.constant 0 : index
    %c0_86 = arith.constant 0 : index
    %92 = vector.load %arg4[%c3_84, %c0_85, %c0_86] : memref<9x32x32xbf16, #tpu.memory_space<vmem>>, vector<1x32x32xbf16>
    %93 = vector.shape_cast %92 : vector<1x32x32xbf16> to vector<32x32xbf16>
    %cst_87 = arith.constant dense<0.000000e+00> : vector<80x32xf32>
    %94 = tpu.matmul %91, %93, %cst_87 {dimension_numbers = #tpu.dot_dimension_numbers<[1], [0], [0], [1], [0, 0, 1, 1], [], []>} : vector<80x32xbf16>, vector<32x32xbf16>, vector<80x32xf32> -> vector<80x32xf32>
    %95 = arith.addf %90, %94 : vector<80x32xf32>
    %c11_88 = arith.constant 11 : index
    %c0_89 = arith.constant 0 : index
    %96 = vector.load %arg9[%c11_88, %c0_89] : memref<112x32xbf16, #tpu.memory_space<vmem>>, vector<80x32xbf16>
    %c4 = arith.constant 4 : index
    %c0_90 = arith.constant 0 : index
    %c0_91 = arith.constant 0 : index
    %97 = vector.load %arg4[%c4, %c0_90, %c0_91] : memref<9x32x32xbf16, #tpu.memory_space<vmem>>, vector<1x32x32xbf16>
    %98 = vector.shape_cast %97 : vector<1x32x32xbf16> to vector<32x32xbf16>
    %cst_92 = arith.constant dense<0.000000e+00> : vector<80x32xf32>
    %99 = tpu.matmul %96, %98, %cst_92 {dimension_numbers = #tpu.dot_dimension_numbers<[1], [0], [0], [1], [0, 0, 1, 1], [], []>} : vector<80x32xbf16>, vector<32x32xbf16>, vector<80x32xf32> -> vector<80x32xf32>
    %100 = arith.addf %95, %99 : vector<80x32xf32>
    %c12 = arith.constant 12 : index
    %c0_93 = arith.constant 0 : index
    %101 = vector.load %arg9[%c12, %c0_93] : memref<112x32xbf16, #tpu.memory_space<vmem>>, vector<80x32xbf16>
    %c5 = arith.constant 5 : index
    %c0_94 = arith.constant 0 : index
    %c0_95 = arith.constant 0 : index
    %102 = vector.load %arg4[%c5, %c0_94, %c0_95] : memref<9x32x32xbf16, #tpu.memory_space<vmem>>, vector<1x32x32xbf16>
    %103 = vector.shape_cast %102 : vector<1x32x32xbf16> to vector<32x32xbf16>
    %cst_96 = arith.constant dense<0.000000e+00> : vector<80x32xf32>
    %104 = tpu.matmul %101, %103, %cst_96 {dimension_numbers = #tpu.dot_dimension_numbers<[1], [0], [0], [1], [0, 0, 1, 1], [], []>} : vector<80x32xbf16>, vector<32x32xbf16>, vector<80x32xf32> -> vector<80x32xf32>
    %105 = arith.addf %100, %104 : vector<80x32xf32>
    %c20 = arith.constant 20 : index
    %c0_97 = arith.constant 0 : index
    %106 = vector.load %arg9[%c20, %c0_97] : memref<112x32xbf16, #tpu.memory_space<vmem>>, vector<80x32xbf16>
    %c6 = arith.constant 6 : index
    %c0_98 = arith.constant 0 : index
    %c0_99 = arith.constant 0 : index
    %107 = vector.load %arg4[%c6, %c0_98, %c0_99] : memref<9x32x32xbf16, #tpu.memory_space<vmem>>, vector<1x32x32xbf16>
    %108 = vector.shape_cast %107 : vector<1x32x32xbf16> to vector<32x32xbf16>
    %cst_100 = arith.constant dense<0.000000e+00> : vector<80x32xf32>
    %109 = tpu.matmul %106, %108, %cst_100 {dimension_numbers = #tpu.dot_dimension_numbers<[1], [0], [0], [1], [0, 0, 1, 1], [], []>} : vector<80x32xbf16>, vector<32x32xbf16>, vector<80x32xf32> -> vector<80x32xf32>
    %110 = arith.addf %105, %109 : vector<80x32xf32>
    %c21_101 = arith.constant 21 : index
    %c0_102 = arith.constant 0 : index
    %111 = vector.load %arg9[%c21_101, %c0_102] : memref<112x32xbf16, #tpu.memory_space<vmem>>, vector<80x32xbf16>
    %c7 = arith.constant 7 : index
    %c0_103 = arith.constant 0 : index
    %c0_104 = arith.constant 0 : index
    %112 = vector.load %arg4[%c7, %c0_103, %c0_104] : memref<9x32x32xbf16, #tpu.memory_space<vmem>>, vector<1x32x32xbf16>
    %113 = vector.shape_cast %112 : vector<1x32x32xbf16> to vector<32x32xbf16>
    %cst_105 = arith.constant dense<0.000000e+00> : vector<80x32xf32>
    %114 = tpu.matmul %111, %113, %cst_105 {dimension_numbers = #tpu.dot_dimension_numbers<[1], [0], [0], [1], [0, 0, 1, 1], [], []>} : vector<80x32xbf16>, vector<32x32xbf16>, vector<80x32xf32> -> vector<80x32xf32>
    %115 = arith.addf %110, %114 : vector<80x32xf32>
    %c22 = arith.constant 22 : index
    %c0_106 = arith.constant 0 : index
    %116 = vector.load %arg9[%c22, %c0_106] : memref<112x32xbf16, #tpu.memory_space<vmem>>, vector<80x32xbf16>
    %c8_107 = arith.constant 8 : index
    %c0_108 = arith.constant 0 : index
    %c0_109 = arith.constant 0 : index
    %117 = vector.load %arg4[%c8_107, %c0_108, %c0_109] : memref<9x32x32xbf16, #tpu.memory_space<vmem>>, vector<1x32x32xbf16>
    %118 = vector.shape_cast %117 : vector<1x32x32xbf16> to vector<32x32xbf16>
    %cst_110 = arith.constant dense<0.000000e+00> : vector<80x32xf32>
    %119 = tpu.matmul %116, %118, %cst_110 {dimension_numbers = #tpu.dot_dimension_numbers<[1], [0], [0], [1], [0, 0, 1, 1], [], []>} : vector<80x32xbf16>, vector<32x32xbf16>, vector<80x32xf32> -> vector<80x32xf32>
    %120 = arith.addf %115, %119 : vector<80x32xf32>
    %c0_111 = arith.constant 0 : index
    %c0_112 = arith.constant 0 : index
    %121 = vector.load %arg5[%c0_111, %c0_112] : memref<1x32xf32, #tpu.memory_space<vmem>>, vector<1x32xf32>
    %122 = vector.broadcast %121 : vector<1x32xf32> to vector<80x32xf32>
    %123 = arith.addf %120, %122 : vector<80x32xf32>
    %cst_113 = arith.constant 0.000000e+00 : f32
    %124 = vector.broadcast %cst_113 : f32 to vector<80x32xf32>
    %125 = arith.maximumf %123, %124 : vector<80x32xf32>
    %c0_114 = arith.constant 0 : index
    %c0_115 = arith.constant 0 : index
    %126 = vector.load %arg11[%c0_114, %c0_115] : memref<256x32xf32, #tpu.memory_space<vmem>>, vector<80x32xf32>
    tpu.vector_store %arg11[%c0_114, %c0_115], %125 {strides = array<i32>} : memref<256x32xf32, #tpu.memory_space<vmem>>, vector<80x32xf32>,
    %c0_116 = arith.constant 0 : index
    %c0_117 = arith.constant 0 : index
    %127 = tpu.strided_load %arg11[%c0_116, %c0_117] {strides = array<i32: 2, 1>} : memref<256x32xf32, #tpu.memory_space<vmem>>, vector<40x32xf32>
    %c1_118 = arith.constant 1 : index
    %c0_119 = arith.constant 0 : index
    %128 = tpu.strided_load %arg11[%c1_118, %c0_119] {strides = array<i32: 2, 1>} : memref<256x32xf32, #tpu.memory_space<vmem>>, vector<40x32xf32>
    %129 = arith.maximumf %127, %128 : vector<40x32xf32>
    %c0_120 = arith.constant 0 : index
    %c0_121 = arith.constant 0 : index
    %130 = vector.load %arg12[%c0_120, %c0_121] : memref<128x32xf32, #tpu.memory_space<vmem>>, vector<40x32xf32>
    tpu.vector_store %arg12[%c0_120, %c0_121], %129 {strides = array<i32>} : memref<128x32xf32, #tpu.memory_space<vmem>>, vector<40x32xf32>,
    %c0_122 = arith.constant 0 : index
    %c0_123 = arith.constant 0 : index
    %131 = vector.load %arg12[%c0_122, %c0_123] : memref<128x32xf32, #tpu.memory_space<vmem>>, vector<4x32xf32>
    %c5_124 = arith.constant 5 : index
    %c0_125 = arith.constant 0 : index
    %132 = vector.load %arg12[%c5_124, %c0_125] : memref<128x32xf32, #tpu.memory_space<vmem>>, vector<4x32xf32>
    %133 = arith.maximumf %131, %132 : vector<4x32xf32>
    %134 = arith.truncf %133 : vector<4x32xf32> to vector<4x32xbf16>
    %c7_126 = arith.constant 7 : index
    %c0_127 = arith.constant 0 : index
    %135 = vector.load %arg10[%c7_126, %c0_127] : memref<48x32xbf16, #tpu.memory_space<vmem>>, vector<4x32xbf16>
    tpu.vector_store %arg10[%c7_126, %c0_127], %134 {strides = array<i32>} : memref<48x32xbf16, #tpu.memory_space<vmem>>, vector<4x32xbf16>,
    %c10_128 = arith.constant 10 : index
    %c0_129 = arith.constant 0 : index
    %136 = vector.load %arg12[%c10_128, %c0_129] : memref<128x32xf32, #tpu.memory_space<vmem>>, vector<4x32xf32>
    %c15 = arith.constant 15 : index
    %c0_130 = arith.constant 0 : index
    %137 = vector.load %arg12[%c15, %c0_130] : memref<128x32xf32, #tpu.memory_space<vmem>>, vector<4x32xf32>
    %138 = arith.maximumf %136, %137 : vector<4x32xf32>
    %139 = arith.truncf %138 : vector<4x32xf32> to vector<4x32xbf16>
    %c13 = arith.constant 13 : index
    %c0_131 = arith.constant 0 : index
    %140 = vector.load %arg10[%c13, %c0_131] : memref<48x32xbf16, #tpu.memory_space<vmem>>, vector<4x32xbf16>
    tpu.vector_store %arg10[%c13, %c0_131], %139 {strides = array<i32>} : memref<48x32xbf16, #tpu.memory_space<vmem>>, vector<4x32xbf16>,
    %c20_132 = arith.constant 20 : index
    %c0_133 = arith.constant 0 : index
    %141 = vector.load %arg12[%c20_132, %c0_133] : memref<128x32xf32, #tpu.memory_space<vmem>>, vector<4x32xf32>
    %c25 = arith.constant 25 : index
    %c0_134 = arith.constant 0 : index
    %142 = vector.load %arg12[%c25, %c0_134] : memref<128x32xf32, #tpu.memory_space<vmem>>, vector<4x32xf32>
    %143 = arith.maximumf %141, %142 : vector<4x32xf32>
    %144 = arith.truncf %143 : vector<4x32xf32> to vector<4x32xbf16>
    %c19 = arith.constant 19 : index
    %c0_135 = arith.constant 0 : index
    %145 = vector.load %arg10[%c19, %c0_135] : memref<48x32xbf16, #tpu.memory_space<vmem>>, vector<4x32xbf16>
    tpu.vector_store %arg10[%c19, %c0_135], %144 {strides = array<i32>} : memref<48x32xbf16, #tpu.memory_space<vmem>>, vector<4x32xbf16>,
    %c30 = arith.constant 30 : index
    %c0_136 = arith.constant 0 : index
    %146 = vector.load %arg12[%c30, %c0_136] : memref<128x32xf32, #tpu.memory_space<vmem>>, vector<4x32xf32>
    %c35 = arith.constant 35 : index
    %c0_137 = arith.constant 0 : index
    %147 = vector.load %arg12[%c35, %c0_137] : memref<128x32xf32, #tpu.memory_space<vmem>>, vector<4x32xf32>
    %148 = arith.maximumf %146, %147 : vector<4x32xf32>
    %149 = arith.truncf %148 : vector<4x32xf32> to vector<4x32xbf16>
    %c25_138 = arith.constant 25 : index
    %c0_139 = arith.constant 0 : index
    %150 = vector.load %arg10[%c25_138, %c0_139] : memref<48x32xbf16, #tpu.memory_space<vmem>>, vector<4x32xbf16>
    tpu.vector_store %arg10[%c25_138, %c0_139], %149 {strides = array<i32>} : memref<48x32xbf16, #tpu.memory_space<vmem>>, vector<4x32xbf16>,
    %c0_140 = arith.constant 0 : index
    %c0_141 = arith.constant 0 : index
    %151 = vector.load %arg10[%c0_140, %c0_141] : memref<48x32xbf16, #tpu.memory_space<vmem>>, vector<24x32xbf16>
    %c0_142 = arith.constant 0 : index
    %c0_143 = arith.constant 0 : index
    %c0_144 = arith.constant 0 : index
    %152 = vector.load %arg6[%c0_142, %c0_143, %c0_144] : memref<9x32x32xbf16, #tpu.memory_space<vmem>>, vector<1x32x32xbf16>
    %153 = vector.shape_cast %152 : vector<1x32x32xbf16> to vector<32x32xbf16>
    %cst_145 = arith.constant dense<0.000000e+00> : vector<24x32xf32>
    %154 = tpu.matmul %151, %153, %cst_145 {dimension_numbers = #tpu.dot_dimension_numbers<[1], [0], [0], [1], [0, 0, 1, 1], [], []>} : vector<24x32xbf16>, vector<32x32xbf16>, vector<24x32xf32> -> vector<24x32xf32>
    %c1_146 = arith.constant 1 : index
    %c0_147 = arith.constant 0 : index
    %155 = vector.load %arg10[%c1_146, %c0_147] : memref<48x32xbf16, #tpu.memory_space<vmem>>, vector<24x32xbf16>
    %c1_148 = arith.constant 1 : index
    %c0_149 = arith.constant 0 : index
    %c0_150 = arith.constant 0 : index
    %156 = vector.load %arg6[%c1_148, %c0_149, %c0_150] : memref<9x32x32xbf16, #tpu.memory_space<vmem>>, vector<1x32x32xbf16>
    %157 = vector.shape_cast %156 : vector<1x32x32xbf16> to vector<32x32xbf16>
    %cst_151 = arith.constant dense<0.000000e+00> : vector<24x32xf32>
    %158 = tpu.matmul %155, %157, %cst_151 {dimension_numbers = #tpu.dot_dimension_numbers<[1], [0], [0], [1], [0, 0, 1, 1], [], []>} : vector<24x32xbf16>, vector<32x32xbf16>, vector<24x32xf32> -> vector<24x32xf32>
    %159 = arith.addf %154, %158 : vector<24x32xf32>
    %c2_152 = arith.constant 2 : index
    %c0_153 = arith.constant 0 : index
    %160 = vector.load %arg10[%c2_152, %c0_153] : memref<48x32xbf16, #tpu.memory_space<vmem>>, vector<24x32xbf16>
    %c2_154 = arith.constant 2 : index
    %c0_155 = arith.constant 0 : index
    %c0_156 = arith.constant 0 : index
    %161 = vector.load %arg6[%c2_154, %c0_155, %c0_156] : memref<9x32x32xbf16, #tpu.memory_space<vmem>>, vector<1x32x32xbf16>
    %162 = vector.shape_cast %161 : vector<1x32x32xbf16> to vector<32x32xbf16>
    %cst_157 = arith.constant dense<0.000000e+00> : vector<24x32xf32>
    %163 = tpu.matmul %160, %162, %cst_157 {dimension_numbers = #tpu.dot_dimension_numbers<[1], [0], [0], [1], [0, 0, 1, 1], [], []>} : vector<24x32xbf16>, vector<32x32xbf16>, vector<24x32xf32> -> vector<24x32xf32>
    %164 = arith.addf %159, %163 : vector<24x32xf32>
    %c6_158 = arith.constant 6 : index
    %c0_159 = arith.constant 0 : index
    %165 = vector.load %arg10[%c6_158, %c0_159] : memref<48x32xbf16, #tpu.memory_space<vmem>>, vector<24x32xbf16>
    %c3_160 = arith.constant 3 : index
    %c0_161 = arith.constant 0 : index
    %c0_162 = arith.constant 0 : index
    %166 = vector.load %arg6[%c3_160, %c0_161, %c0_162] : memref<9x32x32xbf16, #tpu.memory_space<vmem>>, vector<1x32x32xbf16>
    %167 = vector.shape_cast %166 : vector<1x32x32xbf16> to vector<32x32xbf16>
    %cst_163 = arith.constant dense<0.000000e+00> : vector<24x32xf32>
    %168 = tpu.matmul %165, %167, %cst_163 {dimension_numbers = #tpu.dot_dimension_numbers<[1], [0], [0], [1], [0, 0, 1, 1], [], []>} : vector<24x32xbf16>, vector<32x32xbf16>, vector<24x32xf32> -> vector<24x32xf32>
    %169 = arith.addf %164, %168 : vector<24x32xf32>
    %c7_164 = arith.constant 7 : index
    %c0_165 = arith.constant 0 : index
    %170 = vector.load %arg10[%c7_164, %c0_165] : memref<48x32xbf16, #tpu.memory_space<vmem>>, vector<24x32xbf16>
    %c4_166 = arith.constant 4 : index
    %c0_167 = arith.constant 0 : index
    %c0_168 = arith.constant 0 : index
    %171 = vector.load %arg6[%c4_166, %c0_167, %c0_168] : memref<9x32x32xbf16, #tpu.memory_space<vmem>>, vector<1x32x32xbf16>
    %172 = vector.shape_cast %171 : vector<1x32x32xbf16> to vector<32x32xbf16>
    %cst_169 = arith.constant dense<0.000000e+00> : vector<24x32xf32>
    %173 = tpu.matmul %170, %172, %cst_169 {dimension_numbers = #tpu.dot_dimension_numbers<[1], [0], [0], [1], [0, 0, 1, 1], [], []>} : vector<24x32xbf16>, vector<32x32xbf16>, vector<24x32xf32> -> vector<24x32xf32>
    %174 = arith.addf %169, %173 : vector<24x32xf32>
    %c8_170 = arith.constant 8 : index
    %c0_171 = arith.constant 0 : index
    %175 = vector.load %arg10[%c8_170, %c0_171] : memref<48x32xbf16, #tpu.memory_space<vmem>>, vector<24x32xbf16>
    %c5_172 = arith.constant 5 : index
    %c0_173 = arith.constant 0 : index
    %c0_174 = arith.constant 0 : index
    %176 = vector.load %arg6[%c5_172, %c0_173, %c0_174] : memref<9x32x32xbf16, #tpu.memory_space<vmem>>, vector<1x32x32xbf16>
    %177 = vector.shape_cast %176 : vector<1x32x32xbf16> to vector<32x32xbf16>
    %cst_175 = arith.constant dense<0.000000e+00> : vector<24x32xf32>
    %178 = tpu.matmul %175, %177, %cst_175 {dimension_numbers = #tpu.dot_dimension_numbers<[1], [0], [0], [1], [0, 0, 1, 1], [], []>} : vector<24x32xbf16>, vector<32x32xbf16>, vector<24x32xf32> -> vector<24x32xf32>
    %179 = arith.addf %174, %178 : vector<24x32xf32>
    %c12_176 = arith.constant 12 : index
    %c0_177 = arith.constant 0 : index
    %180 = vector.load %arg10[%c12_176, %c0_177] : memref<48x32xbf16, #tpu.memory_space<vmem>>, vector<24x32xbf16>
    %c6_178 = arith.constant 6 : index
    %c0_179 = arith.constant 0 : index
    %c0_180 = arith.constant 0 : index
    %181 = vector.load %arg6[%c6_178, %c0_179, %c0_180] : memref<9x32x32xbf16, #tpu.memory_space<vmem>>, vector<1x32x32xbf16>
    %182 = vector.shape_cast %181 : vector<1x32x32xbf16> to vector<32x32xbf16>
    %cst_181 = arith.constant dense<0.000000e+00> : vector<24x32xf32>
    %183 = tpu.matmul %180, %182, %cst_181 {dimension_numbers = #tpu.dot_dimension_numbers<[1], [0], [0], [1], [0, 0, 1, 1], [], []>} : vector<24x32xbf16>, vector<32x32xbf16>, vector<24x32xf32> -> vector<24x32xf32>
    %184 = arith.addf %179, %183 : vector<24x32xf32>
    %c13_182 = arith.constant 13 : index
    %c0_183 = arith.constant 0 : index
    %185 = vector.load %arg10[%c13_182, %c0_183] : memref<48x32xbf16, #tpu.memory_space<vmem>>, vector<24x32xbf16>
    %c7_184 = arith.constant 7 : index
    %c0_185 = arith.constant 0 : index
    %c0_186 = arith.constant 0 : index
    %186 = vector.load %arg6[%c7_184, %c0_185, %c0_186] : memref<9x32x32xbf16, #tpu.memory_space<vmem>>, vector<1x32x32xbf16>
    %187 = vector.shape_cast %186 : vector<1x32x32xbf16> to vector<32x32xbf16>
    %cst_187 = arith.constant dense<0.000000e+00> : vector<24x32xf32>
    %188 = tpu.matmul %185, %187, %cst_187 {dimension_numbers = #tpu.dot_dimension_numbers<[1], [0], [0], [1], [0, 0, 1, 1], [], []>} : vector<24x32xbf16>, vector<32x32xbf16>, vector<24x32xf32> -> vector<24x32xf32>
    %189 = arith.addf %184, %188 : vector<24x32xf32>
    %c14 = arith.constant 14 : index
    %c0_188 = arith.constant 0 : index
    %190 = vector.load %arg10[%c14, %c0_188] : memref<48x32xbf16, #tpu.memory_space<vmem>>, vector<24x32xbf16>
    %c8_189 = arith.constant 8 : index
    %c0_190 = arith.constant 0 : index
    %c0_191 = arith.constant 0 : index
    %191 = vector.load %arg6[%c8_189, %c0_190, %c0_191] : memref<9x32x32xbf16, #tpu.memory_space<vmem>>, vector<1x32x32xbf16>
    %192 = vector.shape_cast %191 : vector<1x32x32xbf16> to vector<32x32xbf16>
    %cst_192 = arith.constant dense<0.000000e+00> : vector<24x32xf32>
    %193 = tpu.matmul %190, %192, %cst_192 {dimension_numbers = #tpu.dot_dimension_numbers<[1], [0], [0], [1], [0, 0, 1, 1], [], []>} : vector<24x32xbf16>, vector<32x32xbf16>, vector<24x32xf32> -> vector<24x32xf32>
    %194 = arith.addf %189, %193 : vector<24x32xf32>
    %c0_193 = arith.constant 0 : index
    %c0_194 = arith.constant 0 : index
    %195 = vector.load %arg7[%c0_193, %c0_194] : memref<1x32xf32, #tpu.memory_space<vmem>>, vector<1x32xf32>
    %196 = vector.broadcast %195 : vector<1x32xf32> to vector<24x32xf32>
    %197 = arith.addf %194, %196 : vector<24x32xf32>
    %cst_195 = arith.constant 0.000000e+00 : f32
    %198 = vector.broadcast %cst_195 : f32 to vector<24x32xf32>
    %199 = arith.maximumf %197, %198 : vector<24x32xf32>
    %c0_196 = arith.constant 0 : index
    %c0_197 = arith.constant 0 : index
    %200 = vector.load %arg11[%c0_196, %c0_197] : memref<256x32xf32, #tpu.memory_space<vmem>>, vector<24x32xf32>
    tpu.vector_store %arg11[%c0_196, %c0_197], %199 {strides = array<i32>} : memref<256x32xf32, #tpu.memory_space<vmem>>, vector<24x32xf32>,
    %c0_198 = arith.constant 0 : index
    %c0_199 = arith.constant 0 : index
    %201 = tpu.strided_load %arg11[%c0_198, %c0_199] {strides = array<i32: 2, 1>} : memref<256x32xf32, #tpu.memory_space<vmem>>, vector<12x32xf32>
    %c1_200 = arith.constant 1 : index
    %c0_201 = arith.constant 0 : index
    %202 = tpu.strided_load %arg11[%c1_200, %c0_201] {strides = array<i32: 2, 1>} : memref<256x32xf32, #tpu.memory_space<vmem>>, vector<12x32xf32>
    %203 = arith.maximumf %201, %202 : vector<12x32xf32>
    %c0_202 = arith.constant 0 : index
    %c0_203 = arith.constant 0 : index
    %204 = vector.load %arg12[%c0_202, %c0_203] : memref<128x32xf32, #tpu.memory_space<vmem>>, vector<12x32xf32>
    tpu.vector_store %arg12[%c0_202, %c0_203], %203 {strides = array<i32>} : memref<128x32xf32, #tpu.memory_space<vmem>>, vector<12x32xf32>,
    %c0_204 = arith.constant 0 : index
    %c0_205 = arith.constant 0 : index
    %205 = vector.load %arg12[%c0_204, %c0_205] : memref<128x32xf32, #tpu.memory_space<vmem>>, vector<2x32xf32>
    %c3_206 = arith.constant 3 : index
    %c0_207 = arith.constant 0 : index
    %206 = vector.load %arg12[%c3_206, %c0_207] : memref<128x32xf32, #tpu.memory_space<vmem>>, vector<2x32xf32>
    %207 = arith.maximumf %205, %206 : vector<2x32xf32>
    %c0_208 = arith.constant 0 : index
    %c0_209 = arith.constant 0 : index
    %c0_210 = arith.constant 0 : index
    %208 = vector.load %arg8[%c0_208, %c0_209, %c0_210] : memref<1x4x32xf32, #tpu.memory_space<vmem>>, vector<1x2x32xf32>
    %209 = vector.shape_cast %208 : vector<1x2x32xf32> to vector<2x32xf32>
    %210 = vector.shape_cast %207 : vector<2x32xf32> to vector<1x2x32xf32>
    tpu.vector_store %arg8[%c0_208, %c0_209, %c0_210], %210 {strides = array<i32>} : memref<1x4x32xf32, #tpu.memory_space<vmem>>, vector<1x2x32xf32>,
    %c6_211 = arith.constant 6 : index
    %c0_212 = arith.constant 0 : index
    %211 = vector.load %arg12[%c6_211, %c0_212] : memref<128x32xf32, #tpu.memory_space<vmem>>, vector<2x32xf32>
    %c9 = arith.constant 9 : index
    %c0_213 = arith.constant 0 : index
    %212 = vector.load %arg12[%c9, %c0_213] : memref<128x32xf32, #tpu.memory_space<vmem>>, vector<2x32xf32>
    %213 = arith.maximumf %211, %212 : vector<2x32xf32>
    %c0_214 = arith.constant 0 : index
    %c2_215 = arith.constant 2 : index
    %c0_216 = arith.constant 0 : index
    %214 = vector.load %arg8[%c0_214, %c2_215, %c0_216] : memref<1x4x32xf32, #tpu.memory_space<vmem>>, vector<1x2x32xf32>
    %215 = vector.shape_cast %214 : vector<1x2x32xf32> to vector<2x32xf32>
    %216 = vector.shape_cast %213 : vector<2x32xf32> to vector<1x2x32xf32>
    tpu.vector_store %arg8[%c0_214, %c2_215, %c0_216], %216 {strides = array<i32>} : memref<1x4x32xf32, #tpu.memory_space<vmem>>, vector<1x2x32xf32>,
    return
  }
  func.func @transform_0(%arg0: i32) -> (i32, i32, i32) {
    %c0_i32 = arith.constant 0 : i32
    %c0_i32_0 = arith.constant 0 : i32
    %c0_i32_1 = arith.constant 0 : i32
    return %arg0, %c0_i32, %c0_i32_0 : i32, i32, i32
  }
  func.func @transform_1(%arg0: i32) -> (i32, i32, i32) {
    %c0_i32 = arith.constant 0 : i32
    %c0_i32_0 = arith.constant 0 : i32
    %c0_i32_1 = arith.constant 0 : i32
    %c0_i32_2 = arith.constant 0 : i32
    return %c0_i32, %c0_i32_0, %c0_i32_1 : i32, i32, i32
  }
  func.func @transform_2(%arg0: i32) -> (i32, i32) {
    %c0_i32 = arith.constant 0 : i32
    %c0_i32_0 = arith.constant 0 : i32
    %c0_i32_1 = arith.constant 0 : i32
    return %c0_i32, %c0_i32_0 : i32, i32
  }
  func.func @transform_3(%arg0: i32) -> (i32, i32, i32) {
    %c0_i32 = arith.constant 0 : i32
    %c0_i32_0 = arith.constant 0 : i32
    %c0_i32_1 = arith.constant 0 : i32
    %c0_i32_2 = arith.constant 0 : i32
    return %c0_i32, %c0_i32_0, %c0_i32_1 : i32, i32, i32
  }
  func.func @transform_4(%arg0: i32) -> (i32, i32) {
    %c0_i32 = arith.constant 0 : i32
    %c0_i32_0 = arith.constant 0 : i32
    %c0_i32_1 = arith.constant 0 : i32
    return %c0_i32, %c0_i32_0 : i32, i32
  }
  func.func @transform_5(%arg0: i32) -> (i32, i32, i32) {
    %c0_i32 = arith.constant 0 : i32
    %c0_i32_0 = arith.constant 0 : i32
    %c0_i32_1 = arith.constant 0 : i32
    %c0_i32_2 = arith.constant 0 : i32
    return %c0_i32, %c0_i32_0, %c0_i32_1 : i32, i32, i32
  }
  func.func @transform_6(%arg0: i32) -> (i32, i32) {
    %c0_i32 = arith.constant 0 : i32
    %c0_i32_0 = arith.constant 0 : i32
    %c0_i32_1 = arith.constant 0 : i32
    return %c0_i32, %c0_i32_0 : i32, i32
  }
  func.func @transform_7(%arg0: i32) -> (i32, i32, i32) {
    %c0_i32 = arith.constant 0 : i32
    %c0_i32_0 = arith.constant 0 : i32
    %c0_i32_1 = arith.constant 0 : i32
    return %arg0, %c0_i32, %c0_i32_0 : i32, i32, i32
  }
}

</mosaic_0001>

<llo_original>
// kernel: generalized_convnet_forward.1
$region0: #{generalized_convnet_forward.1}
  #allocation0 [shape = 'u32[]', space=smem, size = 0x4, offset = 0x4, fixed_abs, tag = 'smem constant byte address 0x4 - core index']
  #allocation1 [shape = 'u32[72,128]{1,0:T(1,128)}', space=vmem, size = 0x9000, scoped, tag = 'internal scratch']
  #allocation2 [shape = 'bf16[112,32]{1,0:T(8,128)(2,1)}', space=vmem, size = 0x7000, scoped, tag = 'scratch operand']
  #allocation3 [shape = 'bf16[48,32]{1,0:T(8,128)(2,1)}', space=vmem, size = 0x3000, scoped, tag = 'scratch operand']
  #allocation4 [shape = 'f32[256,32]{1,0:T(8,128)}', space=vmem, size = 0x20000, scoped, tag = 'scratch operand']
  #allocation5 [shape = 'f32[128,32]{1,0:T(8,128)}', space=vmem, size = 0x10000, scoped, tag = 'scratch operand']
  %s0 = inlined_call_operand.vmem [shape: bf16[2,304,48], index: 0, kind: input, shape index: {}]
  %s1 = inlined_call_operand.vmem [shape: bf16[4,48,32], index: 1, kind: input, shape index: {}]
  %s2 = inlined_call_operand.vmem [shape: f32[1,32], index: 2, kind: input, shape index: {}]
  %s3 = inlined_call_operand.vmem [shape: bf16[9,32,32], index: 3, kind: input, shape index: {}]
  %s4 = inlined_call_operand.vmem [shape: f32[1,32], index: 4, kind: input, shape index: {}]
  %s5 = inlined_call_operand.vmem [shape: bf16[9,32,32], index: 5, kind: input, shape index: {}]
  %s6 = inlined_call_operand.vmem [shape: f32[1,32], index: 6, kind: input, shape index: {}]
  %s7 = inlined_call_operand.hbm [shape: f32[2,4,32], index: 7, kind: output, shape index: {}]
  %s8 = sld [smem:[#allocation0]]
  $region61: #{generalized_convnet_forward.1} parent=0
    _
  %s10 = ssub.s32 1, %s8
  %s11 = scalar_select 0, %s10, %s8
  $region1: #{generalized_convnet_forward.1} parent=0
    #allocation6 [shape = 'u8[4096]{0}', space=vmem, size = 0x1000, scoped, tag = 'output window, operand 0']
    #allocation7 [shape = 's32[2]{0}', space=sflag, size = 0x8, scoped, tag = 'scoped memory for generalized_convnet_forward.1']
    %12 = vsyncpa [#allocation7], 0
    %s13 = scalar_lea.sflag [#allocation7], 1
    %14 = vsyncpa %s13, 0
    loop: start=0, step=1, limit=4
    $region2: #{generalized_convnet_forward.1} parent=1 // loop_pre_header
      _
    $region3: #{generalized_convnet_forward.1} parent=1 // loop_header
      %s16 = sphi 0, %s20
      %p17 = scmp.ge.s32.totalorder %s16, 4
      %s26 = sphi 0, %s28
      %s29 = sphi 0, %s26
      %s30 = sphi 0, %s29
      %s46 = sphi 0, %s30
      %s50 = sphi 0, %s50
      %s52 = sphi 0, %s50
      %s53 = sphi 0, %s52
      %s67 = sphi 0, %s53
      %s71 = sphi 0, %s71
      %s73 = sphi 0, %s71
      %s74 = sphi 0, %s73
      %s88 = sphi 0, %s74
      %s92 = sphi 0, %s92
      %s94 = sphi 0, %s92
      %s95 = sphi 0, %s94
      %s109 = sphi 0, %s95
      %s113 = sphi 0, %s113
      %s115 = sphi 0, %s113
      %s116 = sphi 0, %s115
      %s130 = sphi 0, %s116
      %s134 = sphi 0, %s134
      %s136 = sphi 0, %s134
      %s137 = sphi 0, %s136
      %s151 = sphi 0, %s137
      %s155 = sphi 0, %s155
      %s157 = sphi 0, %s155
      %s158 = sphi 0, %s157
      %s172 = sphi 0, %s158
      %s178 = sphi 0, %s180
      %s181 = sphi 0, %s178
      %s182 = sphi 0, %s181
      %s198 = sphi 0, %s182
    $region4: #{generalized_convnet_forward.1} parent=1 // loop_header_branch
      %19 = sbr.rel (%p17) target = $region8
    $region5: #{generalized_convnet_forward.1} parent=1 // loop_body
      %s21 = ssub.s32 %s16, 1
      %s22 = ssub.s32 %s16, 2
      %s23 = sadd.s32 %s16, 1
      %s24 = ssub.s32 %s16, %s23
      %p25 = scmp.eq.s32.totalorder %s24, 0
      %s27 = sadd.s32 %s26, 1
      %s28 = scalar_select %p25, %s26, %s27
      %p31 = pneg %p25
      %p32 = scmp.eq.s32.totalorder %s16, 1
      %p33 = por %p31, %p32
      %p34 = scmp.ne.s32.totalorder %s26, %s29
      %p35 = scmp.eq.s32.totalorder %s16, 0
      %p36 = por %p34, %p35
      %p37 = scmp.ne.s32.totalorder %s26, %s29
      %p38 = scmp.eq.s32.totalorder %s21, 1
      %p39 = por %p37, %p38
      %p40 = scmp.ne.s32.totalorder %s29, %s30
      %p41 = scmp.eq.s32.totalorder %s21, 0
      %p42 = por %p40, %p41
      %p43 = scmp.ne.s32.totalorder %s29, %s30
      %p44 = scmp.eq.s32.totalorder %s22, 1
      %p45 = por %p43, %p44
      %p47 = scmp.ne.s32.totalorder %s30, %s46
      %p48 = scmp.eq.s32.totalorder %s22, 0
      %p49 = por %p47, %p48
      %s51 = sadd.s32 %s50, 1
      %p54 = scmp.eq.s32.totalorder %s16, 1
      %p55 = scmp.ne.s32.totalorder %s50, %s52
      %p56 = scmp.eq.s32.totalorder %s16, 0
      %p57 = por %p55, %p56
      %p58 = scmp.ne.s32.totalorder %s50, %s52
      %p59 = scmp.eq.s32.totalorder %s21, 1
      %p60 = por %p58, %p59
      %p61 = scmp.ne.s32.totalorder %s52, %s53
      %p62 = scmp.eq.s32.totalorder %s21, 0
      %p63 = por %p61, %p62
      %p64 = scmp.ne.s32.totalorder %s52, %s53
      %p65 = scmp.eq.s32.totalorder %s22, 1
      %p66 = por %p64, %p65
      %p68 = scmp.ne.s32.totalorder %s53, %s67
      %p69 = scmp.eq.s32.totalorder %s22, 0
      %p70 = por %p68, %p69
      %s72 = sadd.s32 %s71, 1
      %p75 = scmp.eq.s32.totalorder %s16, 1
      %p76 = scmp.ne.s32.totalorder %s71, %s73
      %p77 = scmp.eq.s32.totalorder %s16, 0
      %p78 = por %p76, %p77
      %p79 = scmp.ne.s32.totalorder %s71, %s73
      %p80 = scmp.eq.s32.totalorder %s21, 1
      %p81 = por %p79, %p80
      %p82 = scmp.ne.s32.totalorder %s73, %s74
      %p83 = scmp.eq.s32.totalorder %s21, 0
      %p84 = por %p82, %p83
      %p85 = scmp.ne.s32.totalorder %s73, %s74
      %p86 = scmp.eq.s32.totalorder %s22, 1
      %p87 = por %p85, %p86
      %p89 = scmp.ne.s32.totalorder %s74, %s88
      %p90 = scmp.eq.s32.totalorder %s22, 0
      %p91 = por %p89, %p90
      %s93 = sadd.s32 %s92, 1
      %p96 = scmp.eq.s32.totalorder %s16, 1
      %p97 = scmp.ne.s32.totalorder %s92, %s94
      %p98 = scmp.eq.s32.totalorder %s16, 0
      %p99 = por %p97, %p98
      %p100 = scmp.ne.s32.totalorder %s92, %s94
      %p101 = scmp.eq.s32.totalorder %s21, 1
      %p102 = por %p100, %p101
      %p103 = scmp.ne.s32.totalorder %s94, %s95
      %p104 = scmp.eq.s32.totalorder %s21, 0
      %p105 = por %p103, %p104
      %p106 = scmp.ne.s32.totalorder %s94, %s95
      %p107 = scmp.eq.s32.totalorder %s22, 1
      %p108 = por %p106, %p107
      %p110 = scmp.ne.s32.totalorder %s95, %s109
      %p111 = scmp.eq.s32.totalorder %s22, 0
      %p112 = por %p110, %p111
      %s114 = sadd.s32 %s113, 1
      %p117 = scmp.eq.s32.totalorder %s16, 1
      %p118 = scmp.ne.s32.totalorder %s113, %s115
      %p119 = scmp.eq.s32.totalorder %s16, 0
      %p120 = por %p118, %p119
      %p121 = scmp.ne.s32.totalorder %s113, %s115
      %p122 = scmp.eq.s32.totalorder %s21, 1
      %p123 = por %p121, %p122
      %p124 = scmp.ne.s32.totalorder %s115, %s116
      %p125 = scmp.eq.s32.totalorder %s21, 0
      %p126 = por %p124, %p125
      %p127 = scmp.ne.s32.totalorder %s115, %s116
      %p128 = scmp.eq.s32.totalorder %s22, 1
      %p129 = por %p127, %p128
      %p131 = scmp.ne.s32.totalorder %s116, %s130
      %p132 = scmp.eq.s32.totalorder %s22, 0
      %p133 = por %p131, %p132
      %s135 = sadd.s32 %s134, 1
      %p138 = scmp.eq.s32.totalorder %s16, 1
      %p139 = scmp.ne.s32.totalorder %s134, %s136
      %p140 = scmp.eq.s32.totalorder %s16, 0
      %p141 = por %p139, %p140
      %p142 = scmp.ne.s32.totalorder %s134, %s136
      %p143 = scmp.eq.s32.totalorder %s21, 1
      %p144 = por %p142, %p143
      %p145 = scmp.ne.s32.totalorder %s136, %s137
      %p146 = scmp.eq.s32.totalorder %s21, 0
      %p147 = por %p145, %p146
      %p148 = scmp.ne.s32.totalorder %s136, %s137
      %p149 = scmp.eq.s32.totalorder %s22, 1
      %p150 = por %p148, %p149
      %p152 = scmp.ne.s32.totalorder %s137, %s151
      %p153 = scmp.eq.s32.totalorder %s22, 0
      %p154 = por %p152, %p153
      %s156 = sadd.s32 %s155, 1
      %p159 = scmp.eq.s32.totalorder %s16, 1
      %p160 = scmp.ne.s32.totalorder %s155, %s157
      %p161 = scmp.eq.s32.totalorder %s16, 0
      %p162 = por %p160, %p161
      %p163 = scmp.ne.s32.totalorder %s155, %s157
      %p164 = scmp.eq.s32.totalorder %s21, 1
      %p165 = por %p163, %p164
      %p166 = scmp.ne.s32.totalorder %s157, %s158
      %p167 = scmp.eq.s32.totalorder %s21, 0
      %p168 = por %p166, %p167
      %p169 = scmp.ne.s32.totalorder %s157, %s158
      %p170 = scmp.eq.s32.totalorder %s22, 1
      %p171 = por %p169, %p170
      %p173 = scmp.ne.s32.totalorder %s158, %s172
      %p174 = scmp.eq.s32.totalorder %s22, 0
      %p175 = por %p173, %p174
      %s176 = ssub.s32 %s16, %s23
      %p177 = scmp.eq.s32.totalorder %s176, 0
      %s179 = sadd.s32 %s178, 1
      %s180 = scalar_select %p177, %s178, %s179
      %p183 = pneg %p177
      %p184 = scmp.eq.s32.totalorder %s16, 1
      %p185 = por %p183, %p184
      %p186 = scmp.ne.s32.totalorder %s178, %s181
      %p187 = scmp.eq.s32.totalorder %s16, 0
      %p188 = por %p186, %p187
      %p189 = scmp.ne.s32.totalorder %s178, %s181
      %p190 = scmp.eq.s32.totalorder %s21, 1
      %p191 = por %p189, %p190
      %p192 = scmp.ne.s32.totalorder %s181, %s182
      %p193 = scmp.eq.s32.totalorder %s21, 0
      %p194 = por %p192, %p193
      %p195 = scmp.ne.s32.totalorder %s181, %s182
      %p196 = scmp.eq.s32.totalorder %s22, 1
      %p197 = por %p195, %p196
      %p199 = scmp.ne.s32.totalorder %s182, %s198
      %p200 = scmp.eq.s32.totalorder %s22, 0
      %p201 = por %p199, %p200
      %p202 = scmp.le.s32.totalorder 1, %s16
      %p203 = scmp.lt.s32.totalorder %s16, 3
      %p204 = pnand %p202, %p203
      %p205 = pneg %p204
      // Predicated region
      $region9: #{generalized_convnet_forward.1} parent=5 // pred_check
        _
      $region10: #{generalized_convnet_forward.1} parent=5 // pred_check_branch
        %207 = sbr.rel (%p204) target = $region12
      $region11: #{generalized_convnet_forward.1} parent=5 // pred_region
        %s208 = ssub.s32 %s16, 1
        // Predicated region
        $region13: #{generalized_convnet_forward.1} parent=11 // pred_check
          %p209 = pneg %p63
        $region14: #{generalized_convnet_forward.1} parent=11 // pred_check_branch
          %211 = sbr.rel (%p209) target = $region16
        $region15: #{generalized_convnet_forward.1} parent=11 // pred_region
          _
        $region16: #{generalized_convnet_forward.1} parent=11 // pred_fallthru
          _
        // Predicated region
        $region17: #{generalized_convnet_forward.1} parent=11 // pred_check
          %p212 = pneg %p84
        $region18: #{generalized_convnet_forward.1} parent=11 // pred_check_branch
          %214 = sbr.rel (%p212) target = $region20
        $region19: #{generalized_convnet_forward.1} parent=11 // pred_region
          _
        $region20: #{generalized_convnet_forward.1} parent=11 // pred_fallthru
          _
        // Predicated region
        $region21: #{generalized_convnet_forward.1} parent=11 // pred_check
          %p215 = pneg %p105
        $region22: #{generalized_convnet_forward.1} parent=11 // pred_check_branch
          %217 = sbr.rel (%p215) target = $region24
        $region23: #{generalized_convnet_forward.1} parent=11 // pred_region
          _
        $region24: #{generalized_convnet_forward.1} parent=11 // pred_fallthru
          _
        // Predicated region
        $region25: #{generalized_convnet_forward.1} parent=11 // pred_check
          %p218 = pneg %p126
        $region26: #{generalized_convnet_forward.1} parent=11 // pred_check_branch
          %220 = sbr.rel (%p218) target = $region28
        $region27: #{generalized_convnet_forward.1} parent=11 // pred_region
          _
        $region28: #{generalized_convnet_forward.1} parent=11 // pred_fallthru
          _
        // Predicated region
        $region29: #{generalized_convnet_forward.1} parent=11 // pred_check
          %p221 = pneg %p147
        $region30: #{generalized_convnet_forward.1} parent=11 // pred_check_branch
          %223 = sbr.rel (%p221) target = $region32
        $region31: #{generalized_convnet_forward.1} parent=11 // pred_region
          _
        $region32: #{generalized_convnet_forward.1} parent=11 // pred_fallthru
          _
        // Predicated region
        $region33: #{generalized_convnet_forward.1} parent=11 // pred_check
          %p224 = pneg %p168
        $region34: #{generalized_convnet_forward.1} parent=11 // pred_check_branch
          %226 = sbr.rel (%p224) target = $region36
        $region35: #{generalized_convnet_forward.1} parent=11 // pred_region
          _
        $region36: #{generalized_convnet_forward.1} parent=11 // pred_fallthru
          _
      $region12: #{generalized_convnet_forward.1} parent=5 // pred_fallthru
        _
      %p227 = scmp.lt.s32.totalorder %s16, 2
      // Predicated region
      $region37: #{generalized_convnet_forward.1} parent=5 // pred_check
        %p228 = pneg %p227
      $region38: #{generalized_convnet_forward.1} parent=5 // pred_check_branch
        %230 = sbr.rel (%p228) target = $region40
      $region39: #{generalized_convnet_forward.1} parent=5 // pred_region
        // Predicated region
        $region41: #{generalized_convnet_forward.1} parent=39 // pred_check
          %p231 = pneg %p36
        $region42: #{generalized_convnet_forward.1} parent=39 // pred_check_branch
          %233 = sbr.rel (%p231) target = $region44
        $region43: #{generalized_convnet_forward.1} parent=39 // pred_region
          %p234 = scmp.lt.s32.totalorder %s16, 1
          %s235 = scalar_select %p234, %s16, 1
          %s236 = smul.addr %s235, 38
          %s237 = smul.addr %s236, 4
          %s238 = scalar_lea.vmem %s0, %s237
        $region44: #{generalized_convnet_forward.1} parent=39 // pred_fallthru
          _
      $region40: #{generalized_convnet_forward.1} parent=5 // pred_fallthru
        _
      %p239 = scmp.le.s32.totalorder 1, %s16
      %p240 = scmp.lt.s32.totalorder %s16, 3
      %p241 = pnand %p239, %p240
      %p242 = pneg %p241
      // Predicated region
      $region45: #{generalized_convnet_forward.1} parent=5 // pred_check
        _
      $region46: #{generalized_convnet_forward.1} parent=5 // pred_check_branch
        %244 = sbr.rel (%p241) target = $region48
      $region47: #{generalized_convnet_forward.1} parent=5 // pred_region
        %s245 = ssub.s32 %s16, 1
        %p246 = scmp.lt.s32.totalorder %s21, 1
        %s247 = scalar_select %p246, %s21, 1
        %s248 = smul.addr %s247, 38
        %s249 = smul.addr %s248, 4
        %s250 = scalar_lea.vmem %s0, %s249
        %p251 = pneg %p42
        %p252 = pneg %p39
        %p253 = pneg %p63
        %p254 = pneg %p60
        %p255 = pneg %p84
        %p256 = pneg %p81
        %p257 = pneg %p105
        %p258 = pneg %p102
        %p259 = pneg %p126
        %p260 = pneg %p123
        %p261 = pneg %p147
        %p262 = pneg %p144
        %p263 = pneg %p168
        %p264 = pneg %p165
        %p265 = pneg %p194
        %p266 = pneg %p191
        %s267 = sand.u32 %s181, 1
        %s268 = scalar_lea.sflag [#allocation7], %s267
        %s269 = sand.u32 %s181, 1
        %s270 = smul.addr %s269, 4
        %s271 = scalar_lea.vmem [#allocation6], %s270
        %p272 = scmp.lt.s32.totalorder %s21, 1
        %s273 = scalar_select %p272, %s21, 1
        %s274 = smul.addr %s273, 38
        %s275 = smul.addr %s274, 4
        %s276 = scalar_lea.vmem %s0, %s275
        %vm278 = vcmask 257024
        %279 = vst.msk [vmem:[#allocation2] sm:$0xf] %vm278, 0
        %280 = vst.msk [vmem:[#allocation2 + $0x4] sm:$0xf] %vm278, 0
        %281 = vst.msk [vmem:[#allocation2 + $0x8] sm:$0xf] %vm278, 0
        %282 = vst.msk [vmem:[#allocation2 + $0xc] sm:$0xf] %vm278, 0
        %283 = vst.msk [vmem:[#allocation2 + $0x10] sm:$0xf] %vm278, 0
        %284 = vst.msk [vmem:[#allocation2 + $0x14] sm:$0xf] %vm278, 0
        %285 = vst.msk [vmem:[#allocation2 + $0x18] sm:$0xf] %vm278, 0
        %286 = vst.msk [vmem:[#allocation2 + $0x1c] sm:$0xf] %vm278, 0
        %287 = vst.msk [vmem:[#allocation2 + $0x20] sm:$0xf] %vm278, 0
        %288 = vst.msk [vmem:[#allocation2 + $0x24] sm:$0xf] %vm278, 0
        %289 = vst.msk [vmem:[#allocation2 + $0x28] sm:$0xf] %vm278, 0
        %290 = vst.msk [vmem:[#allocation2 + $0x2c] sm:$0xf] %vm278, 0
        %291 = vst.msk [vmem:[#allocation2 + $0x30] sm:$0xf] %vm278, 0
        %292 = vst.msk [vmem:[#allocation2 + $0x34] sm:$0xf] %vm278, 0
        %293 = vst.msk [vmem:[#allocation3] sm:$0xf] %vm278, 0
        %294 = vst.msk [vmem:[#allocation3 + $0x4] sm:$0xf] %vm278, 0
        %295 = vst.msk [vmem:[#allocation3 + $0x8] sm:$0xf] %vm278, 0
        %296 = vst.msk [vmem:[#allocation3 + $0xc] sm:$0xf] %vm278, 0
        %297 = vst.msk [vmem:[#allocation3 + $0x10] sm:$0xf] %vm278, 0
        %298 = vst.msk [vmem:[#allocation3 + $0x14] sm:$0xf] %vm278, 0
        %v299 = vld [vmem:[%s276] sm:$0xf]
        %v300 = vld [vmem:[%s276 + $0x4] sm:$0xf]
        %v301 = vld [vmem:[%s276 + $0x8] sm:$0xf]
        %v302 = vld [vmem:[%s276 + $0xc] sm:$0xf]
        %v303 = vld [vmem:[%s276 + $0x10] sm:$0xf]
        %v304 = vld [vmem:[%s276 + $0x14] sm:$0xf]
        %v305 = vld [vmem:[%s276 + $0x18] sm:$0xf]
        %v306 = vld [vmem:[%s276 + $0x1c] sm:$0xf]
        %v307 = vld [vmem:[%s276 + $0x20] sm:$0xf]
        %v308 = vld [vmem:[%s276 + $0x24] sm:$0xf]
        %v309 = vld [vmem:[%s276 + $0x28] sm:$0xf]
        %v310 = vld [vmem:[%s276 + $0x2c] sm:$0xf]
        %v311 = vld [vmem:[%s276 + $0x30] sm:$0xf]
        %v312 = vld [vmem:[%s276 + $0x34] sm:$0xf]
        %v313 = vld [vmem:[%s276 + $0x38] sm:$0xf]
        %v314 = vld [vmem:[%s276 + $0x3c] sm:$0xf]
        %v315 = vld [vmem:[%s276 + $0x40] sm:$0xf]
        %v316 = vld [vmem:[%s276 + $0x44] sm:$0xf]
        %v317 = vld [vmem:[%s276 + $0x48] sm:$0xf]
        %v318 = vld [vmem:[%s276 + $0x4c] sm:$0xf]
        %v319 = vld [vmem:[%s276 + $0x50] sm:$0xf]
        %v320 = vld [vmem:[%s276 + $0x54] sm:$0xf]
        %v321 = vld [vmem:[%s276 + $0x58] sm:$0xf]
        %v322 = vld [vmem:[%s276 + $0x5c] sm:$0xf]
        %v323 = vld [vmem:[%s276 + $0x60] sm:$0xf]
        %v324 = vld [vmem:[%s276 + $0x64] sm:$0xf]
        %v325 = vld [vmem:[%s276 + $0x68] sm:$0xf]
        %v326 = vld [vmem:[%s276 + $0x6c] sm:$0xf]
        %v327 = vld [vmem:[%s276 + $0x70] sm:$0xf]
        %v328 = vld [vmem:[%s276 + $0x74] sm:$0xf]
        %v329 = vld [vmem:[%s276 + $0x78] sm:$0xf]
        %v330 = vld [vmem:[%s276 + $0x7c] sm:$0xf]
        %v331 = vld [vmem:[%s1] sm:$0xf]
        %v332 = vld [vmem:[%s1 + $0x4] sm:$0xf]
        %v333 = vld [vmem:[%s1 + $0x8] sm:$0xf]
        %v334 = vld [vmem:[%s1 + $0xc] sm:$0xf]
        %v335 = vld [vmem:[%s1 + $0x10] sm:$0xf]
        %v336 = vld [vmem:[%s1 + $0x14] sm:$0xf]
        %v337 = vld [vmem:[%s276 + $0x80] sm:$0xf]
        %v338 = vld [vmem:[%s276 + $0x84] sm:$0xf]
        %s339 = scalar_lea.vmem %s1, 24
        %v340 = vld [vmem:[%s339] sm:$0xf]
        %v341 = vld [vmem:[%s339 + $0x4] sm:$0xf]
        %v342 = vld [vmem:[%s339 + $0x8] sm:$0xf]
        %v343 = vld [vmem:[%s339 + $0xc] sm:$0xf]
        %v344 = vld [vmem:[%s339 + $0x10] sm:$0xf]
        %v345 = vld [vmem:[%s339 + $0x14] sm:$0xf]
        %v378 = vunpack.c.l.b16 %v301
        %v379 = vunpack.c.l.b16 %v302
        %v380 = vunpack.c.l.b16 %v303
        %v381 = vunpack.c.l.b16 %v304
        %v382 = vunpack.c.l.b16 %v305
        %v383 = vunpack.c.l.b16 %v306
        %v384 = vunpack.c.l.b16 %v307
        %v385 = vunpack.c.l.b16 %v308
        %v386 = vunpack.c.l.b16 %v309
        %v387 = vunpack.c.l.b16 %v310
        %v388 = vunpack.c.l.b16 %v311
        %v389 = vunpack.c.l.b16 %v312
        %v390 = vunpack.c.l.b16 %v313
        %v391 = vunpack.c.l.b16 %v314
        %v392 = vunpack.c.l.b16 %v315
        %v393 = vunpack.c.l.b16 %v316
        %v394 = vunpack.c.l.b16 %v317
        %v395 = vunpack.c.l.b16 %v318
        %v396 = vunpack.c.l.b16 %v319
        %v397 = vunpack.c.l.b16 %v320
        %v398 = vunpack.c.l.b16 %v321
        %v399 = vunpack.c.l.b16 %v322
        %v400 = vunpack.c.l.b16 %v323
        %v401 = vunpack.c.l.b16 %v324
        %v402 = vunpack.c.l.b16 %v325
        %v403 = vunpack.c.l.b16 %v326
        %v404 = vunpack.c.l.b16 %v327
        %v405 = vunpack.c.l.b16 %v328
        %v406 = vunpack.c.l.b16 %v329
        %v407 = vunpack.c.l.b16 %v330
        %v408 = vunpack.c.l.b16 %v337
        %v409 = vunpack.c.l.b16 %v338
        %v410 = vpack.c.b16 %v379, %v378
        %v411 = vpack.c.b16 %v381, %v380
        %v412 = vpack.c.b16 %v383, %v382
        %v413 = vpack.c.b16 %v385, %v384
        %v414 = vpack.c.b16 %v387, %v386
        %v415 = vpack.c.b16 %v389, %v388
        %v416 = vpack.c.b16 %v391, %v390
        %v417 = vpack.c.b16 %v393, %v392
        %v418 = vpack.c.b16 %v395, %v394
        %v419 = vpack.c.b16 %v397, %v396
        %v420 = vpack.c.b16 %v399, %v398
        %v421 = vpack.c.b16 %v401, %v400
        %v422 = vpack.c.b16 %v403, %v402
        %v423 = vpack.c.b16 %v405, %v404
        %v424 = vpack.c.b16 %v407, %v406
        %v425 = vpack.c.b16 %v409, %v408
        %v432 = vunpack.c.l.b16 %v340
        %v433 = vunpack.c.l.b16 %v341
        %v434 = vunpack.c.l.b16 %v342
        %v435 = vunpack.c.l.b16 %v343
        %v436 = vunpack.c.l.b16 %v344
        %v437 = vunpack.c.l.b16 %v345
        %v438 = vpack.c.b16 %v433, %v432
        %v439 = vpack.c.b16 %v435, %v434
        %v440 = vpack.c.b16 %v437, %v436
        %vm444 = vcmask 392192
        %v446 = vsel %vm444, %v410, 0
        %v449 = vsel %vm444, %v411, 0
        %v452 = vsel %vm444, %v412, 0
        %v455 = vsel %vm444, %v413, 0
        %v458 = vsel %vm444, %v414, 0
        %v461 = vsel %vm444, %v415, 0
        %v464 = vsel %vm444, %v416, 0
        %v467 = vsel %vm444, %v417, 0
        %v470 = vsel %vm444, %v418, 0
        %v473 = vsel %vm444, %v419, 0
        %v476 = vsel %vm444, %v420, 0
        %v479 = vsel %vm444, %v421, 0
        %v482 = vsel %vm444, %v422, 0
        %v485 = vsel %vm444, %v423, 0
        %v488 = vsel %vm444, %v424, 0
        %v491 = vsel %vm444, %v425, 0
        %493 = vmatpush.bf16.msra.mxu0 0
        %494 = vmatpush.bf16.msra.mxu0 0
        %495 = vmatpush.bf16.msra.mxu0 0
        %496 = vmatpush.bf16.msra.mxu0 0
        %497 = vmatpush.bf16.msra.mxu0 0
        %498 = vmatpush.bf16.msra.mxu0 %v440
        %499 = vmatpush.bf16.msra.mxu0 %v439
        %500 = vmatpush.bf16.msra.mxu0 %v438
        %501 = vmatmul.bf16.gmra.mxu0 %v446
        %v502 = vpop.f32.mrf.mxu0
        %v503 = vadd.f32 0.0, %v502
        %v504 = vpop.f32.mrf.mxu0
        %v505 = vadd.f32 0.0, %v504
        %506 = vmatmul.bf16.gmra.mxu0 %v449
        %v507 = vpop.f32.mrf.mxu0
        %v508 = vadd.f32 0.0, %v507
        %v509 = vpop.f32.mrf.mxu0
        %v510 = vadd.f32 0.0, %v509
        %511 = vmatmul.bf16.gmra.mxu0 %v452
        %v512 = vpop.f32.mrf.mxu0
        %v513 = vadd.f32 0.0, %v512
        %v514 = vpop.f32.mrf.mxu0
        %v515 = vadd.f32 0.0, %v514
        %516 = vmatmul.bf16.gmra.mxu0 %v455
        %v517 = vpop.f32.mrf.mxu0
        %v518 = vadd.f32 0.0, %v517
        %v519 = vpop.f32.mrf.mxu0
        %v520 = vadd.f32 0.0, %v519
        %521 = vmatmul.bf16.gmra.mxu0 %v458
        %v522 = vpop.f32.mrf.mxu0
        %v523 = vadd.f32 0.0, %v522
        %v524 = vpop.f32.mrf.mxu0
        %v525 = vadd.f32 0.0, %v524
        %526 = vmatmul.bf16.gmra.mxu0 %v461
        %v527 = vpop.f32.mrf.mxu0
        %v528 = vadd.f32 0.0, %v527
        %v529 = vpop.f32.mrf.mxu0
        %v530 = vadd.f32 0.0, %v529
        %531 = vmatmul.bf16.gmra.mxu0 %v464
        %v532 = vpop.f32.mrf.mxu0
        %v533 = vadd.f32 0.0, %v532
        %v534 = vpop.f32.mrf.mxu0
        %v535 = vadd.f32 0.0, %v534
        %536 = vmatmul.bf16.gmra.mxu0 %v467
        %v537 = vpop.f32.mrf.mxu0
        %v538 = vadd.f32 0.0, %v537
        %v539 = vpop.f32.mrf.mxu0
        %v540 = vadd.f32 0.0, %v539
        %541 = vmatmul.bf16.gmra.mxu0 %v470
        %v542 = vpop.f32.mrf.mxu0
        %v543 = vadd.f32 0.0, %v542
        %v544 = vpop.f32.mrf.mxu0
        %v545 = vadd.f32 0.0, %v544
        %546 = vmatmul.bf16.gmra.mxu0 %v473
        %v547 = vpop.f32.mrf.mxu0
        %v548 = vadd.f32 0.0, %v547
        %v549 = vpop.f32.mrf.mxu0
        %v550 = vadd.f32 0.0, %v549
        %551 = vmatmul.bf16.gmra.mxu0 %v476
        %v552 = vpop.f32.mrf.mxu0
        %v553 = vadd.f32 0.0, %v552
        %v554 = vpop.f32.mrf.mxu0
        %v555 = vadd.f32 0.0, %v554
        %556 = vmatmul.bf16.gmra.mxu0 %v479
        %v557 = vpop.f32.mrf.mxu0
        %v558 = vadd.f32 0.0, %v557
        %v559 = vpop.f32.mrf.mxu0
        %v560 = vadd.f32 0.0, %v559
        %561 = vmatmul.bf16.gmra.mxu0 %v482
        %v562 = vpop.f32.mrf.mxu0
        %v563 = vadd.f32 0.0, %v562
        %v564 = vpop.f32.mrf.mxu0
        %v565 = vadd.f32 0.0, %v564
        %566 = vmatmul.bf16.gmra.mxu0 %v485
        %v567 = vpop.f32.mrf.mxu0
        %v568 = vadd.f32 0.0, %v567
        %v569 = vpop.f32.mrf.mxu0
        %v570 = vadd.f32 0.0, %v569
        %571 = vmatmul.bf16.gmra.mxu0 %v488
        %v572 = vpop.f32.mrf.mxu0
        %v573 = vadd.f32 0.0, %v572
        %v574 = vpop.f32.mrf.mxu0
        %v575 = vadd.f32 0.0, %v574
        %576 = vmatmul.bf16.gmra.mxu0 %v491
        %v577 = vpop.f32.mrf.mxu0
        %v578 = vadd.f32 0.0, %v577
        %v579 = vpop.f32.mrf.mxu0
        %v580 = vadd.f32 0.0, %v579
        %581 = vdwg.mxu0
        %v584 = vunpack.c.l.b16 %v299
        %v585 = vunpack.c.l.b16 %v300
        %v586 = vpack.c.b16 %v585, %v584
        %v593 = vunpack.c.l.b16 %v331
        %v594 = vunpack.c.l.b16 %v332
        %v595 = vunpack.c.l.b16 %v333
        %v596 = vunpack.c.l.b16 %v334
        %v597 = vunpack.c.l.b16 %v335
        %v598 = vunpack.c.l.b16 %v336
        %v599 = vpack.c.b16 %v594, %v593
        %v600 = vpack.c.b16 %v596, %v595
        %v601 = vpack.c.b16 %v598, %v597
        %v606 = vsel %vm444, %v586, 0
        %608 = vmatpush.bf16.msra.mxu0 0
        %609 = vmatpush.bf16.msra.mxu0 0
        %610 = vmatpush.bf16.msra.mxu0 0
        %611 = vmatpush.bf16.msra.mxu0 0
        %612 = vmatpush.bf16.msra.mxu0 0
        %613 = vmatpush.bf16.msra.mxu0 %v601
        %614 = vmatpush.bf16.msra.mxu0 %v600
        %615 = vmatpush.bf16.msra.mxu0 %v599
        %616 = vmatmul.bf16.gmra.mxu0 %v606
        %v617 = vpop.f32.mrf.mxu0
        %v618 = vadd.f32 %v503, %v617
        %v619 = vpop.f32.mrf.mxu0
        %v620 = vadd.f32 %v505, %v619
        %621 = vmatmul.bf16.gmra.mxu0 %v446
        %v622 = vpop.f32.mrf.mxu0
        %v623 = vadd.f32 %v508, %v622
        %v624 = vpop.f32.mrf.mxu0
        %v625 = vadd.f32 %v510, %v624
        %626 = vmatmul.bf16.gmra.mxu0 %v449
        %v627 = vpop.f32.mrf.mxu0
        %v628 = vadd.f32 %v513, %v627
        %v629 = vpop.f32.mrf.mxu0
        %v630 = vadd.f32 %v515, %v629
        %631 = vmatmul.bf16.gmra.mxu0 %v452
        %v632 = vpop.f32.mrf.mxu0
        %v633 = vadd.f32 %v518, %v632
        %v634 = vpop.f32.mrf.mxu0
        %v635 = vadd.f32 %v520, %v634
        %636 = vmatmul.bf16.gmra.mxu0 %v455
        %v637 = vpop.f32.mrf.mxu0
        %v638 = vadd.f32 %v523, %v637
        %v639 = vpop.f32.mrf.mxu0
        %v640 = vadd.f32 %v525, %v639
        %641 = vmatmul.bf16.gmra.mxu0 %v458
        %v642 = vpop.f32.mrf.mxu0
        %v643 = vadd.f32 %v528, %v642
        %v644 = vpop.f32.mrf.mxu0
        %v645 = vadd.f32 %v530, %v644
        %646 = vmatmul.bf16.gmra.mxu0 %v461
        %v647 = vpop.f32.mrf.mxu0
        %v648 = vadd.f32 %v533, %v647
        %v649 = vpop.f32.mrf.mxu0
        %v650 = vadd.f32 %v535, %v649
        %651 = vmatmul.bf16.gmra.mxu0 %v464
        %v652 = vpop.f32.mrf.mxu0
        %v653 = vadd.f32 %v538, %v652
        %v654 = vpop.f32.mrf.mxu0
        %v655 = vadd.f32 %v540, %v654
        %656 = vmatmul.bf16.gmra.mxu0 %v467
        %v657 = vpop.f32.mrf.mxu0
        %v658 = vadd.f32 %v543, %v657
        %v659 = vpop.f32.mrf.mxu0
        %v660 = vadd.f32 %v545, %v659
        %661 = vmatmul.bf16.gmra.mxu0 %v470
        %v662 = vpop.f32.mrf.mxu0
        %v663 = vadd.f32 %v548, %v662
        %v664 = vpop.f32.mrf.mxu0
        %v665 = vadd.f32 %v550, %v664
        %666 = vmatmul.bf16.gmra.mxu0 %v473
        %v667 = vpop.f32.mrf.mxu0
        %v668 = vadd.f32 %v553, %v667
        %v669 = vpop.f32.mrf.mxu0
        %v670 = vadd.f32 %v555, %v669
        %671 = vmatmul.bf16.gmra.mxu0 %v476
        %v672 = vpop.f32.mrf.mxu0
        %v673 = vadd.f32 %v558, %v672
        %v674 = vpop.f32.mrf.mxu0
        %v675 = vadd.f32 %v560, %v674
        %676 = vmatmul.bf16.gmra.mxu0 %v479
        %v677 = vpop.f32.mrf.mxu0
        %v678 = vadd.f32 %v563, %v677
        %v679 = vpop.f32.mrf.mxu0
        %v680 = vadd.f32 %v565, %v679
        %681 = vmatmul.bf16.gmra.mxu0 %v482
        %v682 = vpop.f32.mrf.mxu0
        %v683 = vadd.f32 %v568, %v682
        %v684 = vpop.f32.mrf.mxu0
        %v685 = vadd.f32 %v570, %v684
        %686 = vmatmul.bf16.gmra.mxu0 %v485
        %v687 = vpop.f32.mrf.mxu0
        %v688 = vadd.f32 %v573, %v687
        %v689 = vpop.f32.mrf.mxu0
        %v690 = vadd.f32 %v575, %v689
        %691 = vmatmul.bf16.gmra.mxu0 %v488
        %v692 = vpop.f32.mrf.mxu0
        %v693 = vadd.f32 %v578, %v692
        %v694 = vpop.f32.mrf.mxu0
        %v695 = vadd.f32 %v580, %v694
        %696 = vdwg.mxu0
        %v697 = vld [vmem:[%s276 + $0x10] sm:$0xf]
        %v698 = vld [vmem:[%s276 + $0x14] sm:$0xf]
        %v699 = vld [vmem:[%s276 + $0x18] sm:$0xf]
        %v700 = vld [vmem:[%s276 + $0x1c] sm:$0xf]
        %v701 = vld [vmem:[%s276 + $0x20] sm:$0xf]
        %v702 = vld [vmem:[%s276 + $0x24] sm:$0xf]
        %v703 = vld [vmem:[%s276 + $0x28] sm:$0xf]
        %v704 = vld [vmem:[%s276 + $0x2c] sm:$0xf]
        %v705 = vld [vmem:[%s276 + $0x30] sm:$0xf]
        %v706 = vld [vmem:[%s276 + $0x34] sm:$0xf]
        %v707 = vld [vmem:[%s276 + $0x38] sm:$0xf]
        %v708 = vld [vmem:[%s276 + $0x3c] sm:$0xf]
        %v709 = vld [vmem:[%s276 + $0x40] sm:$0xf]
        %v710 = vld [vmem:[%s276 + $0x44] sm:$0xf]
        %v711 = vld [vmem:[%s276 + $0x48] sm:$0xf]
        %v712 = vld [vmem:[%s276 + $0x4c] sm:$0xf]
        %v713 = vld [vmem:[%s276 + $0x50] sm:$0xf]
        %v714 = vld [vmem:[%s276 + $0x54] sm:$0xf]
        %v715 = vld [vmem:[%s276 + $0x58] sm:$0xf]
        %v716 = vld [vmem:[%s276 + $0x5c] sm:$0xf]
        %v717 = vld [vmem:[%s276 + $0x60] sm:$0xf]
        %v718 = vld [vmem:[%s276 + $0x64] sm:$0xf]
        %v719 = vld [vmem:[%s276 + $0x68] sm:$0xf]
        %v720 = vld [vmem:[%s276 + $0x6c] sm:$0xf]
        %v721 = vld [vmem:[%s276 + $0x70] sm:$0xf]
        %v722 = vld [vmem:[%s276 + $0x74] sm:$0xf]
        %v723 = vld [vmem:[%s276 + $0x78] sm:$0xf]
        %v724 = vld [vmem:[%s276 + $0x7c] sm:$0xf]
        %v725 = vld [vmem:[%s276 + $0x80] sm:$0xf]
        %v726 = vld [vmem:[%s276 + $0x84] sm:$0xf]
        %v727 = vld [vmem:[%s276 + $0x88] sm:$0xf]
        %v728 = vld [vmem:[%s276 + $0x8c] sm:$0xf]
        %s729 = scalar_lea.vmem %s1, 48
        %v730 = vld [vmem:[%s729] sm:$0xf]
        %v731 = vld [vmem:[%s729 + $0x4] sm:$0xf]
        %v732 = vld [vmem:[%s729 + $0x8] sm:$0xf]
        %v733 = vld [vmem:[%s729 + $0xc] sm:$0xf]
        %v734 = vld [vmem:[%s729 + $0x10] sm:$0xf]
        %v735 = vld [vmem:[%s729 + $0x14] sm:$0xf]
        %v768 = vunpack.c.l.b16 %v697
        %v769 = vunpack.c.l.b16 %v698
        %v770 = vunpack.c.l.b16 %v699
        %v771 = vunpack.c.l.b16 %v700
        %v772 = vunpack.c.l.b16 %v701
        %v773 = vunpack.c.l.b16 %v702
        %v774 = vunpack.c.l.b16 %v703
        %v775 = vunpack.c.l.b16 %v704
        %v776 = vunpack.c.l.b16 %v705
        %v777 = vunpack.c.l.b16 %v706
        %v778 = vunpack.c.l.b16 %v707
        %v779 = vunpack.c.l.b16 %v708
        %v780 = vunpack.c.l.b16 %v709
        %v781 = vunpack.c.l.b16 %v710
        %v782 = vunpack.c.l.b16 %v711
        %v783 = vunpack.c.l.b16 %v712
        %v784 = vunpack.c.l.b16 %v713
        %v785 = vunpack.c.l.b16 %v714
        %v786 = vunpack.c.l.b16 %v715
        %v787 = vunpack.c.l.b16 %v716
        %v788 = vunpack.c.l.b16 %v717
        %v789 = vunpack.c.l.b16 %v718
        %v790 = vunpack.c.l.b16 %v719
        %v791 = vunpack.c.l.b16 %v720
        %v792 = vunpack.c.l.b16 %v721
        %v793 = vunpack.c.l.b16 %v722
        %v794 = vunpack.c.l.b16 %v723
        %v795 = vunpack.c.l.b16 %v724
        %v796 = vunpack.c.l.b16 %v725
        %v797 = vunpack.c.l.b16 %v726
        %v798 = vunpack.c.l.b16 %v727
        %v799 = vunpack.c.l.b16 %v728
        %v800 = vpack.c.b16 %v769, %v768
        %v801 = vpack.c.b16 %v771, %v770
        %v802 = vpack.c.b16 %v773, %v772
        %v803 = vpack.c.b16 %v775, %v774
        %v804 = vpack.c.b16 %v777, %v776
        %v805 = vpack.c.b16 %v779, %v778
        %v806 = vpack.c.b16 %v781, %v780
        %v807 = vpack.c.b16 %v783, %v782
        %v808 = vpack.c.b16 %v785, %v784
        %v809 = vpack.c.b16 %v787, %v786
        %v810 = vpack.c.b16 %v789, %v788
        %v811 = vpack.c.b16 %v791, %v790
        %v812 = vpack.c.b16 %v793, %v792
        %v813 = vpack.c.b16 %v795, %v794
        %v814 = vpack.c.b16 %v797, %v796
        %v815 = vpack.c.b16 %v799, %v798
        %v822 = vunpack.c.l.b16 %v730
        %v823 = vunpack.c.l.b16 %v731
        %v824 = vunpack.c.l.b16 %v732
        %v825 = vunpack.c.l.b16 %v733
        %v826 = vunpack.c.l.b16 %v734
        %v827 = vunpack.c.l.b16 %v735
        %v828 = vpack.c.b16 %v823, %v822
        %v829 = vpack.c.b16 %v825, %v824
        %v830 = vpack.c.b16 %v827, %v826
        %v835 = vsel %vm444, %v800, 0
        %v838 = vsel %vm444, %v801, 0
        %v841 = vsel %vm444, %v802, 0
        %v844 = vsel %vm444, %v803, 0
        %v847 = vsel %vm444, %v804, 0
        %v850 = vsel %vm444, %v805, 0
        %v853 = vsel %vm444, %v806, 0
        %v856 = vsel %vm444, %v807, 0
        %v859 = vsel %vm444, %v808, 0
        %v862 = vsel %vm444, %v809, 0
        %v865 = vsel %vm444, %v810, 0
        %v868 = vsel %vm444, %v811, 0
        %v871 = vsel %vm444, %v812, 0
        %v874 = vsel %vm444, %v813, 0
        %v877 = vsel %vm444, %v814, 0
        %v880 = vsel %vm444, %v815, 0
        %882 = vmatpush.bf16.msra.mxu0 0
        %883 = vmatpush.bf16.msra.mxu0 0
        %884 = vmatpush.bf16.msra.mxu0 0
        %885 = vmatpush.bf16.msra.mxu0 0
        %886 = vmatpush.bf16.msra.mxu0 0
        %887 = vmatpush.bf16.msra.mxu0 %v830
        %888 = vmatpush.bf16.msra.mxu0 %v829
        %889 = vmatpush.bf16.msra.mxu0 %v828
        %890 = vmatmul.bf16.gmra.mxu0 %v835
        %v891 = vpop.f32.mrf.mxu0
        %v892 = vadd.f32 0.0, %v891
        %v893 = vpop.f32.mrf.mxu0
        %v894 = vadd.f32 0.0, %v893
        %895 = vmatmul.bf16.gmra.mxu0 %v838
        %v896 = vpop.f32.mrf.mxu0
        %v897 = vadd.f32 0.0, %v896
        %v898 = vpop.f32.mrf.mxu0
        %v899 = vadd.f32 0.0, %v898
        %900 = vmatmul.bf16.gmra.mxu0 %v841
        %v901 = vpop.f32.mrf.mxu0
        %v902 = vadd.f32 0.0, %v901
        %v903 = vpop.f32.mrf.mxu0
        %v904 = vadd.f32 0.0, %v903
        %905 = vmatmul.bf16.gmra.mxu0 %v844
        %v906 = vpop.f32.mrf.mxu0
        %v907 = vadd.f32 0.0, %v906
        %v908 = vpop.f32.mrf.mxu0
        %v909 = vadd.f32 0.0, %v908
        %910 = vmatmul.bf16.gmra.mxu0 %v847
        %v911 = vpop.f32.mrf.mxu0
        %v912 = vadd.f32 0.0, %v911
        %v913 = vpop.f32.mrf.mxu0
        %v914 = vadd.f32 0.0, %v913
        %915 = vmatmul.bf16.gmra.mxu0 %v850
        %v916 = vpop.f32.mrf.mxu0
        %v917 = vadd.f32 0.0, %v916
        %v918 = vpop.f32.mrf.mxu0
        %v919 = vadd.f32 0.0, %v918
        %920 = vmatmul.bf16.gmra.mxu0 %v853
        %v921 = vpop.f32.mrf.mxu0
        %v922 = vadd.f32 0.0, %v921
        %v923 = vpop.f32.mrf.mxu0
        %v924 = vadd.f32 0.0, %v923
        %925 = vmatmul.bf16.gmra.mxu0 %v856
        %v926 = vpop.f32.mrf.mxu0
        %v927 = vadd.f32 0.0, %v926
        %v928 = vpop.f32.mrf.mxu0
        %v929 = vadd.f32 0.0, %v928
        %930 = vmatmul.bf16.gmra.mxu0 %v859
        %v931 = vpop.f32.mrf.mxu0
        %v932 = vadd.f32 0.0, %v931
        %v933 = vpop.f32.mrf.mxu0
        %v934 = vadd.f32 0.0, %v933
        %935 = vmatmul.bf16.gmra.mxu0 %v862
        %v936 = vpop.f32.mrf.mxu0
        %v937 = vadd.f32 0.0, %v936
        %v938 = vpop.f32.mrf.mxu0
        %v939 = vadd.f32 0.0, %v938
        %940 = vmatmul.bf16.gmra.mxu0 %v865
        %v941 = vpop.f32.mrf.mxu0
        %v942 = vadd.f32 0.0, %v941
        %v943 = vpop.f32.mrf.mxu0
        %v944 = vadd.f32 0.0, %v943
        %945 = vmatmul.bf16.gmra.mxu0 %v868
        %v946 = vpop.f32.mrf.mxu0
        %v947 = vadd.f32 0.0, %v946
        %v948 = vpop.f32.mrf.mxu0
        %v949 = vadd.f32 0.0, %v948
        %950 = vmatmul.bf16.gmra.mxu0 %v871
        %v951 = vpop.f32.mrf.mxu0
        %v952 = vadd.f32 0.0, %v951
        %v953 = vpop.f32.mrf.mxu0
        %v954 = vadd.f32 0.0, %v953
        %955 = vmatmul.bf16.gmra.mxu0 %v874
        %v956 = vpop.f32.mrf.mxu0
        %v957 = vadd.f32 0.0, %v956
        %v958 = vpop.f32.mrf.mxu0
        %v959 = vadd.f32 0.0, %v958
        %960 = vmatmul.bf16.gmra.mxu0 %v877
        %v961 = vpop.f32.mrf.mxu0
        %v962 = vadd.f32 0.0, %v961
        %v963 = vpop.f32.mrf.mxu0
        %v964 = vadd.f32 0.0, %v963
        %965 = vmatmul.bf16.gmra.mxu0 %v880
        %v966 = vpop.f32.mrf.mxu0
        %v967 = vadd.f32 0.0, %v966
        %v968 = vpop.f32.mrf.mxu0
        %v969 = vadd.f32 0.0, %v968
        %970 = vdwg.mxu0
        %v971 = vadd.f32 %v618, %v892
        %v972 = vadd.f32 %v620, %v894
        %v973 = vadd.f32 %v623, %v897
        %v974 = vadd.f32 %v625, %v899
        %v975 = vadd.f32 %v628, %v902
        %v976 = vadd.f32 %v630, %v904
        %v977 = vadd.f32 %v633, %v907
        %v978 = vadd.f32 %v635, %v909
        %v979 = vadd.f32 %v638, %v912
        %v980 = vadd.f32 %v640, %v914
        %v981 = vadd.f32 %v643, %v917
        %v982 = vadd.f32 %v645, %v919
        %v983 = vadd.f32 %v648, %v922
        %v984 = vadd.f32 %v650, %v924
        %v985 = vadd.f32 %v653, %v927
        %v986 = vadd.f32 %v655, %v929
        %v987 = vadd.f32 %v658, %v932
        %v988 = vadd.f32 %v660, %v934
        %v989 = vadd.f32 %v663, %v937
        %v990 = vadd.f32 %v665, %v939
        %v991 = vadd.f32 %v668, %v942
        %v992 = vadd.f32 %v670, %v944
        %v993 = vadd.f32 %v673, %v947
        %v994 = vadd.f32 %v675, %v949
        %v995 = vadd.f32 %v678, %v952
        %v996 = vadd.f32 %v680, %v954
        %v997 = vadd.f32 %v683, %v957
        %v998 = vadd.f32 %v685, %v959
        %v999 = vadd.f32 %v688, %v962
        %v1000 = vadd.f32 %v690, %v964
        %v1001 = vadd.f32 %v693, %v967
        %v1002 = vadd.f32 %v695, %v969
        %v1003 = vld [vmem:[%s276 + $0x18] sm:$0xf]
        %v1004 = vld [vmem:[%s276 + $0x1c] sm:$0xf]
        %v1005 = vld [vmem:[%s276 + $0x20] sm:$0xf]
        %v1006 = vld [vmem:[%s276 + $0x24] sm:$0xf]
        %v1007 = vld [vmem:[%s276 + $0x28] sm:$0xf]
        %v1008 = vld [vmem:[%s276 + $0x2c] sm:$0xf]
        %v1009 = vld [vmem:[%s276 + $0x30] sm:$0xf]
        %v1010 = vld [vmem:[%s276 + $0x34] sm:$0xf]
        %v1011 = vld [vmem:[%s276 + $0x38] sm:$0xf]
        %v1012 = vld [vmem:[%s276 + $0x3c] sm:$0xf]
        %v1013 = vld [vmem:[%s276 + $0x40] sm:$0xf]
        %v1014 = vld [vmem:[%s276 + $0x44] sm:$0xf]
        %v1015 = vld [vmem:[%s276 + $0x48] sm:$0xf]
        %v1016 = vld [vmem:[%s276 + $0x4c] sm:$0xf]
        %v1017 = vld [vmem:[%s276 + $0x50] sm:$0xf]
        %v1018 = vld [vmem:[%s276 + $0x54] sm:$0xf]
        %v1019 = vld [vmem:[%s276 + $0x58] sm:$0xf]
        %v1020 = vld [vmem:[%s276 + $0x5c] sm:$0xf]
        %v1021 = vld [vmem:[%s276 + $0x60] sm:$0xf]
        %v1022 = vld [vmem:[%s276 + $0x64] sm:$0xf]
        %v1023 = vld [vmem:[%s276 + $0x68] sm:$0xf]
        %v1024 = vld [vmem:[%s276 + $0x6c] sm:$0xf]
        %v1025 = vld [vmem:[%s276 + $0x70] sm:$0xf]
        %v1026 = vld [vmem:[%s276 + $0x74] sm:$0xf]
        %v1027 = vld [vmem:[%s276 + $0x78] sm:$0xf]
        %v1028 = vld [vmem:[%s276 + $0x7c] sm:$0xf]
        %v1029 = vld [vmem:[%s276 + $0x80] sm:$0xf]
        %v1030 = vld [vmem:[%s276 + $0x84] sm:$0xf]
        %v1031 = vld [vmem:[%s276 + $0x88] sm:$0xf]
        %v1032 = vld [vmem:[%s276 + $0x8c] sm:$0xf]
        %v1033 = vld [vmem:[%s276 + $0x90] sm:$0xf]
        %v1034 = vld [vmem:[%s276 + $0x94] sm:$0xf]
        %s1035 = scalar_lea.vmem %s1, 72
        %v1036 = vld [vmem:[%s1035] sm:$0xf]
        %v1037 = vld [vmem:[%s1035 + $0x4] sm:$0xf]
        %v1038 = vld [vmem:[%s1035 + $0x8] sm:$0xf]
        %v1039 = vld [vmem:[%s1035 + $0xc] sm:$0xf]
        %v1040 = vld [vmem:[%s1035 + $0x10] sm:$0xf]
        %v1041 = vld [vmem:[%s1035 + $0x14] sm:$0xf]
        %v1074 = vunpack.c.l.b16 %v1003
        %v1075 = vunpack.c.l.b16 %v1004
        %v1076 = vunpack.c.l.b16 %v1005
        %v1077 = vunpack.c.l.b16 %v1006
        %v1078 = vunpack.c.l.b16 %v1007
        %v1079 = vunpack.c.l.b16 %v1008
        %v1080 = vunpack.c.l.b16 %v1009
        %v1081 = vunpack.c.l.b16 %v1010
        %v1082 = vunpack.c.l.b16 %v1011
        %v1083 = vunpack.c.l.b16 %v1012
        %v1084 = vunpack.c.l.b16 %v1013
        %v1085 = vunpack.c.l.b16 %v1014
        %v1086 = vunpack.c.l.b16 %v1015
        %v1087 = vunpack.c.l.b16 %v1016
        %v1088 = vunpack.c.l.b16 %v1017
        %v1089 = vunpack.c.l.b16 %v1018
        %v1090 = vunpack.c.l.b16 %v1019
        %v1091 = vunpack.c.l.b16 %v1020
        %v1092 = vunpack.c.l.b16 %v1021
        %v1093 = vunpack.c.l.b16 %v1022
        %v1094 = vunpack.c.l.b16 %v1023
        %v1095 = vunpack.c.l.b16 %v1024
        %v1096 = vunpack.c.l.b16 %v1025
        %v1097 = vunpack.c.l.b16 %v1026
        %v1098 = vunpack.c.l.b16 %v1027
        %v1099 = vunpack.c.l.b16 %v1028
        %v1100 = vunpack.c.l.b16 %v1029
        %v1101 = vunpack.c.l.b16 %v1030
        %v1102 = vunpack.c.l.b16 %v1031
        %v1103 = vunpack.c.l.b16 %v1032
        %v1104 = vunpack.c.l.b16 %v1033
        %v1105 = vunpack.c.l.b16 %v1034
        %v1106 = vpack.c.b16 %v1075, %v1074
        %v1107 = vpack.c.b16 %v1077, %v1076
        %v1108 = vpack.c.b16 %v1079, %v1078
        %v1109 = vpack.c.b16 %v1081, %v1080
        %v1110 = vpack.c.b16 %v1083, %v1082
        %v1111 = vpack.c.b16 %v1085, %v1084
        %v1112 = vpack.c.b16 %v1087, %v1086
        %v1113 = vpack.c.b16 %v1089, %v1088
        %v1114 = vpack.c.b16 %v1091, %v1090
        %v1115 = vpack.c.b16 %v1093, %v1092
        %v1116 = vpack.c.b16 %v1095, %v1094
        %v1117 = vpack.c.b16 %v1097, %v1096
        %v1118 = vpack.c.b16 %v1099, %v1098
        %v1119 = vpack.c.b16 %v1101, %v1100
        %v1120 = vpack.c.b16 %v1103, %v1102
        %v1121 = vpack.c.b16 %v1105, %v1104
        %v1128 = vunpack.c.l.b16 %v1036
        %v1129 = vunpack.c.l.b16 %v1037
        %v1130 = vunpack.c.l.b16 %v1038
        %v1131 = vunpack.c.l.b16 %v1039
        %v1132 = vunpack.c.l.b16 %v1040
        %v1133 = vunpack.c.l.b16 %v1041
        %v1134 = vpack.c.b16 %v1129, %v1128
        %v1135 = vpack.c.b16 %v1131, %v1130
        %v1136 = vpack.c.b16 %v1133, %v1132
        %v1141 = vsel %vm444, %v1106, 0
        %v1144 = vsel %vm444, %v1107, 0
        %v1147 = vsel %vm444, %v1108, 0
        %v1150 = vsel %vm444, %v1109, 0
        %v1153 = vsel %vm444, %v1110, 0
        %v1156 = vsel %vm444, %v1111, 0
        %v1159 = vsel %vm444, %v1112, 0
        %v1162 = vsel %vm444, %v1113, 0
        %v1165 = vsel %vm444, %v1114, 0
        %v1168 = vsel %vm444, %v1115, 0
        %v1171 = vsel %vm444, %v1116, 0
        %v1174 = vsel %vm444, %v1117, 0
        %v1177 = vsel %vm444, %v1118, 0
        %v1180 = vsel %vm444, %v1119, 0
        %v1183 = vsel %vm444, %v1120, 0
        %v1186 = vsel %vm444, %v1121, 0
        %1188 = vmatpush.bf16.msra.mxu0 0
        %1189 = vmatpush.bf16.msra.mxu0 0
        %1190 = vmatpush.bf16.msra.mxu0 0
        %1191 = vmatpush.bf16.msra.mxu0 0
        %1192 = vmatpush.bf16.msra.mxu0 0
        %1193 = vmatpush.bf16.msra.mxu0 %v1136
        %1194 = vmatpush.bf16.msra.mxu0 %v1135
        %1195 = vmatpush.bf16.msra.mxu0 %v1134
        %1196 = vmatmul.bf16.gmra.mxu0 %v1141
        %v1197 = vpop.f32.mrf.mxu0
        %v1198 = vadd.f32 0.0, %v1197
        %v1199 = vpop.f32.mrf.mxu0
        %v1200 = vadd.f32 0.0, %v1199
        %1201 = vmatmul.bf16.gmra.mxu0 %v1144
        %v1202 = vpop.f32.mrf.mxu0
        %v1203 = vadd.f32 0.0, %v1202
        %v1204 = vpop.f32.mrf.mxu0
        %v1205 = vadd.f32 0.0, %v1204
        %1206 = vmatmul.bf16.gmra.mxu0 %v1147
        %v1207 = vpop.f32.mrf.mxu0
        %v1208 = vadd.f32 0.0, %v1207
        %v1209 = vpop.f32.mrf.mxu0
        %v1210 = vadd.f32 0.0, %v1209
        %1211 = vmatmul.bf16.gmra.mxu0 %v1150
        %v1212 = vpop.f32.mrf.mxu0
        %v1213 = vadd.f32 0.0, %v1212
        %v1214 = vpop.f32.mrf.mxu0
        %v1215 = vadd.f32 0.0, %v1214
        %1216 = vmatmul.bf16.gmra.mxu0 %v1153
        %v1217 = vpop.f32.mrf.mxu0
        %v1218 = vadd.f32 0.0, %v1217
        %v1219 = vpop.f32.mrf.mxu0
        %v1220 = vadd.f32 0.0, %v1219
        %1221 = vmatmul.bf16.gmra.mxu0 %v1156
        %v1222 = vpop.f32.mrf.mxu0
        %v1223 = vadd.f32 0.0, %v1222
        %v1224 = vpop.f32.mrf.mxu0
        %v1225 = vadd.f32 0.0, %v1224
        %1226 = vmatmul.bf16.gmra.mxu0 %v1159
        %v1227 = vpop.f32.mrf.mxu0
        %v1228 = vadd.f32 0.0, %v1227
        %v1229 = vpop.f32.mrf.mxu0
        %v1230 = vadd.f32 0.0, %v1229
        %1231 = vmatmul.bf16.gmra.mxu0 %v1162
        %v1232 = vpop.f32.mrf.mxu0
        %v1233 = vadd.f32 0.0, %v1232
        %v1234 = vpop.f32.mrf.mxu0
        %v1235 = vadd.f32 0.0, %v1234
        %1236 = vmatmul.bf16.gmra.mxu0 %v1165
        %v1237 = vpop.f32.mrf.mxu0
        %v1238 = vadd.f32 0.0, %v1237
        %v1239 = vpop.f32.mrf.mxu0
        %v1240 = vadd.f32 0.0, %v1239
        %1241 = vmatmul.bf16.gmra.mxu0 %v1168
        %v1242 = vpop.f32.mrf.mxu0
        %v1243 = vadd.f32 0.0, %v1242
        %v1244 = vpop.f32.mrf.mxu0
        %v1245 = vadd.f32 0.0, %v1244
        %1246 = vmatmul.bf16.gmra.mxu0 %v1171
        %v1247 = vpop.f32.mrf.mxu0
        %v1248 = vadd.f32 0.0, %v1247
        %v1249 = vpop.f32.mrf.mxu0
        %v1250 = vadd.f32 0.0, %v1249
        %1251 = vmatmul.bf16.gmra.mxu0 %v1174
        %v1252 = vpop.f32.mrf.mxu0
        %v1253 = vadd.f32 0.0, %v1252
        %v1254 = vpop.f32.mrf.mxu0
        %v1255 = vadd.f32 0.0, %v1254
        %1256 = vmatmul.bf16.gmra.mxu0 %v1177
        %v1257 = vpop.f32.mrf.mxu0
        %v1258 = vadd.f32 0.0, %v1257
        %v1259 = vpop.f32.mrf.mxu0
        %v1260 = vadd.f32 0.0, %v1259
        %1261 = vmatmul.bf16.gmra.mxu0 %v1180
        %v1262 = vpop.f32.mrf.mxu0
        %v1263 = vadd.f32 0.0, %v1262
        %v1264 = vpop.f32.mrf.mxu0
        %v1265 = vadd.f32 0.0, %v1264
        %1266 = vmatmul.bf16.gmra.mxu0 %v1183
        %v1267 = vpop.f32.mrf.mxu0
        %v1268 = vadd.f32 0.0, %v1267
        %v1269 = vpop.f32.mrf.mxu0
        %v1270 = vadd.f32 0.0, %v1269
        %1271 = vmatmul.bf16.gmra.mxu0 %v1186
        %v1272 = vpop.f32.mrf.mxu0
        %v1273 = vadd.f32 0.0, %v1272
        %v1274 = vpop.f32.mrf.mxu0
        %v1275 = vadd.f32 0.0, %v1274
        %1276 = vdwg.mxu0
        %v1277 = vadd.f32 %v971, %v1198
        %v1278 = vadd.f32 %v972, %v1200
        %v1279 = vadd.f32 %v973, %v1203
        %v1280 = vadd.f32 %v974, %v1205
        %v1281 = vadd.f32 %v975, %v1208
        %v1282 = vadd.f32 %v976, %v1210
        %v1283 = vadd.f32 %v977, %v1213
        %v1284 = vadd.f32 %v978, %v1215
        %v1285 = vadd.f32 %v979, %v1218
        %v1286 = vadd.f32 %v980, %v1220
        %v1287 = vadd.f32 %v981, %v1223
        %v1288 = vadd.f32 %v982, %v1225
        %v1289 = vadd.f32 %v983, %v1228
        %v1290 = vadd.f32 %v984, %v1230
        %v1291 = vadd.f32 %v985, %v1233
        %v1292 = vadd.f32 %v986, %v1235
        %v1293 = vadd.f32 %v987, %v1238
        %v1294 = vadd.f32 %v988, %v1240
        %v1295 = vadd.f32 %v989, %v1243
        %v1296 = vadd.f32 %v990, %v1245
        %v1297 = vadd.f32 %v991, %v1248
        %v1298 = vadd.f32 %v992, %v1250
        %v1299 = vadd.f32 %v993, %v1253
        %v1300 = vadd.f32 %v994, %v1255
        %v1301 = vadd.f32 %v995, %v1258
        %v1302 = vadd.f32 %v996, %v1260
        %v1303 = vadd.f32 %v997, %v1263
        %v1304 = vadd.f32 %v998, %v1265
        %v1305 = vadd.f32 %v999, %v1268
        %v1306 = vadd.f32 %v1000, %v1270
        %v1307 = vadd.f32 %v1001, %v1273
        %v1308 = vadd.f32 %v1002, %v1275
        %v1309 = vld [vmem:[%s2] sm:$0x1]
        %v1311 = vperm.slane %v1309, 0
        %v1313 = vadd.f32 %v1277, %v1311
        %v1314 = vadd.f32 %v1278, %v1311
        %v1315 = vadd.f32 %v1279, %v1311
        %v1316 = vadd.f32 %v1280, %v1311
        %v1317 = vadd.f32 %v1281, %v1311
        %v1318 = vadd.f32 %v1282, %v1311
        %v1319 = vadd.f32 %v1283, %v1311
        %v1320 = vadd.f32 %v1284, %v1311
        %v1321 = vadd.f32 %v1285, %v1311
        %v1322 = vadd.f32 %v1286, %v1311
        %v1323 = vadd.f32 %v1287, %v1311
        %v1324 = vadd.f32 %v1288, %v1311
        %v1325 = vadd.f32 %v1289, %v1311
        %v1326 = vadd.f32 %v1290, %v1311
        %v1327 = vadd.f32 %v1291, %v1311
        %v1328 = vadd.f32 %v1292, %v1311
        %v1329 = vadd.f32 %v1293, %v1311
        %v1330 = vadd.f32 %v1294, %v1311
        %v1331 = vadd.f32 %v1295, %v1311
        %v1332 = vadd.f32 %v1296, %v1311
        %v1333 = vadd.f32 %v1297, %v1311
        %v1334 = vadd.f32 %v1298, %v1311
        %v1335 = vadd.f32 %v1299, %v1311
        %v1336 = vadd.f32 %v1300, %v1311
        %v1337 = vadd.f32 %v1301, %v1311
        %v1338 = vadd.f32 %v1302, %v1311
        %v1339 = vadd.f32 %v1303, %v1311
        %v1340 = vadd.f32 %v1304, %v1311
        %v1341 = vadd.f32 %v1305, %v1311
        %v1342 = vadd.f32 %v1306, %v1311
        %v1343 = vadd.f32 %v1307, %v1311
        %v1344 = vadd.f32 %v1308, %v1311
        %v1345 = vmax.f32 %v1313, 0.0
        %v1346 = vmax.f32 %v1314, 0.0
        %v1347 = vmax.f32 %v1315, 0.0
        %v1348 = vmax.f32 %v1316, 0.0
        %v1349 = vmax.f32 %v1317, 0.0
        %v1350 = vmax.f32 %v1318, 0.0
        %v1351 = vmax.f32 %v1319, 0.0
        %v1352 = vmax.f32 %v1320, 0.0
        %v1353 = vmax.f32 %v1321, 0.0
        %v1354 = vmax.f32 %v1322, 0.0
        %v1355 = vmax.f32 %v1323, 0.0
        %v1356 = vmax.f32 %v1324, 0.0
        %v1357 = vmax.f32 %v1325, 0.0
        %v1358 = vmax.f32 %v1326, 0.0
        %v1359 = vmax.f32 %v1327, 0.0
        %v1360 = vmax.f32 %v1328, 0.0
        %v1361 = vmax.f32 %v1329, 0.0
        %v1362 = vmax.f32 %v1330, 0.0
        %v1363 = vmax.f32 %v1331, 0.0
        %v1364 = vmax.f32 %v1332, 0.0
        %v1365 = vmax.f32 %v1333, 0.0
        %v1366 = vmax.f32 %v1334, 0.0
        %v1367 = vmax.f32 %v1335, 0.0
        %v1368 = vmax.f32 %v1336, 0.0
        %v1369 = vmax.f32 %v1337, 0.0
        %v1370 = vmax.f32 %v1338, 0.0
        %v1371 = vmax.f32 %v1339, 0.0
        %v1372 = vmax.f32 %v1340, 0.0
        %v1373 = vmax.f32 %v1341, 0.0
        %v1374 = vmax.f32 %v1342, 0.0
        %v1375 = vmax.f32 %v1343, 0.0
        %v1376 = vmax.f32 %v1344, 0.0
        %vm1377 = vcmask 261120
        %1378 = vst.msk [vmem:[#allocation4] sm:$0xff] %vm1377, %v1345
        %1379 = vst.msk [vmem:[#allocation4 + $0x8] sm:$0xff] %vm1377, %v1346
        %1380 = vst.msk [vmem:[#allocation4 + $0x10] sm:$0xff] %vm1377, %v1347
        %1381 = vst.msk [vmem:[#allocation4 + $0x18] sm:$0xff] %vm1377, %v1348
        %1382 = vst.msk [vmem:[#allocation4 + $0x20] sm:$0xff] %vm1377, %v1349
        %1383 = vst.msk [vmem:[#allocation4 + $0x28] sm:$0xff] %vm1377, %v1350
        %1384 = vst.msk [vmem:[#allocation4 + $0x30] sm:$0xff] %vm1377, %v1351
        %1385 = vst.msk [vmem:[#allocation4 + $0x38] sm:$0xff] %vm1377, %v1352
        %1386 = vst.msk [vmem:[#allocation4 + $0x40] sm:$0xff] %vm1377, %v1353
        %1387 = vst.msk [vmem:[#allocation4 + $0x48] sm:$0xff] %vm1377, %v1354
        %1388 = vst.msk [vmem:[#allocation4 + $0x50] sm:$0xff] %vm1377, %v1355
        %1389 = vst.msk [vmem:[#allocation4 + $0x58] sm:$0xff] %vm1377, %v1356
        %1390 = vst.msk [vmem:[#allocation4 + $0x60] sm:$0xff] %vm1377, %v1357
        %1391 = vst.msk [vmem:[#allocation4 + $0x68] sm:$0xff] %vm1377, %v1358
        %1392 = vst.msk [vmem:[#allocation4 + $0x70] sm:$0xff] %vm1377, %v1359
        %1393 = vst.msk [vmem:[#allocation4 + $0x78] sm:$0xff] %vm1377, %v1360
        %1394 = vst.msk [vmem:[#allocation4 + $0x80] sm:$0xff] %vm1377, %v1361
        %1395 = vst.msk [vmem:[#allocation4 + $0x88] sm:$0xff] %vm1377, %v1362
        %1396 = vst.msk [vmem:[#allocation4 + $0x90] sm:$0xff] %vm1377, %v1363
        %1397 = vst.msk [vmem:[#allocation4 + $0x98] sm:$0xff] %vm1377, %v1364
        %1398 = vst.msk [vmem:[#allocation4 + $0xa0] sm:$0xff] %vm1377, %v1365
        %1399 = vst.msk [vmem:[#allocation4 + $0xa8] sm:$0xff] %vm1377, %v1366
        %1400 = vst.msk [vmem:[#allocation4 + $0xb0] sm:$0xff] %vm1377, %v1367
        %1401 = vst.msk [vmem:[#allocation4 + $0xb8] sm:$0xff] %vm1377, %v1368
        %1402 = vst.msk [vmem:[#allocation4 + $0xc0] sm:$0xff] %vm1377, %v1369
        %1403 = vst.msk [vmem:[#allocation4 + $0xc8] sm:$0xff] %vm1377, %v1370
        %1404 = vst.msk [vmem:[#allocation4 + $0xd0] sm:$0xff] %vm1377, %v1371
        %1405 = vst.msk [vmem:[#allocation4 + $0xd8] sm:$0xff] %vm1377, %v1372
        %1406 = vst.msk [vmem:[#allocation4 + $0xe0] sm:$0xff] %vm1377, %v1373
        %1407 = vst.msk [vmem:[#allocation4 + $0xe8] sm:$0xff] %vm1377, %v1374
        %1408 = vst.msk [vmem:[#allocation4 + $0xf0] sm:$0xff] %vm1377, %v1375
        %1409 = vst.msk [vmem:[#allocation4 + $0xf8] sm:$0xff] %vm1377, %v1376
        %v1410 = vld [vmem:[#allocation4] ss:$2 sm:$0xff]
        %s1411 = scalar_lea.vmem [#allocation4], 16
        %v1412 = vld [vmem:[%s1411] ss:$2 sm:$0xff]
        %s1413 = scalar_lea.vmem [#allocation4], 32
        %v1414 = vld [vmem:[%s1413] ss:$2 sm:$0xff]
        %s1415 = scalar_lea.vmem [#allocation4], 48
        %v1416 = vld [vmem:[%s1415] ss:$2 sm:$0xff]
        %s1417 = scalar_lea.vmem [#allocation4], 64
        %v1418 = vld [vmem:[%s1417] ss:$2 sm:$0xff]
        %s1419 = scalar_lea.vmem [#allocation4], 80
        %v1420 = vld [vmem:[%s1419] ss:$2 sm:$0xff]
        %s1421 = scalar_lea.vmem [#allocation4], 96
        %v1422 = vld [vmem:[%s1421] ss:$2 sm:$0xff]
        %s1423 = scalar_lea.vmem [#allocation4], 112
        %v1424 = vld [vmem:[%s1423] ss:$2 sm:$0xff]
        %s1425 = scalar_lea.vmem [#allocation4], 128
        %v1426 = vld [vmem:[%s1425] ss:$2 sm:$0xff]
        %s1427 = scalar_lea.vmem [#allocation4], 144
        %v1428 = vld [vmem:[%s1427] ss:$2 sm:$0xff]
        %s1429 = scalar_lea.vmem [#allocation4], 160
        %v1430 = vld [vmem:[%s1429] ss:$2 sm:$0xff]
        %s1431 = scalar_lea.vmem [#allocation4], 176
        %v1432 = vld [vmem:[%s1431] ss:$2 sm:$0xff]
        %s1433 = scalar_lea.vmem [#allocation4], 192
        %v1434 = vld [vmem:[%s1433] ss:$2 sm:$0xff]
        %s1435 = scalar_lea.vmem [#allocation4], 208
        %v1436 = vld [vmem:[%s1435] ss:$2 sm:$0xff]
        %s1437 = scalar_lea.vmem [#allocation4], 224
        %v1438 = vld [vmem:[%s1437] ss:$2 sm:$0xff]
        %s1439 = scalar_lea.vmem [#allocation4], 240
        %v1440 = vld [vmem:[%s1439] ss:$2 sm:$0xff]
        %s1441 = scalar_lea.vmem [#allocation4], 1
        %v1442 = vld [vmem:[%s1441] ss:$2 sm:$0xff]
        %s1443 = scalar_lea.vmem [#allocation4], 17
        %v1444 = vld [vmem:[%s1443] ss:$2 sm:$0xff]
        %s1445 = scalar_lea.vmem [#allocation4], 33
        %v1446 = vld [vmem:[%s1445] ss:$2 sm:$0xff]
        %s1447 = scalar_lea.vmem [#allocation4], 49
        %v1448 = vld [vmem:[%s1447] ss:$2 sm:$0xff]
        %s1449 = scalar_lea.vmem [#allocation4], 65
        %v1450 = vld [vmem:[%s1449] ss:$2 sm:$0xff]
        %s1451 = scalar_lea.vmem [#allocation4], 81
        %v1452 = vld [vmem:[%s1451] ss:$2 sm:$0xff]
        %s1453 = scalar_lea.vmem [#allocation4], 97
        %v1454 = vld [vmem:[%s1453] ss:$2 sm:$0xff]
        %s1455 = scalar_lea.vmem [#allocation4], 113
        %v1456 = vld [vmem:[%s1455] ss:$2 sm:$0xff]
        %s1457 = scalar_lea.vmem [#allocation4], 129
        %v1458 = vld [vmem:[%s1457] ss:$2 sm:$0xff]
        %s1459 = scalar_lea.vmem [#allocation4], 145
        %v1460 = vld [vmem:[%s1459] ss:$2 sm:$0xff]
        %s1461 = scalar_lea.vmem [#allocation4], 161
        %v1462 = vld [vmem:[%s1461] ss:$2 sm:$0xff]
        %s1463 = scalar_lea.vmem [#allocation4], 177
        %v1464 = vld [vmem:[%s1463] ss:$2 sm:$0xff]
        %s1465 = scalar_lea.vmem [#allocation4], 193
        %v1466 = vld [vmem:[%s1465] ss:$2 sm:$0xff]
        %s1467 = scalar_lea.vmem [#allocation4], 209
        %v1468 = vld [vmem:[%s1467] ss:$2 sm:$0xff]
        %s1469 = scalar_lea.vmem [#allocation4], 225
        %v1470 = vld [vmem:[%s1469] ss:$2 sm:$0xff]
        %s1471 = scalar_lea.vmem [#allocation4], 241
        %v1472 = vld [vmem:[%s1471] ss:$2 sm:$0xff]
        %v1473 = vmax.f32 %v1410, %v1442
        %v1474 = vmax.f32 %v1412, %v1444
        %v1475 = vmax.f32 %v1414, %v1446
        %v1476 = vmax.f32 %v1416, %v1448
        %v1477 = vmax.f32 %v1418, %v1450
        %v1478 = vmax.f32 %v1420, %v1452
        %v1479 = vmax.f32 %v1422, %v1454
        %v1480 = vmax.f32 %v1424, %v1456
        %v1481 = vmax.f32 %v1426, %v1458
        %v1482 = vmax.f32 %v1428, %v1460
        %v1483 = vmax.f32 %v1430, %v1462
        %v1484 = vmax.f32 %v1432, %v1464
        %v1485 = vmax.f32 %v1434, %v1466
        %v1486 = vmax.f32 %v1436, %v1468
        %v1487 = vmax.f32 %v1438, %v1470
        %v1488 = vmax.f32 %v1440, %v1472
        %1489 = vst.msk [vmem:[#allocation5] sm:$0xff] %vm1377, %v1473
        %1490 = vst.msk [vmem:[#allocation5 + $0x8] sm:$0xff] %vm1377, %v1474
        %1491 = vst.msk [vmem:[#allocation5 + $0x10] sm:$0xff] %vm1377, %v1475
        %1492 = vst.msk [vmem:[#allocation5 + $0x18] sm:$0xff] %vm1377, %v1476
        %1493 = vst.msk [vmem:[#allocation5 + $0x20] sm:$0xff] %vm1377, %v1477
        %1494 = vst.msk [vmem:[#allocation5 + $0x28] sm:$0xff] %vm1377, %v1478
        %1495 = vst.msk [vmem:[#allocation5 + $0x30] sm:$0xff] %vm1377, %v1479
        %1496 = vst.msk [vmem:[#allocation5 + $0x38] sm:$0xff] %vm1377, %v1480
        %1497 = vst.msk [vmem:[#allocation5 + $0x40] sm:$0xff] %vm1377, %v1481
        %1498 = vst.msk [vmem:[#allocation5 + $0x48] sm:$0xff] %vm1377, %v1482
        %1499 = vst.msk [vmem:[#allocation5 + $0x50] sm:$0xff] %vm1377, %v1483
        %1500 = vst.msk [vmem:[#allocation5 + $0x58] sm:$0xff] %vm1377, %v1484
        %1501 = vst.msk [vmem:[#allocation5 + $0x60] sm:$0xff] %vm1377, %v1485
        %1502 = vst.msk [vmem:[#allocation5 + $0x68] sm:$0xff] %vm1377, %v1486
        %1503 = vst.msk [vmem:[#allocation5 + $0x70] sm:$0xff] %vm1377, %v1487
        %1504 = vst.msk [vmem:[#allocation5 + $0x78] sm:$0xff] %vm1377, %v1488
        %v1505 = vld [vmem:[#allocation5] sm:$0xff]
        %v1506 = vld [vmem:[#allocation5 + $0x8] sm:$0xff]
        %v1507 = vmax.f32 %v1505, %v1506
        %v1508 = vpack.c.bf16 %v1507, %v1507
        %v1510 = vshrl.u32 %v1508, 16
        %v1512 = vrot.slane %v1510, 6
        %v1513 = vshll.u32 %v1508, 16
        %v1515 = vrot.slane %v1513, 7
        %v1516 = vor.u32 %v1512, %v1515
        %v1517 = vrot.slane %v1516, 4
        %vm1520 = vcmask 257025
        %vm1521 = vsmask.f32 7942
        %vm1522 = vmand %vm1520, %vm1521
        %v1523 = vld [vmem:[#allocation2 + $0x4] sm:$0xe]
        %v1524 = vsel %vm1522, %v1516, %v1523
        %1525 = vst [vmem:[#allocation2 + $0x4] sm:$0xe] %v1524
        %vm1526 = vcmask 254976
        %vm1527 = vsmask.f32 1280
        %vm1528 = vmand %vm1526, %vm1527
        %v1529 = vld [vmem:[#allocation2 + $0x8] sm:$0x3]
        %v1530 = vsel %vm1528, %v1517, %v1529
        %1531 = vst [vmem:[#allocation2 + $0x8] sm:$0x3] %v1530
        %v1532 = vld [vmem:[#allocation5 + $0x10] sm:$0xff]
        %v1533 = vld [vmem:[#allocation5 + $0x18] sm:$0xff]
        %v1534 = vmax.f32 %v1532, %v1533
        %v1535 = vpack.c.bf16 %v1534, %v1534
        %v1537 = vshrl.u32 %v1535, 16
        %v1539 = vrot.slane %v1537, 5
        %v1540 = vshll.u32 %v1535, 16
        %v1542 = vrot.slane %v1540, 6
        %v1543 = vor.u32 %v1539, %v1542
        %v1544 = vrot.slane %v1543, 4
        %vm1547 = vcmask 257026
        %vm1548 = vsmask.f32 7946
        %vm1549 = vmand %vm1547, %vm1548
        %v1550 = vld [vmem:[#allocation2 + $0x8] sm:$0xc]
        %v1551 = vsel %vm1549, %v1543, %v1550
        %1552 = vst [vmem:[#allocation2 + $0x8] sm:$0xc] %v1551
        %vm1553 = vcmask 256000
        %vm1554 = vsmask.f32 2304
        %vm1555 = vmand %vm1553, %vm1554
        %v1556 = vld [vmem:[#allocation2 + $0xc] sm:$0x7]
        %v1557 = vsel %vm1555, %v1544, %v1556
        %1558 = vst [vmem:[#allocation2 + $0xc] sm:$0x7] %v1557
        %v1559 = vld [vmem:[#allocation5 + $0x20] sm:$0xff]
        %v1560 = vld [vmem:[#allocation5 + $0x28] sm:$0xff]
        %v1561 = vmax.f32 %v1559, %v1560
        %v1562 = vpack.c.bf16 %v1561, %v1561
        %v1564 = vshll.u32 %v1562, 16
        %v1566 = vrot.slane %v1564, 5
        %v1567 = vshrl.u32 %v1562, 16
        %v1569 = vrot.slane %v1567, 4
        %v1570 = vor.u32 %v1569, %v1566
        %v1571 = vrot.slane %v1570, 4
        %vm1574 = vcmask 257027
        %vm1575 = vsmask.f32 7950
        %vm1576 = vmand %vm1574, %vm1575
        %v1577 = vld [vmem:[#allocation2 + $0xc] sm:$0x8]
        %v1578 = vsel %vm1576, %v1566, %v1577
        %1579 = vst [vmem:[#allocation2 + $0xc] sm:$0x8] %v1578
        %vm1580 = vcmask 257024
        %vm1581 = vsmask.f32 3328
        %vm1582 = vmand %vm1580, %vm1581
        %v1583 = vld [vmem:[#allocation2 + $0x10] sm:$0xf]
        %v1584 = vsel %vm1582, %v1571, %v1583
        %1585 = vst [vmem:[#allocation2 + $0x10] sm:$0xf] %v1584
        %v1586 = vld [vmem:[#allocation5 + $0x30] sm:$0xff]
        %v1587 = vld [vmem:[#allocation5 + $0x38] sm:$0xff]
        %v1588 = vmax.f32 %v1586, %v1587
        %v1589 = vpack.c.bf16 %v1588, %v1588
        %v1591 = vshrl.u32 %v1589, 16
        %v1593 = vrot.slane %v1591, 7
        %v1594 = vshll.u32 %v1589, 16
        %v1596 = vor.u32 %v1593, %v1594
        %v1597 = vrot.slane %v1593, 4
        %vm1600 = vsmask.f32 7938
        %vm1601 = vmand %vm1580, %vm1600
        %v1602 = vld [vmem:[#allocation2 + $0x14] sm:$0xf]
        %v1603 = vsel %vm1601, %v1596, %v1602
        %1604 = vst [vmem:[#allocation2 + $0x14] sm:$0xf] %v1603
        %vm1605 = vcmask 253952
        %vm1606 = vsmask.f32 256
        %vm1607 = vmand %vm1605, %vm1606
        %v1608 = vld [vmem:[#allocation2 + $0x18] sm:$0x1]
        %v1609 = vsel %vm1607, %v1597, %v1608
        %1610 = vst [vmem:[#allocation2 + $0x18] sm:$0x1] %v1609
        %v1611 = vld [vmem:[#allocation5 + $0x40] sm:$0xff]
        %v1612 = vld [vmem:[#allocation5 + $0x48] sm:$0xff]
        %v1613 = vmax.f32 %v1611, %v1612
        %v1614 = vpack.c.bf16 %v1613, %v1613
        %v1616 = vshrl.u32 %v1614, 16
        %v1618 = vrot.slane %v1616, 6
        %v1619 = vshll.u32 %v1614, 16
        %v1621 = vrot.slane %v1619, 7
        %v1622 = vor.u32 %v1618, %v1621
        %v1623 = vrot.slane %v1622, 4
        %v1626 = vld [vmem:[#allocation2 + $0x18] sm:$0xe]
        %v1627 = vsel %vm1522, %v1622, %v1626
        %1628 = vst [vmem:[#allocation2 + $0x18] sm:$0xe] %v1627
        %v1629 = vld [vmem:[#allocation2 + $0x1c] sm:$0x3]
        %v1630 = vsel %vm1528, %v1623, %v1629
        %1631 = vst [vmem:[#allocation2 + $0x1c] sm:$0x3] %v1630
        %v1632 = vld [vmem:[#allocation5 + $0x50] sm:$0xff]
        %v1633 = vld [vmem:[#allocation5 + $0x58] sm:$0xff]
        %v1634 = vmax.f32 %v1632, %v1633
        %v1635 = vpack.c.bf16 %v1634, %v1634
        %v1637 = vshrl.u32 %v1635, 16
        %v1639 = vrot.slane %v1637, 5
        %v1640 = vshll.u32 %v1635, 16
        %v1642 = vrot.slane %v1640, 6
        %v1643 = vor.u32 %v1639, %v1642
        %v1644 = vrot.slane %v1643, 4
        %v1647 = vld [vmem:[#allocation2 + $0x1c] sm:$0xc]
        %v1648 = vsel %vm1549, %v1643, %v1647
        %1649 = vst [vmem:[#allocation2 + $0x1c] sm:$0xc] %v1648
        %v1650 = vld [vmem:[#allocation2 + $0x20] sm:$0x7]
        %v1651 = vsel %vm1555, %v1644, %v1650
        %1652 = vst [vmem:[#allocation2 + $0x20] sm:$0x7] %v1651
        %v1653 = vld [vmem:[#allocation5 + $0x60] sm:$0xff]
        %v1654 = vld [vmem:[#allocation5 + $0x68] sm:$0xff]
        %v1655 = vmax.f32 %v1653, %v1654
        %v1656 = vpack.c.bf16 %v1655, %v1655
        %v1658 = vshll.u32 %v1656, 16
        %v1660 = vrot.slane %v1658, 5
        %v1661 = vshrl.u32 %v1656, 16
        %v1663 = vrot.slane %v1661, 4
        %v1664 = vor.u32 %v1663, %v1660
        %v1665 = vrot.slane %v1664, 4
        %v1668 = vld [vmem:[#allocation2 + $0x20] sm:$0x8]
        %v1669 = vsel %vm1576, %v1660, %v1668
        %1670 = vst [vmem:[#allocation2 + $0x20] sm:$0x8] %v1669
        %v1671 = vld [vmem:[#allocation2 + $0x24] sm:$0xf]
        %v1672 = vsel %vm1582, %v1665, %v1671
        %1673 = vst [vmem:[#allocation2 + $0x24] sm:$0xf] %v1672
        %v1674 = vld [vmem:[#allocation5 + $0x70] sm:$0xff]
        %v1675 = vld [vmem:[#allocation5 + $0x78] sm:$0xff]
        %v1676 = vmax.f32 %v1674, %v1675
        %v1677 = vpack.c.bf16 %v1676, %v1676
        %v1679 = vshrl.u32 %v1677, 16
        %v1681 = vrot.slane %v1679, 7
        %v1682 = vshll.u32 %v1677, 16
        %v1684 = vor.u32 %v1681, %v1682
        %v1685 = vrot.slane %v1681, 4
        %v1688 = vld [vmem:[#allocation2 + $0x28] sm:$0xf]
        %v1689 = vsel %vm1601, %v1684, %v1688
        %1690 = vst [vmem:[#allocation2 + $0x28] sm:$0xf] %v1689
        %v1691 = vld [vmem:[#allocation2 + $0x2c] sm:$0x1]
        %v1692 = vsel %vm1607, %v1685, %v1691
        %1693 = vst [vmem:[#allocation2 + $0x2c] sm:$0x1] %v1692
        %v1694 = vld [vmem:[#allocation2] sm:$0xf]
        %v1695 = vld [vmem:[#allocation2 + $0x4] sm:$0xf]
        %v1696 = vld [vmem:[#allocation2 + $0x8] sm:$0xf]
        %v1697 = vld [vmem:[#allocation2 + $0xc] sm:$0xf]
        %v1698 = vld [vmem:[#allocation2 + $0x10] sm:$0xf]
        %v1699 = vld [vmem:[#allocation2 + $0x14] sm:$0xf]
        %v1700 = vld [vmem:[#allocation2 + $0x18] sm:$0xf]
        %v1701 = vld [vmem:[#allocation2 + $0x1c] sm:$0xf]
        %v1702 = vld [vmem:[#allocation2 + $0x20] sm:$0xf]
        %v1703 = vld [vmem:[#allocation2 + $0x24] sm:$0xf]
        %v1704 = vld [vmem:[%s3] sm:$0xf]
        %v1705 = vld [vmem:[%s3 + $0x4] sm:$0xf]
        %v1706 = vld [vmem:[%s3 + $0x8] sm:$0xf]
        %v1707 = vld [vmem:[%s3 + $0xc] sm:$0xf]
        %v1708 = vld [vmem:[#allocation2 + $0x28] sm:$0x1]
        %s1709 = scalar_lea.vmem %s3, 16
        %v1710 = vld [vmem:[%s1709] sm:$0xf]
        %v1711 = vld [vmem:[%s1709 + $0x4] sm:$0xf]
        %v1712 = vld [vmem:[%s1709 + $0x8] sm:$0xf]
        %v1713 = vld [vmem:[%s1709 + $0xc] sm:$0xf]
        %v1725 = vunpack.c.l.b16 %v1694
        %v1726 = vunpack.c.l.b16 %v1695
        %v1727 = vunpack.c.l.b16 %v1696
        %v1728 = vunpack.c.l.b16 %v1697
        %v1729 = vunpack.c.l.b16 %v1698
        %v1730 = vunpack.c.l.b16 %v1699
        %v1731 = vunpack.c.l.b16 %v1700
        %v1732 = vunpack.c.l.b16 %v1701
        %v1733 = vunpack.c.l.b16 %v1702
        %v1734 = vunpack.c.l.b16 %v1703
        %v1735 = vunpack.c.l.b16 %v1708
        %v1736 = vpack.c.b16 %v1726, %v1725
        %v1737 = vpack.c.b16 %v1728, %v1727
        %v1738 = vpack.c.b16 %v1730, %v1729
        %v1739 = vpack.c.b16 %v1732, %v1731
        %v1740 = vpack.c.b16 %v1734, %v1733
        %v1741 = vpack.c.b16 %v1735, %v1735
        %vm1742 = vsmask.f32 7424
        %v1744 = vshrl.u32 %v1736, 16
        %v1746 = vshll.u32 %v1736, 16
        %v1748 = vrot.slane %v1746, 1
        %v1749 = vor.u32 %v1744, %v1748
        %v1751 = vshll.u32 %v1737, 16
        %v1753 = vrot.slane %v1751, 1
        %v1754 = vsel %vm1742, %v1749, %v1753
        %v1755 = vshrl.u32 %v1737, 16
        %v1757 = vor.u32 %v1755, %v1753
        %v1759 = vshll.u32 %v1738, 16
        %v1761 = vrot.slane %v1759, 1
        %v1762 = vsel %vm1742, %v1757, %v1761
        %v1763 = vshrl.u32 %v1738, 16
        %v1765 = vor.u32 %v1763, %v1761
        %v1767 = vshll.u32 %v1739, 16
        %v1769 = vrot.slane %v1767, 1
        %v1770 = vsel %vm1742, %v1765, %v1769
        %v1771 = vshrl.u32 %v1739, 16
        %v1773 = vor.u32 %v1771, %v1769
        %v1775 = vshll.u32 %v1740, 16
        %v1777 = vrot.slane %v1775, 1
        %v1778 = vsel %vm1742, %v1773, %v1777
        %v1779 = vshrl.u32 %v1740, 16
        %v1781 = vor.u32 %v1779, %v1777
        %v1783 = vshll.u32 %v1741, 16
        %v1785 = vrot.slane %v1783, 1
        %v1786 = vsel %vm1742, %v1781, %v1785
        %v1791 = vunpack.c.l.b16 %v1710
        %v1792 = vunpack.c.l.b16 %v1711
        %v1793 = vunpack.c.l.b16 %v1712
        %v1794 = vunpack.c.l.b16 %v1713
        %v1795 = vpack.c.b16 %v1792, %v1791
        %v1796 = vpack.c.b16 %v1794, %v1793
        %v1800 = vsel %vm1377, %v1754, 0
        %v1803 = vsel %vm1377, %v1762, 0
        %v1806 = vsel %vm1377, %v1770, 0
        %v1809 = vsel %vm1377, %v1778, 0
        %v1812 = vsel %vm1377, %v1786, 0
        %1814 = vmatpush.bf16.msra.mxu0 0
        %1815 = vmatpush.bf16.msra.mxu0 0
        %1816 = vmatpush.bf16.msra.mxu0 0
        %1817 = vmatpush.bf16.msra.mxu0 0
        %1818 = vmatpush.bf16.msra.mxu0 0
        %1819 = vmatpush.bf16.msra.mxu0 0
        %1820 = vmatpush.bf16.msra.mxu0 %v1796
        %1821 = vmatpush.bf16.msra.mxu0 %v1795
        %1822 = vmatmul.bf16.gmra.mxu0 %v1800
        %v1823 = vpop.f32.mrf.mxu0
        %v1824 = vadd.f32 0.0, %v1823
        %v1825 = vpop.f32.mrf.mxu0
        %v1826 = vadd.f32 0.0, %v1825
        %1827 = vmatmul.bf16.gmra.mxu0 %v1803
        %v1828 = vpop.f32.mrf.mxu0
        %v1829 = vadd.f32 0.0, %v1828
        %v1830 = vpop.f32.mrf.mxu0
        %v1831 = vadd.f32 0.0, %v1830
        %1832 = vmatmul.bf16.gmra.mxu0 %v1806
        %v1833 = vpop.f32.mrf.mxu0
        %v1834 = vadd.f32 0.0, %v1833
        %v1835 = vpop.f32.mrf.mxu0
        %v1836 = vadd.f32 0.0, %v1835
        %1837 = vmatmul.bf16.gmra.mxu0 %v1809
        %v1838 = vpop.f32.mrf.mxu0
        %v1839 = vadd.f32 0.0, %v1838
        %v1840 = vpop.f32.mrf.mxu0
        %v1841 = vadd.f32 0.0, %v1840
        %1842 = vmatmul.bf16.gmra.mxu0 %v1812
        %v1843 = vpop.f32.mrf.mxu0
        %v1844 = vadd.f32 0.0, %v1843
        %v1845 = vpop.f32.mrf.mxu0
        %v1846 = vadd.f32 0.0, %v1845
        %1847 = vdwg.mxu0
        %v1852 = vunpack.c.l.b16 %v1704
        %v1853 = vunpack.c.l.b16 %v1705
        %v1854 = vunpack.c.l.b16 %v1706
        %v1855 = vunpack.c.l.b16 %v1707
        %v1856 = vpack.c.b16 %v1853, %v1852
        %v1857 = vpack.c.b16 %v1855, %v1854
        %v1860 = vsel %vm1377, %v1736, 0
        %v1862 = vsel %vm1377, %v1737, 0
        %v1864 = vsel %vm1377, %v1738, 0
        %v1866 = vsel %vm1377, %v1739, 0
        %v1868 = vsel %vm1377, %v1740, 0
        %1870 = vmatpush.bf16.msra.mxu0 0
        %1871 = vmatpush.bf16.msra.mxu0 0
        %1872 = vmatpush.bf16.msra.mxu0 0
        %1873 = vmatpush.bf16.msra.mxu0 0
        %1874 = vmatpush.bf16.msra.mxu0 0
        %1875 = vmatpush.bf16.msra.mxu0 0
        %1876 = vmatpush.bf16.msra.mxu0 %v1857
        %1877 = vmatpush.bf16.msra.mxu0 %v1856
        %1878 = vmatmul.bf16.gmra.mxu0 %v1860
        %v1879 = vpop.f32.mrf.mxu0
        %v1880 = vadd.f32 %v1824, %v1879
        %v1881 = vpop.f32.mrf.mxu0
        %v1882 = vadd.f32 %v1826, %v1881
        %1883 = vmatmul.bf16.gmra.mxu0 %v1862
        %v1884 = vpop.f32.mrf.mxu0
        %v1885 = vadd.f32 %v1829, %v1884
        %v1886 = vpop.f32.mrf.mxu0
        %v1887 = vadd.f32 %v1831, %v1886
        %1888 = vmatmul.bf16.gmra.mxu0 %v1864
        %v1889 = vpop.f32.mrf.mxu0
        %v1890 = vadd.f32 %v1834, %v1889
        %v1891 = vpop.f32.mrf.mxu0
        %v1892 = vadd.f32 %v1836, %v1891
        %1893 = vmatmul.bf16.gmra.mxu0 %v1866
        %v1894 = vpop.f32.mrf.mxu0
        %v1895 = vadd.f32 %v1839, %v1894
        %v1896 = vpop.f32.mrf.mxu0
        %v1897 = vadd.f32 %v1841, %v1896
        %1898 = vmatmul.bf16.gmra.mxu0 %v1868
        %v1899 = vpop.f32.mrf.mxu0
        %v1900 = vadd.f32 %v1844, %v1899
        %v1901 = vpop.f32.mrf.mxu0
        %v1902 = vadd.f32 %v1846, %v1901
        %1903 = vdwg.mxu0
        %v1904 = vld [vmem:[#allocation2] sm:$0xe]
        %s1905 = scalar_lea.vmem %s3, 32
        %v1906 = vld [vmem:[%s1905] sm:$0xf]
        %v1907 = vld [vmem:[%s1905 + $0x4] sm:$0xf]
        %v1908 = vld [vmem:[%s1905 + $0x8] sm:$0xf]
        %v1909 = vld [vmem:[%s1905 + $0xc] sm:$0xf]
        %v1911 = vunpack.c.l.b16 %v1904
        %v1912 = vpack.c.b16 %v1726, %v1911
        %vm1913 = vcmask 1046528
        %v1914 = vrot.slane %v1912, 1
        %v1915 = vrot.slane %v1737, 1
        %v1916 = vsel %vm1913, %v1914, %v1915
        %v1917 = vrot.slane %v1738, 1
        %v1918 = vsel %vm1913, %v1915, %v1917
        %v1919 = vrot.slane %v1739, 1
        %v1920 = vsel %vm1913, %v1917, %v1919
        %v1921 = vrot.slane %v1740, 1
        %v1922 = vsel %vm1913, %v1919, %v1921
        %v1923 = vrot.slane %v1741, 1
        %v1924 = vsel %vm1913, %v1921, %v1923
        %v1929 = vunpack.c.l.b16 %v1906
        %v1930 = vunpack.c.l.b16 %v1907
        %v1931 = vunpack.c.l.b16 %v1908
        %v1932 = vunpack.c.l.b16 %v1909
        %v1933 = vpack.c.b16 %v1930, %v1929
        %v1934 = vpack.c.b16 %v1932, %v1931
        %v1938 = vsel %vm1377, %v1916, 0
        %v1941 = vsel %vm1377, %v1918, 0
        %v1944 = vsel %vm1377, %v1920, 0
        %v1947 = vsel %vm1377, %v1922, 0
        %v1950 = vsel %vm1377, %v1924, 0
        %1952 = vmatpush.bf16.msra.mxu0 0
        %1953 = vmatpush.bf16.msra.mxu0 0
        %1954 = vmatpush.bf16.msra.mxu0 0
        %1955 = vmatpush.bf16.msra.mxu0 0
        %1956 = vmatpush.bf16.msra.mxu0 0
        %1957 = vmatpush.bf16.msra.mxu0 0
        %1958 = vmatpush.bf16.msra.mxu0 %v1934
        %1959 = vmatpush.bf16.msra.mxu0 %v1933
        %1960 = vmatmul.bf16.gmra.mxu0 %v1938
        %v1961 = vpop.f32.mrf.mxu0
        %v1962 = vadd.f32 0.0, %v1961
        %v1963 = vpop.f32.mrf.mxu0
        %v1964 = vadd.f32 0.0, %v1963
        %1965 = vmatmul.bf16.gmra.mxu0 %v1941
        %v1966 = vpop.f32.mrf.mxu0
        %v1967 = vadd.f32 0.0, %v1966
        %v1968 = vpop.f32.mrf.mxu0
        %v1969 = vadd.f32 0.0, %v1968
        %1970 = vmatmul.bf16.gmra.mxu0 %v1944
        %v1971 = vpop.f32.mrf.mxu0
        %v1972 = vadd.f32 0.0, %v1971
        %v1973 = vpop.f32.mrf.mxu0
        %v1974 = vadd.f32 0.0, %v1973
        %1975 = vmatmul.bf16.gmra.mxu0 %v1947
        %v1976 = vpop.f32.mrf.mxu0
        %v1977 = vadd.f32 0.0, %v1976
        %v1978 = vpop.f32.mrf.mxu0
        %v1979 = vadd.f32 0.0, %v1978
        %1980 = vmatmul.bf16.gmra.mxu0 %v1950
        %v1981 = vpop.f32.mrf.mxu0
        %v1982 = vadd.f32 0.0, %v1981
        %v1983 = vpop.f32.mrf.mxu0
        %v1984 = vadd.f32 0.0, %v1983
        %1985 = vdwg.mxu0
        %v1986 = vadd.f32 %v1880, %v1962
        %v1987 = vadd.f32 %v1882, %v1964
        %v1988 = vadd.f32 %v1885, %v1967
        %v1989 = vadd.f32 %v1887, %v1969
        %v1990 = vadd.f32 %v1890, %v1972
        %v1991 = vadd.f32 %v1892, %v1974
        %v1992 = vadd.f32 %v1895, %v1977
        %v1993 = vadd.f32 %v1897, %v1979
        %v1994 = vadd.f32 %v1900, %v1982
        %v1995 = vadd.f32 %v1902, %v1984
        %v1996 = vld [vmem:[#allocation2 + $0x4] sm:$0xe]
        %v1997 = vld [vmem:[#allocation2 + $0x8] sm:$0xf]
        %v1998 = vld [vmem:[#allocation2 + $0xc] sm:$0xf]
        %v1999 = vld [vmem:[#allocation2 + $0x10] sm:$0xf]
        %v2000 = vld [vmem:[#allocation2 + $0x14] sm:$0xf]
        %v2001 = vld [vmem:[#allocation2 + $0x18] sm:$0xf]
        %v2002 = vld [vmem:[#allocation2 + $0x1c] sm:$0xf]
        %v2003 = vld [vmem:[#allocation2 + $0x20] sm:$0xf]
        %v2004 = vld [vmem:[#allocation2 + $0x24] sm:$0xf]
        %v2005 = vld [vmem:[#allocation2 + $0x28] sm:$0xf]
        %v2006 = vld [vmem:[#allocation2 + $0x2c] sm:$0x1]
        %s2007 = scalar_lea.vmem %s3, 48
        %v2008 = vld [vmem:[%s2007] sm:$0xf]
        %v2009 = vld [vmem:[%s2007 + $0x4] sm:$0xf]
        %v2010 = vld [vmem:[%s2007 + $0x8] sm:$0xf]
        %v2011 = vld [vmem:[%s2007 + $0xc] sm:$0xf]
        %v2023 = vunpack.c.l.b16 %v1996
        %v2024 = vunpack.c.l.b16 %v1997
        %v2025 = vunpack.c.l.b16 %v1998
        %v2026 = vunpack.c.l.b16 %v1999
        %v2027 = vunpack.c.l.b16 %v2000
        %v2028 = vunpack.c.l.b16 %v2001
        %v2029 = vunpack.c.l.b16 %v2002
        %v2030 = vunpack.c.l.b16 %v2003
        %v2031 = vunpack.c.l.b16 %v2004
        %v2032 = vunpack.c.l.b16 %v2005
        %v2033 = vunpack.c.l.b16 %v2006
        %v2034 = vpack.c.b16 %v2024, %v2023
        %v2035 = vpack.c.b16 %v2026, %v2025
        %v2036 = vpack.c.b16 %v2028, %v2027
        %v2037 = vpack.c.b16 %v2030, %v2029
        %v2038 = vpack.c.b16 %v2032, %v2031
        %v2039 = vpack.c.b16 %v2033, %v2033
        %v2040 = vrot.slane %v2034, 1
        %v2041 = vrot.slane %v2035, 1
        %v2042 = vsel %vm1913, %v2040, %v2041
        %v2043 = vrot.slane %v2036, 1
        %v2044 = vsel %vm1913, %v2041, %v2043
        %v2045 = vrot.slane %v2037, 1
        %v2046 = vsel %vm1913, %v2043, %v2045
        %v2047 = vrot.slane %v2038, 1
        %v2048 = vsel %vm1913, %v2045, %v2047
        %v2049 = vrot.slane %v2039, 1
        %v2050 = vsel %vm1913, %v2047, %v2049
        %v2055 = vunpack.c.l.b16 %v2008
        %v2056 = vunpack.c.l.b16 %v2009
        %v2057 = vunpack.c.l.b16 %v2010
        %v2058 = vunpack.c.l.b16 %v2011
        %v2059 = vpack.c.b16 %v2056, %v2055
        %v2060 = vpack.c.b16 %v2058, %v2057
        %v2064 = vsel %vm1377, %v2042, 0
        %v2067 = vsel %vm1377, %v2044, 0
        %v2070 = vsel %vm1377, %v2046, 0
        %v2073 = vsel %vm1377, %v2048, 0
        %v2076 = vsel %vm1377, %v2050, 0
        %2078 = vmatpush.bf16.msra.mxu0 0
        %2079 = vmatpush.bf16.msra.mxu0 0
        %2080 = vmatpush.bf16.msra.mxu0 0
        %2081 = vmatpush.bf16.msra.mxu0 0
        %2082 = vmatpush.bf16.msra.mxu0 0
        %2083 = vmatpush.bf16.msra.mxu0 0
        %2084 = vmatpush.bf16.msra.mxu0 %v2060
        %2085 = vmatpush.bf16.msra.mxu0 %v2059
        %2086 = vmatmul.bf16.gmra.mxu0 %v2064
        %v2087 = vpop.f32.mrf.mxu0
        %v2088 = vadd.f32 0.0, %v2087
        %v2089 = vpop.f32.mrf.mxu0
        %v2090 = vadd.f32 0.0, %v2089
        %2091 = vmatmul.bf16.gmra.mxu0 %v2067
        %v2092 = vpop.f32.mrf.mxu0
        %v2093 = vadd.f32 0.0, %v2092
        %v2094 = vpop.f32.mrf.mxu0
        %v2095 = vadd.f32 0.0, %v2094
        %2096 = vmatmul.bf16.gmra.mxu0 %v2070
        %v2097 = vpop.f32.mrf.mxu0
        %v2098 = vadd.f32 0.0, %v2097
        %v2099 = vpop.f32.mrf.mxu0
        %v2100 = vadd.f32 0.0, %v2099
        %2101 = vmatmul.bf16.gmra.mxu0 %v2073
        %v2102 = vpop.f32.mrf.mxu0
        %v2103 = vadd.f32 0.0, %v2102
        %v2104 = vpop.f32.mrf.mxu0
        %v2105 = vadd.f32 0.0, %v2104
        %2106 = vmatmul.bf16.gmra.mxu0 %v2076
        %v2107 = vpop.f32.mrf.mxu0
        %v2108 = vadd.f32 0.0, %v2107
        %v2109 = vpop.f32.mrf.mxu0
        %v2110 = vadd.f32 0.0, %v2109
        %2111 = vdwg.mxu0
        %v2112 = vadd.f32 %v1986, %v2088
        %v2113 = vadd.f32 %v1987, %v2090
        %v2114 = vadd.f32 %v1988, %v2093
        %v2115 = vadd.f32 %v1989, %v2095
        %v2116 = vadd.f32 %v1990, %v2098
        %v2117 = vadd.f32 %v1991, %v2100
        %v2118 = vadd.f32 %v1992, %v2103
        %v2119 = vadd.f32 %v1993, %v2105
        %v2120 = vadd.f32 %v1994, %v2108
        %v2121 = vadd.f32 %v1995, %v2110
        %v2122 = vld [vmem:[#allocation2 + $0x2c] sm:$0x3]
        %s2123 = scalar_lea.vmem %s3, 64
        %v2124 = vld [vmem:[%s2123] sm:$0xf]
        %v2125 = vld [vmem:[%s2123 + $0x4] sm:$0xf]
        %v2126 = vld [vmem:[%s2123 + $0x8] sm:$0xf]
        %v2127 = vld [vmem:[%s2123 + $0xc] sm:$0xf]
        %v2129 = vunpack.c.l.b16 %v2122
        %v2130 = vpack.c.b16 %v2129, %v2129
        %vm2131 = vsmask.f32 6400
        %v2133 = vshrl.u32 %v2034, 16
        %v2135 = vrot.slane %v2133, 1
        %v2136 = vshll.u32 %v2034, 16
        %v2138 = vrot.slane %v2136, 2
        %v2139 = vor.u32 %v2135, %v2138
        %v2141 = vshrl.u32 %v2035, 16
        %v2143 = vrot.slane %v2141, 1
        %v2144 = vshll.u32 %v2035, 16
        %v2146 = vrot.slane %v2144, 2
        %v2147 = vor.u32 %v2143, %v2146
        %v2148 = vsel %vm2131, %v2139, %v2147
        %v2150 = vshrl.u32 %v2036, 16
        %v2152 = vrot.slane %v2150, 1
        %v2153 = vshll.u32 %v2036, 16
        %v2155 = vrot.slane %v2153, 2
        %v2156 = vor.u32 %v2152, %v2155
        %v2157 = vsel %vm2131, %v2147, %v2156
        %v2159 = vshrl.u32 %v2037, 16
        %v2161 = vrot.slane %v2159, 1
        %v2162 = vshll.u32 %v2037, 16
        %v2164 = vrot.slane %v2162, 2
        %v2165 = vor.u32 %v2161, %v2164
        %v2166 = vsel %vm2131, %v2156, %v2165
        %v2168 = vshrl.u32 %v2038, 16
        %v2170 = vrot.slane %v2168, 1
        %v2171 = vshll.u32 %v2038, 16
        %v2173 = vrot.slane %v2171, 2
        %v2174 = vor.u32 %v2170, %v2173
        %v2175 = vsel %vm2131, %v2165, %v2174
        %v2177 = vshrl.u32 %v2130, 16
        %v2179 = vrot.slane %v2177, 1
        %v2180 = vshll.u32 %v2130, 16
        %v2182 = vrot.slane %v2180, 2
        %v2183 = vor.u32 %v2179, %v2182
        %v2184 = vsel %vm2131, %v2174, %v2183
        %v2189 = vunpack.c.l.b16 %v2124
        %v2190 = vunpack.c.l.b16 %v2125
        %v2191 = vunpack.c.l.b16 %v2126
        %v2192 = vunpack.c.l.b16 %v2127
        %v2193 = vpack.c.b16 %v2190, %v2189
        %v2194 = vpack.c.b16 %v2192, %v2191
        %v2198 = vsel %vm1377, %v2148, 0
        %v2201 = vsel %vm1377, %v2157, 0
        %v2204 = vsel %vm1377, %v2166, 0
        %v2207 = vsel %vm1377, %v2175, 0
        %v2210 = vsel %vm1377, %v2184, 0
        %2212 = vmatpush.bf16.msra.mxu0 0
        %2213 = vmatpush.bf16.msra.mxu0 0
        %2214 = vmatpush.bf16.msra.mxu0 0
        %2215 = vmatpush.bf16.msra.mxu0 0
        %2216 = vmatpush.bf16.msra.mxu0 0
        %2217 = vmatpush.bf16.msra.mxu0 0
        %2218 = vmatpush.bf16.msra.mxu0 %v2194
        %2219 = vmatpush.bf16.msra.mxu0 %v2193
        %2220 = vmatmul.bf16.gmra.mxu0 %v2198
        %v2221 = vpop.f32.mrf.mxu0
        %v2222 = vadd.f32 0.0, %v2221
        %v2223 = vpop.f32.mrf.mxu0
        %v2224 = vadd.f32 0.0, %v2223
        %2225 = vmatmul.bf16.gmra.mxu0 %v2201
        %v2226 = vpop.f32.mrf.mxu0
        %v2227 = vadd.f32 0.0, %v2226
        %v2228 = vpop.f32.mrf.mxu0
        %v2229 = vadd.f32 0.0, %v2228
        %2230 = vmatmul.bf16.gmra.mxu0 %v2204
        %v2231 = vpop.f32.mrf.mxu0
        %v2232 = vadd.f32 0.0, %v2231
        %v2233 = vpop.f32.mrf.mxu0
        %v2234 = vadd.f32 0.0, %v2233
        %2235 = vmatmul.bf16.gmra.mxu0 %v2207
        %v2236 = vpop.f32.mrf.mxu0
        %v2237 = vadd.f32 0.0, %v2236
        %v2238 = vpop.f32.mrf.mxu0
        %v2239 = vadd.f32 0.0, %v2238
        %2240 = vmatmul.bf16.gmra.mxu0 %v2210
        %v2241 = vpop.f32.mrf.mxu0
        %v2242 = vadd.f32 0.0, %v2241
        %v2243 = vpop.f32.mrf.mxu0
        %v2244 = vadd.f32 0.0, %v2243
        %2245 = vdwg.mxu0
        %v2246 = vadd.f32 %v2112, %v2222
        %v2247 = vadd.f32 %v2113, %v2224
        %v2248 = vadd.f32 %v2114, %v2227
        %v2249 = vadd.f32 %v2115, %v2229
        %v2250 = vadd.f32 %v2116, %v2232
        %v2251 = vadd.f32 %v2117, %v2234
        %v2252 = vadd.f32 %v2118, %v2237
        %v2253 = vadd.f32 %v2119, %v2239
        %v2254 = vadd.f32 %v2120, %v2242
        %v2255 = vadd.f32 %v2121, %v2244
        %v2256 = vld [vmem:[#allocation2 + $0x4] sm:$0xc]
        %s2257 = scalar_lea.vmem %s3, 80
        %v2258 = vld [vmem:[%s2257] sm:$0xf]
        %v2259 = vld [vmem:[%s2257 + $0x4] sm:$0xf]
        %v2260 = vld [vmem:[%s2257 + $0x8] sm:$0xf]
        %v2261 = vld [vmem:[%s2257 + $0xc] sm:$0xf]
        %v2263 = vunpack.c.l.b16 %v2256
        %v2264 = vpack.c.b16 %v2024, %v2263
        %vm2265 = vcmask 1045504
        %v2266 = vrot.slane %v2264, 2
        %v2267 = vrot.slane %v2035, 2
        %v2268 = vsel %vm2265, %v2266, %v2267
        %v2269 = vrot.slane %v2036, 2
        %v2270 = vsel %vm2265, %v2267, %v2269
        %v2271 = vrot.slane %v2037, 2
        %v2272 = vsel %vm2265, %v2269, %v2271
        %v2273 = vrot.slane %v2038, 2
        %v2274 = vsel %vm2265, %v2271, %v2273
        %v2275 = vrot.slane %v2130, 2
        %v2276 = vsel %vm2265, %v2273, %v2275
        %v2281 = vunpack.c.l.b16 %v2258
        %v2282 = vunpack.c.l.b16 %v2259
        %v2283 = vunpack.c.l.b16 %v2260
        %v2284 = vunpack.c.l.b16 %v2261
        %v2285 = vpack.c.b16 %v2282, %v2281
        %v2286 = vpack.c.b16 %v2284, %v2283
        %v2290 = vsel %vm1377, %v2268, 0
        %v2293 = vsel %vm1377, %v2270, 0
        %v2296 = vsel %vm1377, %v2272, 0
        %v2299 = vsel %vm1377, %v2274, 0
        %v2302 = vsel %vm1377, %v2276, 0
        %2304 = vmatpush.bf16.msra.mxu0 0
        %2305 = vmatpush.bf16.msra.mxu0 0
        %2306 = vmatpush.bf16.msra.mxu0 0
        %2307 = vmatpush.bf16.msra.mxu0 0
        %2308 = vmatpush.bf16.msra.mxu0 0
        %2309 = vmatpush.bf16.msra.mxu0 0
        %2310 = vmatpush.bf16.msra.mxu0 %v2286
        %2311 = vmatpush.bf16.msra.mxu0 %v2285
        %2312 = vmatmul.bf16.gmra.mxu0 %v2290
        %v2313 = vpop.f32.mrf.mxu0
        %v2314 = vadd.f32 0.0, %v2313
        %v2315 = vpop.f32.mrf.mxu0
        %v2316 = vadd.f32 0.0, %v2315
        %2317 = vmatmul.bf16.gmra.mxu0 %v2293
        %v2318 = vpop.f32.mrf.mxu0
        %v2319 = vadd.f32 0.0, %v2318
        %v2320 = vpop.f32.mrf.mxu0
        %v2321 = vadd.f32 0.0, %v2320
        %2322 = vmatmul.bf16.gmra.mxu0 %v2296
        %v2323 = vpop.f32.mrf.mxu0
        %v2324 = vadd.f32 0.0, %v2323
        %v2325 = vpop.f32.mrf.mxu0
        %v2326 = vadd.f32 0.0, %v2325
        %2327 = vmatmul.bf16.gmra.mxu0 %v2299
        %v2328 = vpop.f32.mrf.mxu0
        %v2329 = vadd.f32 0.0, %v2328
        %v2330 = vpop.f32.mrf.mxu0
        %v2331 = vadd.f32 0.0, %v2330
        %2332 = vmatmul.bf16.gmra.mxu0 %v2302
        %v2333 = vpop.f32.mrf.mxu0
        %v2334 = vadd.f32 0.0, %v2333
        %v2335 = vpop.f32.mrf.mxu0
        %v2336 = vadd.f32 0.0, %v2335
        %2337 = vdwg.mxu0
        %v2338 = vadd.f32 %v2246, %v2314
        %v2339 = vadd.f32 %v2247, %v2316
        %v2340 = vadd.f32 %v2248, %v2319
        %v2341 = vadd.f32 %v2249, %v2321
        %v2342 = vadd.f32 %v2250, %v2324
        %v2343 = vadd.f32 %v2251, %v2326
        %v2344 = vadd.f32 %v2252, %v2329
        %v2345 = vadd.f32 %v2253, %v2331
        %v2346 = vadd.f32 %v2254, %v2334
        %v2347 = vadd.f32 %v2255, %v2336
        %v2348 = vld [vmem:[#allocation2 + $0x8] sm:$0xc]
        %v2349 = vld [vmem:[#allocation2 + $0xc] sm:$0xf]
        %v2350 = vld [vmem:[#allocation2 + $0x10] sm:$0xf]
        %v2351 = vld [vmem:[#allocation2 + $0x14] sm:$0xf]
        %v2352 = vld [vmem:[#allocation2 + $0x18] sm:$0xf]
        %v2353 = vld [vmem:[#allocation2 + $0x1c] sm:$0xf]
        %v2354 = vld [vmem:[#allocation2 + $0x20] sm:$0xf]
        %v2355 = vld [vmem:[#allocation2 + $0x24] sm:$0xf]
        %v2356 = vld [vmem:[#allocation2 + $0x28] sm:$0xf]
        %v2357 = vld [vmem:[#allocation2 + $0x2c] sm:$0xf]
        %v2358 = vld [vmem:[#allocation2 + $0x30] sm:$0x3]
        %s2359 = scalar_lea.vmem %s3, 96
        %v2360 = vld [vmem:[%s2359] sm:$0xf]
        %v2361 = vld [vmem:[%s2359 + $0x4] sm:$0xf]
        %v2362 = vld [vmem:[%s2359 + $0x8] sm:$0xf]
        %v2363 = vld [vmem:[%s2359 + $0xc] sm:$0xf]
        %v2375 = vunpack.c.l.b16 %v2348
        %v2376 = vunpack.c.l.b16 %v2349
        %v2377 = vunpack.c.l.b16 %v2350
        %v2378 = vunpack.c.l.b16 %v2351
        %v2379 = vunpack.c.l.b16 %v2352
        %v2380 = vunpack.c.l.b16 %v2353
        %v2381 = vunpack.c.l.b16 %v2354
        %v2382 = vunpack.c.l.b16 %v2355
        %v2383 = vunpack.c.l.b16 %v2356
        %v2384 = vunpack.c.l.b16 %v2357
        %v2385 = vunpack.c.l.b16 %v2358
        %v2386 = vpack.c.b16 %v2376, %v2375
        %v2387 = vpack.c.b16 %v2378, %v2377
        %v2388 = vpack.c.b16 %v2380, %v2379
        %v2389 = vpack.c.b16 %v2382, %v2381
        %v2390 = vpack.c.b16 %v2384, %v2383
        %v2391 = vpack.c.b16 %v2385, %v2385
        %v2392 = vrot.slane %v2386, 2
        %v2393 = vrot.slane %v2387, 2
        %v2394 = vsel %vm2265, %v2392, %v2393
        %v2395 = vrot.slane %v2388, 2
        %v2396 = vsel %vm2265, %v2393, %v2395
        %v2397 = vrot.slane %v2389, 2
        %v2398 = vsel %vm2265, %v2395, %v2397
        %v2399 = vrot.slane %v2390, 2
        %v2400 = vsel %vm2265, %v2397, %v2399
        %v2401 = vrot.slane %v2391, 2
        %v2402 = vsel %vm2265, %v2399, %v2401
        %v2407 = vunpack.c.l.b16 %v2360
        %v2408 = vunpack.c.l.b16 %v2361
        %v2409 = vunpack.c.l.b16 %v2362
        %v2410 = vunpack.c.l.b16 %v2363
        %v2411 = vpack.c.b16 %v2408, %v2407
        %v2412 = vpack.c.b16 %v2410, %v2409
        %v2416 = vsel %vm1377, %v2394, 0
        %v2419 = vsel %vm1377, %v2396, 0
        %v2422 = vsel %vm1377, %v2398, 0
        %v2425 = vsel %vm1377, %v2400, 0
        %v2428 = vsel %vm1377, %v2402, 0
        %2430 = vmatpush.bf16.msra.mxu0 0
        %2431 = vmatpush.bf16.msra.mxu0 0
        %2432 = vmatpush.bf16.msra.mxu0 0
        %2433 = vmatpush.bf16.msra.mxu0 0
        %2434 = vmatpush.bf16.msra.mxu0 0
        %2435 = vmatpush.bf16.msra.mxu0 0
        %2436 = vmatpush.bf16.msra.mxu0 %v2412
        %2437 = vmatpush.bf16.msra.mxu0 %v2411
        %2438 = vmatmul.bf16.gmra.mxu0 %v2416
        %v2439 = vpop.f32.mrf.mxu0
        %v2440 = vadd.f32 0.0, %v2439
        %v2441 = vpop.f32.mrf.mxu0
        %v2442 = vadd.f32 0.0, %v2441
        %2443 = vmatmul.bf16.gmra.mxu0 %v2419
        %v2444 = vpop.f32.mrf.mxu0
        %v2445 = vadd.f32 0.0, %v2444
        %v2446 = vpop.f32.mrf.mxu0
        %v2447 = vadd.f32 0.0, %v2446
        %2448 = vmatmul.bf16.gmra.mxu0 %v2422
        %v2449 = vpop.f32.mrf.mxu0
        %v2450 = vadd.f32 0.0, %v2449
        %v2451 = vpop.f32.mrf.mxu0
        %v2452 = vadd.f32 0.0, %v2451
        %2453 = vmatmul.bf16.gmra.mxu0 %v2425
        %v2454 = vpop.f32.mrf.mxu0
        %v2455 = vadd.f32 0.0, %v2454
        %v2456 = vpop.f32.mrf.mxu0
        %v2457 = vadd.f32 0.0, %v2456
        %2458 = vmatmul.bf16.gmra.mxu0 %v2428
        %v2459 = vpop.f32.mrf.mxu0
        %v2460 = vadd.f32 0.0, %v2459
        %v2461 = vpop.f32.mrf.mxu0
        %v2462 = vadd.f32 0.0, %v2461
        %2463 = vdwg.mxu0
        %v2464 = vadd.f32 %v2338, %v2440
        %v2465 = vadd.f32 %v2339, %v2442
        %v2466 = vadd.f32 %v2340, %v2445
        %v2467 = vadd.f32 %v2341, %v2447
        %v2468 = vadd.f32 %v2342, %v2450
        %v2469 = vadd.f32 %v2343, %v2452
        %v2470 = vadd.f32 %v2344, %v2455
        %v2471 = vadd.f32 %v2345, %v2457
        %v2472 = vadd.f32 %v2346, %v2460
        %v2473 = vadd.f32 %v2347, %v2462
        %v2474 = vld [vmem:[#allocation2 + $0x30] sm:$0x7]
        %s2475 = scalar_lea.vmem %s3, 112
        %v2476 = vld [vmem:[%s2475] sm:$0xf]
        %v2477 = vld [vmem:[%s2475 + $0x4] sm:$0xf]
        %v2478 = vld [vmem:[%s2475 + $0x8] sm:$0xf]
        %v2479 = vld [vmem:[%s2475 + $0xc] sm:$0xf]
        %v2481 = vunpack.c.l.b16 %v2474
        %v2482 = vpack.c.b16 %v2481, %v2481
        %vm2483 = vsmask.f32 5376
        %v2485 = vshrl.u32 %v2386, 16
        %v2487 = vrot.slane %v2485, 2
        %v2488 = vshll.u32 %v2386, 16
        %v2490 = vrot.slane %v2488, 3
        %v2491 = vor.u32 %v2487, %v2490
        %v2493 = vshrl.u32 %v2387, 16
        %v2495 = vrot.slane %v2493, 2
        %v2496 = vshll.u32 %v2387, 16
        %v2498 = vrot.slane %v2496, 3
        %v2499 = vor.u32 %v2495, %v2498
        %v2500 = vsel %vm2483, %v2491, %v2499
        %v2502 = vshrl.u32 %v2388, 16
        %v2504 = vrot.slane %v2502, 2
        %v2505 = vshll.u32 %v2388, 16
        %v2507 = vrot.slane %v2505, 3
        %v2508 = vor.u32 %v2504, %v2507
        %v2509 = vsel %vm2483, %v2499, %v2508
        %v2511 = vshrl.u32 %v2389, 16
        %v2513 = vrot.slane %v2511, 2
        %v2514 = vshll.u32 %v2389, 16
        %v2516 = vrot.slane %v2514, 3
        %v2517 = vor.u32 %v2513, %v2516
        %v2518 = vsel %vm2483, %v2508, %v2517
        %v2520 = vshrl.u32 %v2390, 16
        %v2522 = vrot.slane %v2520, 2
        %v2523 = vshll.u32 %v2390, 16
        %v2525 = vrot.slane %v2523, 3
        %v2526 = vor.u32 %v2522, %v2525
        %v2527 = vsel %vm2483, %v2517, %v2526
        %v2529 = vshrl.u32 %v2482, 16
        %v2531 = vrot.slane %v2529, 2
        %v2532 = vshll.u32 %v2482, 16
        %v2534 = vrot.slane %v2532, 3
        %v2535 = vor.u32 %v2531, %v2534
        %v2536 = vsel %vm2483, %v2526, %v2535
        %v2541 = vunpack.c.l.b16 %v2476
        %v2542 = vunpack.c.l.b16 %v2477
        %v2543 = vunpack.c.l.b16 %v2478
        %v2544 = vunpack.c.l.b16 %v2479
        %v2545 = vpack.c.b16 %v2542, %v2541
        %v2546 = vpack.c.b16 %v2544, %v2543
        %v2550 = vsel %vm1377, %v2500, 0
        %v2553 = vsel %vm1377, %v2509, 0
        %v2556 = vsel %vm1377, %v2518, 0
        %v2559 = vsel %vm1377, %v2527, 0
        %v2562 = vsel %vm1377, %v2536, 0
        %2564 = vmatpush.bf16.msra.mxu0 0
        %2565 = vmatpush.bf16.msra.mxu0 0
        %2566 = vmatpush.bf16.msra.mxu0 0
        %2567 = vmatpush.bf16.msra.mxu0 0
        %2568 = vmatpush.bf16.msra.mxu0 0
        %2569 = vmatpush.bf16.msra.mxu0 0
        %2570 = vmatpush.bf16.msra.mxu0 %v2546
        %2571 = vmatpush.bf16.msra.mxu0 %v2545
        %2572 = vmatmul.bf16.gmra.mxu0 %v2550
        %v2573 = vpop.f32.mrf.mxu0
        %v2574 = vadd.f32 0.0, %v2573
        %v2575 = vpop.f32.mrf.mxu0
        %v2576 = vadd.f32 0.0, %v2575
        %2577 = vmatmul.bf16.gmra.mxu0 %v2553
        %v2578 = vpop.f32.mrf.mxu0
        %v2579 = vadd.f32 0.0, %v2578
        %v2580 = vpop.f32.mrf.mxu0
        %v2581 = vadd.f32 0.0, %v2580
        %2582 = vmatmul.bf16.gmra.mxu0 %v2556
        %v2583 = vpop.f32.mrf.mxu0
        %v2584 = vadd.f32 0.0, %v2583
        %v2585 = vpop.f32.mrf.mxu0
        %v2586 = vadd.f32 0.0, %v2585
        %2587 = vmatmul.bf16.gmra.mxu0 %v2559
        %v2588 = vpop.f32.mrf.mxu0
        %v2589 = vadd.f32 0.0, %v2588
        %v2590 = vpop.f32.mrf.mxu0
        %v2591 = vadd.f32 0.0, %v2590
        %2592 = vmatmul.bf16.gmra.mxu0 %v2562
        %v2593 = vpop.f32.mrf.mxu0
        %v2594 = vadd.f32 0.0, %v2593
        %v2595 = vpop.f32.mrf.mxu0
        %v2596 = vadd.f32 0.0, %v2595
        %2597 = vdwg.mxu0
        %v2598 = vadd.f32 %v2464, %v2574
        %v2599 = vadd.f32 %v2465, %v2576
        %v2600 = vadd.f32 %v2466, %v2579
        %v2601 = vadd.f32 %v2467, %v2581
        %v2602 = vadd.f32 %v2468, %v2584
        %v2603 = vadd.f32 %v2469, %v2586
        %v2604 = vadd.f32 %v2470, %v2589
        %v2605 = vadd.f32 %v2471, %v2591
        %v2606 = vadd.f32 %v2472, %v2594
        %v2607 = vadd.f32 %v2473, %v2596
        %v2608 = vld [vmem:[#allocation2 + $0x8] sm:$0x8]
        %s2609 = scalar_lea.vmem %s3, 128
        %v2610 = vld [vmem:[%s2609] sm:$0xf]
        %v2611 = vld [vmem:[%s2609 + $0x4] sm:$0xf]
        %v2612 = vld [vmem:[%s2609 + $0x8] sm:$0xf]
        %v2613 = vld [vmem:[%s2609 + $0xc] sm:$0xf]
        %v2615 = vunpack.c.l.b16 %v2608
        %v2616 = vpack.c.b16 %v2376, %v2615
        %vm2617 = vcmask 1044480
        %v2618 = vrot.slane %v2616, 3
        %v2619 = vrot.slane %v2387, 3
        %v2620 = vsel %vm2617, %v2618, %v2619
        %v2621 = vrot.slane %v2388, 3
        %v2622 = vsel %vm2617, %v2619, %v2621
        %v2623 = vrot.slane %v2389, 3
        %v2624 = vsel %vm2617, %v2621, %v2623
        %v2625 = vrot.slane %v2390, 3
        %v2626 = vsel %vm2617, %v2623, %v2625
        %v2627 = vrot.slane %v2482, 3
        %v2628 = vsel %vm2617, %v2625, %v2627
        %v2633 = vunpack.c.l.b16 %v2610
        %v2634 = vunpack.c.l.b16 %v2611
        %v2635 = vunpack.c.l.b16 %v2612
        %v2636 = vunpack.c.l.b16 %v2613
        %v2637 = vpack.c.b16 %v2634, %v2633
        %v2638 = vpack.c.b16 %v2636, %v2635
        %v2642 = vsel %vm1377, %v2620, 0
        %v2645 = vsel %vm1377, %v2622, 0
        %v2648 = vsel %vm1377, %v2624, 0
        %v2651 = vsel %vm1377, %v2626, 0
        %v2654 = vsel %vm1377, %v2628, 0
        %2656 = vmatpush.bf16.msra.mxu0 0
        %2657 = vmatpush.bf16.msra.mxu0 0
        %2658 = vmatpush.bf16.msra.mxu0 0
        %2659 = vmatpush.bf16.msra.mxu0 0
        %2660 = vmatpush.bf16.msra.mxu0 0
        %2661 = vmatpush.bf16.msra.mxu0 0
        %2662 = vmatpush.bf16.msra.mxu0 %v2638
        %2663 = vmatpush.bf16.msra.mxu0 %v2637
        %2664 = vmatmul.bf16.gmra.mxu0 %v2642
        %v2665 = vpop.f32.mrf.mxu0
        %v2666 = vadd.f32 0.0, %v2665
        %v2667 = vpop.f32.mrf.mxu0
        %v2668 = vadd.f32 0.0, %v2667
        %2669 = vmatmul.bf16.gmra.mxu0 %v2645
        %v2670 = vpop.f32.mrf.mxu0
        %v2671 = vadd.f32 0.0, %v2670
        %v2672 = vpop.f32.mrf.mxu0
        %v2673 = vadd.f32 0.0, %v2672
        %2674 = vmatmul.bf16.gmra.mxu0 %v2648
        %v2675 = vpop.f32.mrf.mxu0
        %v2676 = vadd.f32 0.0, %v2675
        %v2677 = vpop.f32.mrf.mxu0
        %v2678 = vadd.f32 0.0, %v2677
        %2679 = vmatmul.bf16.gmra.mxu0 %v2651
        %v2680 = vpop.f32.mrf.mxu0
        %v2681 = vadd.f32 0.0, %v2680
        %v2682 = vpop.f32.mrf.mxu0
        %v2683 = vadd.f32 0.0, %v2682
        %2684 = vmatmul.bf16.gmra.mxu0 %v2654
        %v2685 = vpop.f32.mrf.mxu0
        %v2686 = vadd.f32 0.0, %v2685
        %v2687 = vpop.f32.mrf.mxu0
        %v2688 = vadd.f32 0.0, %v2687
        %2689 = vdwg.mxu0
        %v2690 = vadd.f32 %v2598, %v2666
        %v2691 = vadd.f32 %v2599, %v2668
        %v2692 = vadd.f32 %v2600, %v2671
        %v2693 = vadd.f32 %v2601, %v2673
        %v2694 = vadd.f32 %v2602, %v2676
        %v2695 = vadd.f32 %v2603, %v2678
        %v2696 = vadd.f32 %v2604, %v2681
        %v2697 = vadd.f32 %v2605, %v2683
        %v2698 = vadd.f32 %v2606, %v2686
        %v2699 = vadd.f32 %v2607, %v2688
        %v2700 = vld [vmem:[%s4] sm:$0x1]
        %v2702 = vperm.slane %v2700, 0
        %v2704 = vadd.f32 %v2690, %v2702
        %v2705 = vadd.f32 %v2691, %v2702
        %v2706 = vadd.f32 %v2692, %v2702
        %v2707 = vadd.f32 %v2693, %v2702
        %v2708 = vadd.f32 %v2694, %v2702
        %v2709 = vadd.f32 %v2695, %v2702
        %v2710 = vadd.f32 %v2696, %v2702
        %v2711 = vadd.f32 %v2697, %v2702
        %v2712 = vadd.f32 %v2698, %v2702
        %v2713 = vadd.f32 %v2699, %v2702
        %v2714 = vmax.f32 %v2704, 0.0
        %v2715 = vmax.f32 %v2705, 0.0
        %v2716 = vmax.f32 %v2706, 0.0
        %v2717 = vmax.f32 %v2707, 0.0
        %v2718 = vmax.f32 %v2708, 0.0
        %v2719 = vmax.f32 %v2709, 0.0
        %v2720 = vmax.f32 %v2710, 0.0
        %v2721 = vmax.f32 %v2711, 0.0
        %v2722 = vmax.f32 %v2712, 0.0
        %v2723 = vmax.f32 %v2713, 0.0
        %2724 = vst.msk [vmem:[#allocation4] sm:$0xff] %vm1377, %v2714
        %2725 = vst.msk [vmem:[#allocation4 + $0x8] sm:$0xff] %vm1377, %v2715
        %2726 = vst.msk [vmem:[#allocation4 + $0x10] sm:$0xff] %vm1377, %v2716
        %2727 = vst.msk [vmem:[#allocation4 + $0x18] sm:$0xff] %vm1377, %v2717
        %2728 = vst.msk [vmem:[#allocation4 + $0x20] sm:$0xff] %vm1377, %v2718
        %2729 = vst.msk [vmem:[#allocation4 + $0x28] sm:$0xff] %vm1377, %v2719
        %2730 = vst.msk [vmem:[#allocation4 + $0x30] sm:$0xff] %vm1377, %v2720
        %2731 = vst.msk [vmem:[#allocation4 + $0x38] sm:$0xff] %vm1377, %v2721
        %2732 = vst.msk [vmem:[#allocation4 + $0x40] sm:$0xff] %vm1377, %v2722
        %2733 = vst.msk [vmem:[#allocation4 + $0x48] sm:$0xff] %vm1377, %v2723
        %v2734 = vld [vmem:[#allocation4] ss:$2 sm:$0xff]
        %v2735 = vld [vmem:[%s1411] ss:$2 sm:$0xff]
        %v2736 = vld [vmem:[%s1413] ss:$2 sm:$0xff]
        %v2737 = vld [vmem:[%s1415] ss:$2 sm:$0xff]
        %v2738 = vld [vmem:[%s1417] ss:$2 sm:$0xff]
        %v2739 = vld [vmem:[%s1441] ss:$2 sm:$0xff]
        %v2740 = vld [vmem:[%s1443] ss:$2 sm:$0xff]
        %v2741 = vld [vmem:[%s1445] ss:$2 sm:$0xff]
        %v2742 = vld [vmem:[%s1447] ss:$2 sm:$0xff]
        %v2743 = vld [vmem:[%s1449] ss:$2 sm:$0xff]
        %v2744 = vmax.f32 %v2734, %v2739
        %v2745 = vmax.f32 %v2735, %v2740
        %v2746 = vmax.f32 %v2736, %v2741
        %v2747 = vmax.f32 %v2737, %v2742
        %v2748 = vmax.f32 %v2738, %v2743
        %2749 = vst.msk [vmem:[#allocation5] sm:$0xff] %vm1377, %v2744
        %2750 = vst.msk [vmem:[#allocation5 + $0x8] sm:$0xff] %vm1377, %v2745
        %2751 = vst.msk [vmem:[#allocation5 + $0x10] sm:$0xff] %vm1377, %v2746
        %2752 = vst.msk [vmem:[#allocation5 + $0x18] sm:$0xff] %vm1377, %v2747
        %2753 = vst.msk [vmem:[#allocation5 + $0x20] sm:$0xff] %vm1377, %v2748
        %v2754 = vld [vmem:[#allocation5] sm:$0xf]
        %v2755 = vld [vmem:[#allocation5 + $0x5] sm:$0xf]
        %v2756 = vmax.f32 %v2754, %v2755
        %v2757 = vpack.c.bf16 %v2756, %v2756
        %v2759 = vshll.u32 %v2757, 16
        %v2761 = vrot.slane %v2759, 5
        %v2762 = vshrl.u32 %v2757, 16
        %v2764 = vrot.slane %v2762, 4
        %v2765 = vor.u32 %v2764, %v2761
        %v2766 = vrot.slane %v2765, 4
        %v2769 = vld [vmem:[#allocation3] sm:$0x8]
        %v2770 = vsel %vm1576, %v2761, %v2769
        %2771 = vst [vmem:[#allocation3] sm:$0x8] %v2770
        %v2772 = vld [vmem:[#allocation3 + $0x4] sm:$0x3]
        %v2773 = vsel %vm1528, %v2766, %v2772
        %2774 = vst [vmem:[#allocation3 + $0x4] sm:$0x3] %v2773
        %v2775 = vld [vmem:[#allocation5 + $0xa] sm:$0xf]
        %v2776 = vld [vmem:[#allocation5 + $0xf] sm:$0xf]
        %v2777 = vmax.f32 %v2775, %v2776
        %v2778 = vpack.c.bf16 %v2777, %v2777
        %v2780 = vshrl.u32 %v2778, 16
        %v2782 = vrot.slane %v2780, 5
        %v2783 = vshll.u32 %v2778, 16
        %v2785 = vrot.slane %v2783, 6
        %v2786 = vor.u32 %v2782, %v2785
        %v2787 = vrot.slane %v2782, 4
        %v2790 = vld [vmem:[#allocation3 + $0x4] sm:$0xc]
        %v2791 = vsel %vm1549, %v2786, %v2790
        %2792 = vst [vmem:[#allocation3 + $0x4] sm:$0xc] %v2791
        %v2793 = vld [vmem:[#allocation3 + $0x8] sm:$0x1]
        %v2794 = vsel %vm1607, %v2787, %v2793
        %2795 = vst [vmem:[#allocation3 + $0x8] sm:$0x1] %v2794
        %v2796 = vld [vmem:[#allocation5 + $0x14] sm:$0xf]
        %v2797 = vld [vmem:[#allocation5 + $0x19] sm:$0xf]
        %v2798 = vmax.f32 %v2796, %v2797
        %v2799 = vpack.c.bf16 %v2798, %v2798
        %v2801 = vshrl.u32 %v2799, 16
        %v2803 = vrot.slane %v2801, 6
        %v2804 = vshll.u32 %v2799, 16
        %v2806 = vrot.slane %v2804, 7
        %v2807 = vor.u32 %v2803, %v2806
        %vm2809 = vsmask.f32 3334
        %vm2810 = vmand %vm1520, %vm2809
        %v2811 = vld [vmem:[#allocation3 + $0x8] sm:$0xe]
        %v2812 = vsel %vm2810, %v2807, %v2811
        %2813 = vst [vmem:[#allocation3 + $0x8] sm:$0xe] %v2812
        %v2814 = vld [vmem:[#allocation5 + $0x1e] sm:$0xf]
        %v2815 = vld [vmem:[#allocation5 + $0x23] sm:$0xf]
        %v2816 = vmax.f32 %v2814, %v2815
        %v2817 = vpack.c.bf16 %v2816, %v2816
        %v2819 = vshrl.u32 %v2817, 16
        %v2821 = vrot.slane %v2819, 7
        %v2822 = vshll.u32 %v2817, 16
        %v2824 = vor.u32 %v2821, %v2822
        %vm2826 = vsmask.f32 2306
        %vm2827 = vmand %vm1553, %vm2826
        %v2828 = vld [vmem:[#allocation3 + $0xc] sm:$0x7]
        %v2829 = vsel %vm2827, %v2824, %v2828
        %2830 = vst [vmem:[#allocation3 + $0xc] sm:$0x7] %v2829
        %v2831 = vld [vmem:[#allocation3] sm:$0xf]
        %v2832 = vld [vmem:[#allocation3 + $0x4] sm:$0xf]
        %v2833 = vld [vmem:[#allocation3 + $0x8] sm:$0xf]
        %v2834 = vld [vmem:[%s5] sm:$0xf]
        %v2835 = vld [vmem:[%s5 + $0x4] sm:$0xf]
        %v2836 = vld [vmem:[%s5 + $0x8] sm:$0xf]
        %v2837 = vld [vmem:[%s5 + $0xc] sm:$0xf]
        %v2838 = vld [vmem:[#allocation3 + $0xc] sm:$0x1]
        %s2839 = scalar_lea.vmem %s5, 16
        %v2840 = vld [vmem:[%s2839] sm:$0xf]
        %v2841 = vld [vmem:[%s2839 + $0x4] sm:$0xf]
        %v2842 = vld [vmem:[%s2839 + $0x8] sm:$0xf]
        %v2843 = vld [vmem:[%s2839 + $0xc] sm:$0xf]
        %v2848 = vunpack.c.l.b16 %v2831
        %v2849 = vunpack.c.l.b16 %v2832
        %v2850 = vunpack.c.l.b16 %v2833
        %v2851 = vunpack.c.l.b16 %v2838
        %v2852 = vpack.c.b16 %v2849, %v2848
        %v2853 = vpack.c.b16 %v2851, %v2850
        %v2855 = vshrl.u32 %v2852, 16
        %v2857 = vshll.u32 %v2852, 16
        %v2859 = vrot.slane %v2857, 1
        %v2860 = vor.u32 %v2855, %v2859
        %v2862 = vshll.u32 %v2853, 16
        %v2864 = vrot.slane %v2862, 1
        %v2865 = vsel %vm1742, %v2860, %v2864
        %v2866 = vshrl.u32 %v2853, 16
        %v2868 = vor.u32 %v2866, %v2864
        %v2873 = vunpack.c.l.b16 %v2840
        %v2874 = vunpack.c.l.b16 %v2841
        %v2875 = vunpack.c.l.b16 %v2842
        %v2876 = vunpack.c.l.b16 %v2843
        %v2877 = vpack.c.b16 %v2874, %v2873
        %v2878 = vpack.c.b16 %v2876, %v2875
        %v2882 = vsel %vm1377, %v2865, 0
        %v2885 = vsel %vm1377, %v2868, 0
        %2887 = vmatpush.bf16.msra.mxu0 0
        %2888 = vmatpush.bf16.msra.mxu0 0
        %2889 = vmatpush.bf16.msra.mxu0 0
        %2890 = vmatpush.bf16.msra.mxu0 0
        %2891 = vmatpush.bf16.msra.mxu0 0
        %2892 = vmatpush.bf16.msra.mxu0 0
        %2893 = vmatpush.bf16.msra.mxu0 %v2878
        %2894 = vmatpush.bf16.msra.mxu0 %v2877
        %2895 = vmatmul.bf16.gmra.mxu0 %v2882
        %v2896 = vpop.f32.mrf.mxu0
        %v2897 = vadd.f32 0.0, %v2896
        %v2898 = vpop.f32.mrf.mxu0
        %v2899 = vadd.f32 0.0, %v2898
        %2900 = vmatmul.bf16.gmra.mxu0 %v2885
        %v2901 = vpop.f32.mrf.mxu0
        %v2902 = vadd.f32 0.0, %v2901
        %v2903 = vpop.f32.mrf.mxu0
        %2904 = vdwg.mxu0
        %v2905 = vpack.c.b16 %v2850, %v2850
        %v2910 = vunpack.c.l.b16 %v2834
        %v2911 = vunpack.c.l.b16 %v2835
        %v2912 = vunpack.c.l.b16 %v2836
        %v2913 = vunpack.c.l.b16 %v2837
        %v2914 = vpack.c.b16 %v2911, %v2910
        %v2915 = vpack.c.b16 %v2913, %v2912
        %v2918 = vsel %vm1377, %v2852, 0
        %v2921 = vsel %vm1377, %v2905, 0
        %2923 = vmatpush.bf16.msra.mxu0 0
        %2924 = vmatpush.bf16.msra.mxu0 0
        %2925 = vmatpush.bf16.msra.mxu0 0
        %2926 = vmatpush.bf16.msra.mxu0 0
        %2927 = vmatpush.bf16.msra.mxu0 0
        %2928 = vmatpush.bf16.msra.mxu0 0
        %2929 = vmatpush.bf16.msra.mxu0 %v2915
        %2930 = vmatpush.bf16.msra.mxu0 %v2914
        %2931 = vmatmul.bf16.gmra.mxu0 %v2918
        %v2932 = vpop.f32.mrf.mxu0
        %v2933 = vadd.f32 %v2897, %v2932
        %v2934 = vpop.f32.mrf.mxu0
        %v2935 = vadd.f32 %v2899, %v2934
        %2936 = vmatmul.bf16.gmra.mxu0 %v2921
        %v2937 = vpop.f32.mrf.mxu0
        %v2938 = vadd.f32 %v2902, %v2937
        %v2939 = vpop.f32.mrf.mxu0
        %2940 = vdwg.mxu0
        %v2941 = vld [vmem:[#allocation3] sm:$0xe]
        %s2942 = scalar_lea.vmem %s5, 32
        %v2943 = vld [vmem:[%s2942] sm:$0xf]
        %v2944 = vld [vmem:[%s2942 + $0x4] sm:$0xf]
        %v2945 = vld [vmem:[%s2942 + $0x8] sm:$0xf]
        %v2946 = vld [vmem:[%s2942 + $0xc] sm:$0xf]
        %v2948 = vunpack.c.l.b16 %v2941
        %v2949 = vpack.c.b16 %v2849, %v2948
        %v2950 = vrot.slane %v2949, 1
        %v2951 = vrot.slane %v2853, 1
        %v2952 = vsel %vm1913, %v2950, %v2951
        %v2957 = vunpack.c.l.b16 %v2943
        %v2958 = vunpack.c.l.b16 %v2944
        %v2959 = vunpack.c.l.b16 %v2945
        %v2960 = vunpack.c.l.b16 %v2946
        %v2961 = vpack.c.b16 %v2958, %v2957
        %v2962 = vpack.c.b16 %v2960, %v2959
        %v2966 = vsel %vm1377, %v2952, 0
        %v2969 = vsel %vm1377, %v2951, 0
        %2971 = vmatpush.bf16.msra.mxu0 0
        %2972 = vmatpush.bf16.msra.mxu0 0
        %2973 = vmatpush.bf16.msra.mxu0 0
        %2974 = vmatpush.bf16.msra.mxu0 0
        %2975 = vmatpush.bf16.msra.mxu0 0
        %2976 = vmatpush.bf16.msra.mxu0 0
        %2977 = vmatpush.bf16.msra.mxu0 %v2962
        %2978 = vmatpush.bf16.msra.mxu0 %v2961
        %2979 = vmatmul.bf16.gmra.mxu0 %v2966
        %v2980 = vpop.f32.mrf.mxu0
        %v2981 = vadd.f32 0.0, %v2980
        %v2982 = vpop.f32.mrf.mxu0
        %v2983 = vadd.f32 0.0, %v2982
        %2984 = vmatmul.bf16.gmra.mxu0 %v2969
        %v2985 = vpop.f32.mrf.mxu0
        %v2986 = vadd.f32 0.0, %v2985
        %v2987 = vpop.f32.mrf.mxu0
        %2988 = vdwg.mxu0
        %v2989 = vadd.f32 %v2933, %v2981
        %v2990 = vadd.f32 %v2935, %v2983
        %v2991 = vadd.f32 %v2938, %v2986
        %v2992 = vld [vmem:[#allocation3] sm:$0x8]
        %v2993 = vld [vmem:[#allocation3 + $0xc] sm:$0x7]
        %s2994 = scalar_lea.vmem %s5, 48
        %v2995 = vld [vmem:[%s2994] sm:$0xf]
        %v2996 = vld [vmem:[%s2994 + $0x4] sm:$0xf]
        %v2997 = vld [vmem:[%s2994 + $0x8] sm:$0xf]
        %v2998 = vld [vmem:[%s2994 + $0xc] sm:$0xf]
        %v3001 = vunpack.c.l.b16 %v2992
        %v3002 = vunpack.c.l.b16 %v2993
        %v3003 = vpack.c.b16 %v2849, %v3001
        %v3004 = vpack.c.b16 %v3002, %v2850
        %v3005 = vrot.slane %v3003, 3
        %v3006 = vrot.slane %v3004, 3
        %v3007 = vsel %vm2617, %v3005, %v3006
        %v3012 = vunpack.c.l.b16 %v2995
        %v3013 = vunpack.c.l.b16 %v2996
        %v3014 = vunpack.c.l.b16 %v2997
        %v3015 = vunpack.c.l.b16 %v2998
        %v3016 = vpack.c.b16 %v3013, %v3012
        %v3017 = vpack.c.b16 %v3015, %v3014
        %v3021 = vsel %vm1377, %v3007, 0
        %v3024 = vsel %vm1377, %v3006, 0
        %3026 = vmatpush.bf16.msra.mxu0 0
        %3027 = vmatpush.bf16.msra.mxu0 0
        %3028 = vmatpush.bf16.msra.mxu0 0
        %3029 = vmatpush.bf16.msra.mxu0 0
        %3030 = vmatpush.bf16.msra.mxu0 0
        %3031 = vmatpush.bf16.msra.mxu0 0
        %3032 = vmatpush.bf16.msra.mxu0 %v3017
        %3033 = vmatpush.bf16.msra.mxu0 %v3016
        %3034 = vmatmul.bf16.gmra.mxu0 %v3021
        %v3035 = vpop.f32.mrf.mxu0
        %v3036 = vadd.f32 0.0, %v3035
        %v3037 = vpop.f32.mrf.mxu0
        %v3038 = vadd.f32 0.0, %v3037
        %3039 = vmatmul.bf16.gmra.mxu0 %v3024
        %v3040 = vpop.f32.mrf.mxu0
        %v3041 = vadd.f32 0.0, %v3040
        %v3042 = vpop.f32.mrf.mxu0
        %3043 = vdwg.mxu0
        %v3044 = vadd.f32 %v2989, %v3036
        %v3045 = vadd.f32 %v2990, %v3038
        %v3046 = vadd.f32 %v2991, %v3041
        %v3047 = vld [vmem:[#allocation3 + $0xc] sm:$0xf]
        %s3048 = scalar_lea.vmem %s5, 64
        %v3049 = vld [vmem:[%s3048] sm:$0xf]
        %v3050 = vld [vmem:[%s3048 + $0x4] sm:$0xf]
        %v3051 = vld [vmem:[%s3048 + $0x8] sm:$0xf]
        %v3052 = vld [vmem:[%s3048 + $0xc] sm:$0xf]
        %v3054 = vunpack.c.l.b16 %v3047
        %v3055 = vpack.c.b16 %v3054, %v2850
        %vm3056 = vsmask.f32 4352
        %v3058 = vshrl.u32 %v3003, 16
        %v3060 = vrot.slane %v3058, 3
        %v3061 = vshll.u32 %v3003, 16
        %v3063 = vrot.slane %v3061, 4
        %v3064 = vor.u32 %v3060, %v3063
        %v3066 = vshrl.u32 %v3055, 16
        %v3068 = vrot.slane %v3066, 3
        %v3069 = vshll.u32 %v3055, 16
        %v3071 = vrot.slane %v3069, 4
        %v3072 = vor.u32 %v3068, %v3071
        %v3073 = vsel %vm3056, %v3064, %v3072
        %v3078 = vunpack.c.l.b16 %v3049
        %v3079 = vunpack.c.l.b16 %v3050
        %v3080 = vunpack.c.l.b16 %v3051
        %v3081 = vunpack.c.l.b16 %v3052
        %v3082 = vpack.c.b16 %v3079, %v3078
        %v3083 = vpack.c.b16 %v3081, %v3080
        %v3087 = vsel %vm1377, %v3073, 0
        %v3090 = vsel %vm1377, %v3072, 0
        %3092 = vmatpush.bf16.msra.mxu0 0
        %3093 = vmatpush.bf16.msra.mxu0 0
        %3094 = vmatpush.bf16.msra.mxu0 0
        %3095 = vmatpush.bf16.msra.mxu0 0
        %3096 = vmatpush.bf16.msra.mxu0 0
        %3097 = vmatpush.bf16.msra.mxu0 0
        %3098 = vmatpush.bf16.msra.mxu0 %v3083
        %3099 = vmatpush.bf16.msra.mxu0 %v3082
        %3100 = vmatmul.bf16.gmra.mxu0 %v3087
        %v3101 = vpop.f32.mrf.mxu0
        %v3102 = vadd.f32 0.0, %v3101
        %v3103 = vpop.f32.mrf.mxu0
        %v3104 = vadd.f32 0.0, %v3103
        %3105 = vmatmul.bf16.gmra.mxu0 %v3090
        %v3106 = vpop.f32.mrf.mxu0
        %v3107 = vadd.f32 0.0, %v3106
        %v3108 = vpop.f32.mrf.mxu0
        %3109 = vdwg.mxu0
        %v3110 = vadd.f32 %v3044, %v3102
        %v3111 = vadd.f32 %v3045, %v3104
        %v3112 = vadd.f32 %v3046, %v3107
        %s3113 = scalar_lea.vmem %s5, 80
        %v3114 = vld [vmem:[%s3113] sm:$0xf]
        %v3115 = vld [vmem:[%s3113 + $0x4] sm:$0xf]
        %v3116 = vld [vmem:[%s3113 + $0x8] sm:$0xf]
        %v3117 = vld [vmem:[%s3113 + $0xc] sm:$0xf]
        %v3118 = vpack.c.b16 %v2850, %v2849
        %v3119 = vpack.c.b16 %v3054, %v3054
        %v3124 = vunpack.c.l.b16 %v3114
        %v3125 = vunpack.c.l.b16 %v3115
        %v3126 = vunpack.c.l.b16 %v3116
        %v3127 = vunpack.c.l.b16 %v3117
        %v3128 = vpack.c.b16 %v3125, %v3124
        %v3129 = vpack.c.b16 %v3127, %v3126
        %v3133 = vsel %vm1377, %v3118, 0
        %v3136 = vsel %vm1377, %v3119, 0
        %3138 = vmatpush.bf16.msra.mxu0 0
        %3139 = vmatpush.bf16.msra.mxu0 0
        %3140 = vmatpush.bf16.msra.mxu0 0
        %3141 = vmatpush.bf16.msra.mxu0 0
        %3142 = vmatpush.bf16.msra.mxu0 0
        %3143 = vmatpush.bf16.msra.mxu0 0
        %3144 = vmatpush.bf16.msra.mxu0 %v3129
        %3145 = vmatpush.bf16.msra.mxu0 %v3128
        %3146 = vmatmul.bf16.gmra.mxu0 %v3133
        %v3147 = vpop.f32.mrf.mxu0
        %v3148 = vadd.f32 0.0, %v3147
        %v3149 = vpop.f32.mrf.mxu0
        %v3150 = vadd.f32 0.0, %v3149
        %3151 = vmatmul.bf16.gmra.mxu0 %v3136
        %v3152 = vpop.f32.mrf.mxu0
        %v3153 = vadd.f32 0.0, %v3152
        %v3154 = vpop.f32.mrf.mxu0
        %3155 = vdwg.mxu0
        %v3156 = vadd.f32 %v3110, %v3148
        %v3157 = vadd.f32 %v3111, %v3150
        %v3158 = vadd.f32 %v3112, %v3153
        %v3159 = vld [vmem:[#allocation3 + $0x4] sm:$0xc]
        %v3160 = vld [vmem:[#allocation3 + $0x8] sm:$0xf]
        %v3161 = vld [vmem:[#allocation3 + $0xc] sm:$0xf]
        %v3162 = vld [vmem:[#allocation3 + $0x10] sm:$0x3]
        %s3163 = scalar_lea.vmem %s5, 96
        %v3164 = vld [vmem:[%s3163] sm:$0xf]
        %v3165 = vld [vmem:[%s3163 + $0x4] sm:$0xf]
        %v3166 = vld [vmem:[%s3163 + $0x8] sm:$0xf]
        %v3167 = vld [vmem:[%s3163 + $0xc] sm:$0xf]
        %v3172 = vunpack.c.l.b16 %v3159
        %v3173 = vunpack.c.l.b16 %v3160
        %v3174 = vunpack.c.l.b16 %v3161
        %v3175 = vunpack.c.l.b16 %v3162
        %v3176 = vpack.c.b16 %v3173, %v3172
        %v3177 = vpack.c.b16 %v3175, %v3174
        %v3178 = vrot.slane %v3176, 2
        %v3179 = vrot.slane %v3177, 2
        %v3180 = vsel %vm2265, %v3178, %v3179
        %v3185 = vunpack.c.l.b16 %v3164
        %v3186 = vunpack.c.l.b16 %v3165
        %v3187 = vunpack.c.l.b16 %v3166
        %v3188 = vunpack.c.l.b16 %v3167
        %v3189 = vpack.c.b16 %v3186, %v3185
        %v3190 = vpack.c.b16 %v3188, %v3187
        %v3194 = vsel %vm1377, %v3180, 0
        %v3197 = vsel %vm1377, %v3179, 0
        %3199 = vmatpush.bf16.msra.mxu0 0
        %3200 = vmatpush.bf16.msra.mxu0 0
        %3201 = vmatpush.bf16.msra.mxu0 0
        %3202 = vmatpush.bf16.msra.mxu0 0
        %3203 = vmatpush.bf16.msra.mxu0 0
        %3204 = vmatpush.bf16.msra.mxu0 0
        %3205 = vmatpush.bf16.msra.mxu0 %v3190
        %3206 = vmatpush.bf16.msra.mxu0 %v3189
        %3207 = vmatmul.bf16.gmra.mxu0 %v3194
        %v3208 = vpop.f32.mrf.mxu0
        %v3209 = vadd.f32 0.0, %v3208
        %v3210 = vpop.f32.mrf.mxu0
        %v3211 = vadd.f32 0.0, %v3210
        %3212 = vmatmul.bf16.gmra.mxu0 %v3197
        %v3213 = vpop.f32.mrf.mxu0
        %v3214 = vadd.f32 0.0, %v3213
        %v3215 = vpop.f32.mrf.mxu0
        %3216 = vdwg.mxu0
        %v3217 = vadd.f32 %v3156, %v3209
        %v3218 = vadd.f32 %v3157, %v3211
        %v3219 = vadd.f32 %v3158, %v3214
        %v3220 = vld [vmem:[#allocation3 + $0x10] sm:$0x7]
        %s3221 = scalar_lea.vmem %s5, 112
        %v3222 = vld [vmem:[%s3221] sm:$0xf]
        %v3223 = vld [vmem:[%s3221 + $0x4] sm:$0xf]
        %v3224 = vld [vmem:[%s3221 + $0x8] sm:$0xf]
        %v3225 = vld [vmem:[%s3221 + $0xc] sm:$0xf]
        %v3227 = vunpack.c.l.b16 %v3220
        %v3228 = vpack.c.b16 %v3227, %v3174
        %v3230 = vshrl.u32 %v3176, 16
        %v3232 = vrot.slane %v3230, 2
        %v3233 = vshll.u32 %v3176, 16
        %v3235 = vrot.slane %v3233, 3
        %v3236 = vor.u32 %v3232, %v3235
        %v3238 = vshrl.u32 %v3228, 16
        %v3240 = vrot.slane %v3238, 2
        %v3241 = vshll.u32 %v3228, 16
        %v3243 = vrot.slane %v3241, 3
        %v3244 = vor.u32 %v3240, %v3243
        %v3245 = vsel %vm2483, %v3236, %v3244
        %v3250 = vunpack.c.l.b16 %v3222
        %v3251 = vunpack.c.l.b16 %v3223
        %v3252 = vunpack.c.l.b16 %v3224
        %v3253 = vunpack.c.l.b16 %v3225
        %v3254 = vpack.c.b16 %v3251, %v3250
        %v3255 = vpack.c.b16 %v3253, %v3252
        %v3259 = vsel %vm1377, %v3245, 0
        %v3262 = vsel %vm1377, %v3244, 0
        %3264 = vmatpush.bf16.msra.mxu0 0
        %3265 = vmatpush.bf16.msra.mxu0 0
        %3266 = vmatpush.bf16.msra.mxu0 0
        %3267 = vmatpush.bf16.msra.mxu0 0
        %3268 = vmatpush.bf16.msra.mxu0 0
        %3269 = vmatpush.bf16.msra.mxu0 0
        %3270 = vmatpush.bf16.msra.mxu0 %v3255
        %3271 = vmatpush.bf16.msra.mxu0 %v3254
        %3272 = vmatmul.bf16.gmra.mxu0 %v3259
        %v3273 = vpop.f32.mrf.mxu0
        %v3274 = vadd.f32 0.0, %v3273
        %v3275 = vpop.f32.mrf.mxu0
        %v3276 = vadd.f32 0.0, %v3275
        %3277 = vmatmul.bf16.gmra.mxu0 %v3262
        %v3278 = vpop.f32.mrf.mxu0
        %v3279 = vadd.f32 0.0, %v3278
        %v3280 = vpop.f32.mrf.mxu0
        %3281 = vdwg.mxu0
        %v3282 = vadd.f32 %v3217, %v3274
        %v3283 = vadd.f32 %v3218, %v3276
        %v3284 = vadd.f32 %v3219, %v3279
        %v3285 = vld [vmem:[#allocation3 + $0x4] sm:$0x8]
        %s3286 = scalar_lea.vmem %s5, 128
        %v3287 = vld [vmem:[%s3286] sm:$0xf]
        %v3288 = vld [vmem:[%s3286 + $0x4] sm:$0xf]
        %v3289 = vld [vmem:[%s3286 + $0x8] sm:$0xf]
        %v3290 = vld [vmem:[%s3286 + $0xc] sm:$0xf]
        %v3292 = vunpack.c.l.b16 %v3285
        %v3293 = vpack.c.b16 %v3173, %v3292
        %v3294 = vrot.slane %v3293, 3
        %v3295 = vrot.slane %v3228, 3
        %v3296 = vsel %vm2617, %v3294, %v3295
        %v3301 = vunpack.c.l.b16 %v3287
        %v3302 = vunpack.c.l.b16 %v3288
        %v3303 = vunpack.c.l.b16 %v3289
        %v3304 = vunpack.c.l.b16 %v3290
        %v3305 = vpack.c.b16 %v3302, %v3301
        %v3306 = vpack.c.b16 %v3304, %v3303
        %v3310 = vsel %vm1377, %v3296, 0
        %v3313 = vsel %vm1377, %v3295, 0
        %3315 = vmatpush.bf16.msra.mxu0 0
        %3316 = vmatpush.bf16.msra.mxu0 0
        %3317 = vmatpush.bf16.msra.mxu0 0
        %3318 = vmatpush.bf16.msra.mxu0 0
        %3319 = vmatpush.bf16.msra.mxu0 0
        %3320 = vmatpush.bf16.msra.mxu0 0
        %3321 = vmatpush.bf16.msra.mxu0 %v3306
        %3322 = vmatpush.bf16.msra.mxu0 %v3305
        %3323 = vmatmul.bf16.gmra.mxu0 %v3310
        %v3324 = vpop.f32.mrf.mxu0
        %v3325 = vadd.f32 0.0, %v3324
        %v3326 = vpop.f32.mrf.mxu0
        %v3327 = vadd.f32 0.0, %v3326
        %3328 = vmatmul.bf16.gmra.mxu0 %v3313
        %v3329 = vpop.f32.mrf.mxu0
        %v3330 = vadd.f32 0.0, %v3329
        %v3331 = vpop.f32.mrf.mxu0
        %3332 = vdwg.mxu0
        %v3333 = vadd.f32 %v3282, %v3325
        %v3334 = vadd.f32 %v3283, %v3327
        %v3335 = vadd.f32 %v3284, %v3330
        %v3336 = vld [vmem:[%s6] sm:$0x1]
        %v3338 = vperm.slane %v3336, 0
        %v3340 = vadd.f32 %v3333, %v3338
        %v3341 = vadd.f32 %v3334, %v3338
        %v3342 = vadd.f32 %v3335, %v3338
        %v3343 = vmax.f32 %v3340, 0.0
        %v3344 = vmax.f32 %v3341, 0.0
        %v3345 = vmax.f32 %v3342, 0.0
        %3346 = vst.msk [vmem:[#allocation4] sm:$0xff] %vm1377, %v3343
        %3347 = vst.msk [vmem:[#allocation4 + $0x8] sm:$0xff] %vm1377, %v3344
        %3348 = vst.msk [vmem:[#allocation4 + $0x10] sm:$0xff] %vm1377, %v3345
        %v3349 = vld [vmem:[#allocation4] ss:$2 sm:$0xff]
        %v3350 = vld [vmem:[%s1411] ss:$2 sm:$0xf]
        %v3351 = vld [vmem:[%s1441] ss:$2 sm:$0xff]
        %v3352 = vld [vmem:[%s1443] ss:$2 sm:$0xf]
        %v3353 = vmax.f32 %v3349, %v3351
        %v3354 = vmax.f32 %v3350, %v3352
        %3355 = vst.msk [vmem:[#allocation5] sm:$0xff] %vm1377, %v3353
        %3356 = vst.msk [vmem:[#allocation5 + $0x8] sm:$0xf] %vm278, %v3354
        %v3357 = vld [vmem:[#allocation5] sm:$0x3]
        %v3358 = vld [vmem:[#allocation5 + $0x3] sm:$0x3]
        %v3359 = vmax.f32 %v3357, %v3358
        %vm3360 = vcmask 254976
        %3361 = vst.msk [vmem:[%s271] sm:$0x3] %vm3360, %v3359
        %v3362 = vld [vmem:[#allocation5 + $0x6] sm:$0x3]
        %v3363 = vld [vmem:[#allocation5 + $0x9] sm:$0x3]
        %v3364 = vmax.f32 %v3362, %v3363
        %3365 = vst.msk [vmem:[%s271 + $0x2] sm:$0x3] %vm3360, %v3364
        %s3366 = sand.u32 %s181, 1
        %s3367 = scalar_lea.sflag [#allocation7], %s3366
        %s3368 = sand.u32 %s181, 1
        %s3369 = smul.addr %s3368, 4
        %s3370 = scalar_lea.vmem [#allocation6], %s3369
        // Predicated region
        $region49: #{generalized_convnet_forward.1} parent=47 // pred_check
          %p3371 = pneg %p191
        $region50: #{generalized_convnet_forward.1} parent=47 // pred_check_branch
          %3373 = sbr.rel (%p3371) target = $region52
        $region51: #{generalized_convnet_forward.1} parent=47 // pred_region
          %3375 = vsyncadd %s3367, 0
          %s3376 = smul.addr %s21, 4
          %s3377 = scalar_lea.hbm %s7, %s3376
          %s3379 = sshll.u32 %s3370, 4
          %s3380 = int_to_ptr.vmem [resolvable:$true] %s3379
          %s3381 = sshll.u32 %s3377, 4
          %s3382 = int_to_ptr.hbm [resolvable:$true] %s3381
          %3384 = dma.vmem_to_hbm [thread:$0]  %s3380, 64, %s3382, %s3367
        $region52: #{generalized_convnet_forward.1} parent=47 // pred_fallthru
          _
      $region48: #{generalized_convnet_forward.1} parent=5 // pred_fallthru
        _
      %p3385 = scmp.le.s32.totalorder 2, %s16
      // Predicated region
      $region53: #{generalized_convnet_forward.1} parent=5 // pred_check
        %p3386 = pneg %p3385
      $region54: #{generalized_convnet_forward.1} parent=5 // pred_check_branch
        %3388 = sbr.rel (%p3386) target = $region56
      $region55: #{generalized_convnet_forward.1} parent=5 // pred_region
        %s3389 = ssub.s32 %s16, 2
        // Predicated region
        $region57: #{generalized_convnet_forward.1} parent=55 // pred_check
          %p3390 = pneg %p197
        $region58: #{generalized_convnet_forward.1} parent=55 // pred_check_branch
          %3392 = sbr.rel (%p3390) target = $region60
        $region59: #{generalized_convnet_forward.1} parent=55 // pred_region
          %s3393 = sand.u32 %s182, 1
          %s3394 = scalar_lea.sflag [#allocation7], %s3393
          %s3395 = sand.u32 %s182, 1
          %s3396 = smul.addr %s3395, 4
          %s3397 = scalar_lea.vmem [#allocation6], %s3396
          %3399 = dma.done %s3394, 64
        $region60: #{generalized_convnet_forward.1} parent=55 // pred_fallthru
          _
      $region56: #{generalized_convnet_forward.1} parent=5 // pred_fallthru
        _
    $region6: #{generalized_convnet_forward.1} parent=1 // loop_footer
      %s20 = sadd.s32 1, %s16
    $region7: #{generalized_convnet_forward.1} parent=1 // loop_footer_branch
      %15 = sbr.rel target = $region3
    $region8: #{generalized_convnet_forward.1} parent=1 // loop_exit
      _
    %3400 = vsyncpa [#allocation7], 1
    %s3401 = scalar_lea.sflag [#allocation7], 1
    %3402 = vsyncpa %s3401, 1

</llo_original>
